<compile_context>
chip_gen: v7x
topology: tpu7x:2x2x1
jax: 0.10.0
libtpu: 0.0.40
codegen_flags: <defaults>
</compile_context>

<pallas_src>
import functools

import jax
import jax.numpy as jnp
from jax.experimental import pallas as pl
from jax.experimental.pallas import tpu as pltpu

EPSILON = 1e-8  # utils.EPSILON


def _round_up(v, m):
    return ((v + m - 1) // m) * m


def _modconv_kernel(style_ref, d_ref, wt_ref, x_ref, out_ref, xs_ref, acc_ref,
                    *, kernel, w_pitch, n_rows, demodulate):
    # style_ref : (1, 1, Cinp)        per-sample modulation scale (f32)
    # d_ref     : (1, 1, Coutp)       per-sample demodulation factor (f32)
    # wt_ref    : (K*K, Cinp, Coutp)  batch-invariant weight, one slab per tap
    # x_ref     : (1, L, Cinp)        zero-padded image, flattened with pitch Wp
    # out_ref   : (1, H*Wp, Coutp)
    # xs_ref    : (L, Cinp)           style-scaled activations (compute dtype)
    # acc_ref   : (H*Wp, Coutp) f32   accumulator
    K = kernel

    # 1) Fold the style modulation into the activations: (w*s) . x == w . (s*x).
    #    Multiply in f32, single cast into the MXU compute dtype.
    xs_ref[...] = (x_ref[0] * style_ref[0]).astype(xs_ref.dtype)

    # 2) K*K shifted-window matmuls against the batch-invariant weight.
    #    Each tap is one contiguous slice of the flat slab (static offsets).
    first = True
    for kh in range(K):
        for kw in range(K):
            off = kh * w_pitch + kw
            patch = xs_ref[pl.ds(off, n_rows), :]
            contrib = jnp.dot(patch, wt_ref[kh * K + kw],
                              preferred_element_type=jnp.float32)
            if first:
                acc_ref[...] = contrib
                first = False
            else:
                acc_ref[...] += contrib

    # 3) Fold the demodulation into the output (lane-dense store).
    res = acc_ref[...]
    if demodulate:
        res = res * d_ref[0]
    out_ref[0] = res.astype(out_ref.dtype)


def modulated_conv2d(x, w, params, *, kernel=3, demodulate=True,
                     compute_dtype=jnp.bfloat16):
    """x: (B, Cin, H, W) NCHW f32, w: (B, style_dim). Returns (B, Cout, H, W)."""
    B, Cin, H, W = x.shape
    lin_w, lin_b, conv_w = params["lin_w"], params["lin_b"], params["conv_w"]
    Cout = conv_w.shape[0]
    assert kernel in (1, 3), "module semantics assume 'same' conv (kernel 1 or 3)"
    pad = 1 if kernel > 1 else 0
    Hp, Wp = H + 2 * pad, W + 2 * pad
    n_rows = H * Wp                       # output rows computed per image (pitch Wp)
    L = Hp * Wp + (kernel - 1)            # flat length: every tap window stays in bounds
    Cout_pad = _round_up(Cout, 128)       # lane-dense output channels
    Cin_pad = _round_up(Cin, 8)           # sublane-aligned contraction channels
    cdt_size = jnp.dtype(compute_dtype).itemsize
    out_size = jnp.dtype(x.dtype).itemsize

    # --- tiny parameter glue (pure XLA) ---------------------------------------
    style = (w @ lin_w.T + lin_b).astype(jnp.float32)              # (B, Cin)

    # demod factor rsqrt( style^2 @ sum_k(W^2) + eps ), from real channels only
    if demodulate:
        wsq = jnp.sum(conv_w.astype(jnp.float32) ** 2, axis=(2, 3)).T   # (Cin, Cout)
        d = jax.lax.rsqrt(style ** 2 @ wsq + EPSILON)                   # (B, Cout)
        d = jnp.pad(d, ((0, 0), (0, Cout_pad - Cout)))
    else:
        d = jnp.ones((B, Cout_pad), jnp.float32)
    d3 = d.reshape(B, 1, Cout_pad)

    # style padded along Cin (padded channels carry zero activations anyway)
    style3 = jnp.pad(style, ((0, 0), (0, Cin_pad - Cin))).reshape(B, 1, Cin_pad)

    # weight: (Cout, Cin, K, K) -> per-tap (Cin_pad, Cout_pad) slabs, compute dtype
    conv_w_p = jnp.pad(conv_w,
                       ((0, Cout_pad - Cout), (0, Cin_pad - Cin), (0, 0), (0, 0)))
    wt = jnp.transpose(conv_w_p, (2, 3, 1, 0)).reshape(
        kernel * kernel, Cin_pad, Cout_pad).astype(compute_dtype)

    # --- NCHW -> flat "pitch-Wp" NHWC activations (fused by XLA with the
    #     mandatory layout transpose; no in-kernel reshapes needed) ------------
    x_nhwc = jnp.transpose(x, (0, 2, 3, 1)).astype(jnp.float32)
    x_pad = jnp.pad(x_nhwc, ((0, 0), (pad, pad), (pad, pad), (0, Cin_pad - Cin)))
    x_flat = x_pad.reshape(B, Hp * Wp, Cin_pad)
    if kernel > 1:
        x_flat = jnp.pad(x_flat, ((0, 0), (0, kernel - 1), (0, 0)))     # (B, L, Cinp)

    kern = functools.partial(
        _modconv_kernel, kernel=kernel, w_pitch=Wp, n_rows=n_rows,
        demodulate=demodulate)

    # Advisory cost estimate + VMEM limit derived from actual block sizes.
    flops = 2 * B * n_rows * kernel * kernel * Cin_pad * Cout_pad
    bytes_accessed = (B * L * Cin_pad * 4 +                      # activations in
                      kernel * kernel * Cin_pad * Cout_pad * cdt_size +  # weight in
                      B * n_rows * Cout_pad * out_size +          # output
                      B * (Cin_pad + Cout_pad) * 4)               # style / demod
    block_bytes = (2 * L * Cin_pad * 4 +                          # x (double-buffered)
                   2 * n_rows * Cout_pad * out_size +             # out (double-buffered)
                   kernel * kernel * Cin_pad * Cout_pad * cdt_size +  # weight (resident)
                   L * Cin_pad * cdt_size +                       # xs scratch
                   n_rows * Cout_pad * 4 +                        # f32 accumulator
                   2 * (Cin_pad + Cout_pad) * 4)                  # style / demod blocks
    vmem_limit = min(48 * 1024 * 1024, max(8 * 1024 * 1024, 4 * block_bytes))

    out_flat = pl.pallas_call(
        kern,
        out_shape=jax.ShapeDtypeStruct((B, n_rows, Cout_pad), x.dtype),
        grid=(B,),
        in_specs=[
            pl.BlockSpec((1, 1, Cin_pad), lambda b: (b, 0, 0)),           # style
            pl.BlockSpec((1, 1, Cout_pad), lambda b: (b, 0, 0)),          # demod
            pl.BlockSpec((kernel * kernel, Cin_pad, Cout_pad),
                         lambda b: (0, 0, 0)),                            # weight (batch-invariant)
            pl.BlockSpec((1, L, Cin_pad), lambda b: (b, 0, 0)),           # activations
        ],
        out_specs=pl.BlockSpec((1, n_rows, Cout_pad), lambda b: (b, 0, 0)),
        scratch_shapes=[
            pltpu.VMEM((L, Cin_pad), compute_dtype),      # style-scaled activations
            pltpu.VMEM((n_rows, Cout_pad), jnp.float32),  # f32 accumulator
        ],
        compiler_params=pltpu.CompilerParams(
            dimension_semantics=("parallel",),
            vmem_limit_bytes=vmem_limit,
        ),
        cost_estimate=pl.CostEstimate(flops=flops, transcendentals=0,
                                      bytes_accessed=bytes_accessed),
    )(style3, d3, wt, x_flat)

    # un-flatten (pitch Wp), crop the pad columns / pad channels, back to NCHW
    out = out_flat.reshape(B, H, Wp, Cout_pad)[:, :, :W, :Cout]
    return jnp.transpose(out, (0, 3, 1, 2))


def reference(x, w, params, *, kernel=3, demodulate=True):
    """Pure-JAX reference reproducing the PyTorch forward (grouped conv)."""
    B, Cin, H, W = x.shape
    conv_w = params["conv_w"]
    Cout = conv_w.shape[0]
    style = w @ params["lin_w"].T + params["lin_b"]
    weights = style[:, None, :, None, None] * conv_w[None]
    if demodulate:
        d = jax.lax.rsqrt(jnp.sum(weights ** 2, axis=(2, 3, 4), keepdims=True) + EPSILON)
        weights = weights * d
    pad = 1 if kernel > 1 else 0
    x_g = x.reshape(1, B * Cin, H, W)
    w_g = weights.reshape(B * Cout, Cin, kernel, kernel)
    y = jax.lax.conv_general_dilated(
        x_g, w_g, window_strides=(1, 1), padding=[(pad, pad), (pad, pad)],
        dimension_numbers=("NCHW", "OIHW", "NCHW"), feature_group_count=B)
    return y.reshape(B, Cout, H, W)


if __name__ == "__main__":
    B, Cin, Cout, style_dim, K, H, W = 2, 4, 8, 8, 3, 16, 16
    key = jax.random.PRNGKey(0)
    k1, k2, k3, k4 = jax.random.split(key, 4)

    # Deterministic synthetic parameter init (shapes from the module's __init__):
    #  - conv weight: kaiming_normal(fan_in, leaky_relu a=0) -> std = sqrt(2 / (Cin*K*K))
    #  - linear weight: uniform(-1/sqrt(style_dim), 1/sqrt(style_dim))
    #  - linear bias: ones(in_chan)  (explicitly set in the module)
    fan_in = Cin * K * K
    conv_w = jax.random.normal(k1, (Cout, Cin, K, K), jnp.float32) * jnp.sqrt(2.0 / fan_in)
    lim = 1.0 / jnp.sqrt(jnp.float32(style_dim))
    lin_w = jax.random.uniform(k2, (Cin, style_dim), jnp.float32, -lim, lim)
    lin_b = jnp.ones((Cin,), jnp.float32)
    params = {"conv_w": conv_w, "lin_w": lin_w, "lin_b": lin_b}

    x = jax.random.normal(k3, (B, Cin, H, W), jnp.float32)
    w = jax.random.normal(k4, (B, style_dim), jnp.float32)

    ref = reference(x, w, params, kernel=K, demodulate=True)

    # f32 MXU path: tight check against the grouped-conv reference.
    out_f32 = jax.block_until_ready(
        modulated_conv2d(x, w, params, kernel=K, demodulate=True,
                         compute_dtype=jnp.float32))
    assert out_f32.shape == (B, Cout, H, W)
    assert jnp.allclose(out_f32, ref, rtol=1e-4, atol=1e-4), \
        f"f32 max abs diff = {float(jnp.max(jnp.abs(out_f32 - ref)))}"

    # bf16 MXU path (default, 2x MXU throughput on v6e/v7x): f32 accumulation,
    # looser tolerance.
    out_bf16 = jax.block_until_ready(
        modulated_conv2d(x, w, params, kernel=K, demodulate=True))
    assert out_bf16.shape == (B, Cout, H, W)
    assert jnp.allclose(out_bf16, ref, rtol=2e-2, atol=2e-2), \
        f"bf16 max abs diff = {float(jnp.max(jnp.abs(out_bf16 - ref)))}"

    print("KERNEL_OK")
</pallas_src>

<mosaic_0001>
module attributes {stable_mosaic.version = 11 : i64} {
  func.func @_modconv_kernel(%arg0: i32, %arg1: memref<1x1x8xf32, #tpu.memory_space<vmem>>, %arg2: memref<1x1x128xf32, #tpu.memory_space<vmem>>, %arg3: memref<9x8x128xf32, #tpu.memory_space<vmem>>, %arg4: memref<1x326x8xf32, #tpu.memory_space<vmem>>, %arg5: memref<1x288x128xf32, #tpu.memory_space<vmem>>, %arg6: memref<326x8xf32, #tpu.memory_space<vmem>>, %arg7: memref<288x128xf32, #tpu.memory_space<vmem>>) attributes {dimension_semantics = [#tpu.dimension_semantics<parallel>], iteration_bounds = array<i64: 2>, scalar_prefetch = 0 : i64, scratch_operands = 2 : i64, tpu.core_type = #tpu.core_type<tc>, window_params = [{transform_indices = @transform_0, window_bounds = array<i64: 1, 1, 8>}, {transform_indices = @transform_1, window_bounds = array<i64: 1, 1, 128>}, {pipeline_mode = #tpu.pipeline_mode<synchronous>, transform_indices = @transform_2, window_bounds = array<i64: 9, 8, 128>}, {transform_indices = @transform_3, window_bounds = array<i64: 1, 326, 8>}, {transform_indices = @transform_4, window_bounds = array<i64: 1, 288, 128>}]} {
    %c0 = arith.constant 0 : index
    %c0_0 = arith.constant 0 : index
    %c0_1 = arith.constant 0 : index
    %0 = vector.load %arg4[%c0, %c0_0, %c0_1] : memref<1x326x8xf32, #tpu.memory_space<vmem>>, vector<1x326x8xf32>
    %1 = vector.shape_cast %0 : vector<1x326x8xf32> to vector<326x8xf32>
    %c0_2 = arith.constant 0 : index
    %c0_3 = arith.constant 0 : index
    %c0_4 = arith.constant 0 : index
    %2 = vector.load %arg1[%c0_2, %c0_3, %c0_4] : memref<1x1x8xf32, #tpu.memory_space<vmem>>, vector<1x1x8xf32>
    %3 = vector.shape_cast %2 : vector<1x1x8xf32> to vector<1x8xf32>
    %4 = vector.broadcast %3 : vector<1x8xf32> to vector<326x8xf32>
    %5 = arith.mulf %1, %4 : vector<326x8xf32>
    %c0_5 = arith.constant 0 : index
    %c0_6 = arith.constant 0 : index
    %6 = vector.load %arg6[%c0_5, %c0_6] : memref<326x8xf32, #tpu.memory_space<vmem>>, vector<326x8xf32>
    tpu.vector_store %arg6[%c0_5, %c0_6], %5 {strides = array<i32>} : memref<326x8xf32, #tpu.memory_space<vmem>>, vector<326x8xf32>,
    %c0_7 = arith.constant 0 : index
    %c0_8 = arith.constant 0 : index
    %7 = vector.load %arg6[%c0_7, %c0_8] : memref<326x8xf32, #tpu.memory_space<vmem>>, vector<288x8xf32>
    %c0_9 = arith.constant 0 : index
    %c0_10 = arith.constant 0 : index
    %c0_11 = arith.constant 0 : index
    %8 = vector.load %arg3[%c0_9, %c0_10, %c0_11] : memref<9x8x128xf32, #tpu.memory_space<vmem>>, vector<1x8x128xf32>
    %9 = vector.shape_cast %8 : vector<1x8x128xf32> to vector<8x128xf32>
    %cst = arith.constant dense<0.000000e+00> : vector<288x128xf32>
    %10 = tpu.matmul %7, %9, %cst {dimension_numbers = #tpu.dot_dimension_numbers<[1], [0], [0], [1], [0, 0, 1, 1], [], []>} : vector<288x8xf32>, vector<8x128xf32>, vector<288x128xf32> -> vector<288x128xf32>
    %c0_12 = arith.constant 0 : index
    %c0_13 = arith.constant 0 : index
    %11 = vector.load %arg7[%c0_12, %c0_13] : memref<288x128xf32, #tpu.memory_space<vmem>>, vector<288x128xf32>
    tpu.vector_store %arg7[%c0_12, %c0_13], %10 {strides = array<i32>} : memref<288x128xf32, #tpu.memory_space<vmem>>, vector<288x128xf32>,
    %c1 = arith.constant 1 : index
    %c0_14 = arith.constant 0 : index
    %12 = vector.load %arg6[%c1, %c0_14] : memref<326x8xf32, #tpu.memory_space<vmem>>, vector<288x8xf32>
    %c1_15 = arith.constant 1 : index
    %c0_16 = arith.constant 0 : index
    %c0_17 = arith.constant 0 : index
    %13 = vector.load %arg3[%c1_15, %c0_16, %c0_17] : memref<9x8x128xf32, #tpu.memory_space<vmem>>, vector<1x8x128xf32>
    %14 = vector.shape_cast %13 : vector<1x8x128xf32> to vector<8x128xf32>
    %cst_18 = arith.constant dense<0.000000e+00> : vector<288x128xf32>
    %15 = tpu.matmul %12, %14, %cst_18 {dimension_numbers = #tpu.dot_dimension_numbers<[1], [0], [0], [1], [0, 0, 1, 1], [], []>} : vector<288x8xf32>, vector<8x128xf32>, vector<288x128xf32> -> vector<288x128xf32>
    %c0_19 = arith.constant 0 : index
    %c0_20 = arith.constant 0 : index
    %16 = vector.load %arg7[%c0_19, %c0_20] : memref<288x128xf32, #tpu.memory_space<vmem>>, vector<288x128xf32>
    %17 = arith.addf %16, %15 : vector<288x128xf32>
    %c0_21 = arith.constant 0 : index
    %c0_22 = arith.constant 0 : index
    %18 = vector.load %arg7[%c0_21, %c0_22] : memref<288x128xf32, #tpu.memory_space<vmem>>, vector<288x128xf32>
    tpu.vector_store %arg7[%c0_21, %c0_22], %17 {strides = array<i32>} : memref<288x128xf32, #tpu.memory_space<vmem>>, vector<288x128xf32>,
    %c2 = arith.constant 2 : index
    %c0_23 = arith.constant 0 : index
    %19 = vector.load %arg6[%c2, %c0_23] : memref<326x8xf32, #tpu.memory_space<vmem>>, vector<288x8xf32>
    %c2_24 = arith.constant 2 : index
    %c0_25 = arith.constant 0 : index
    %c0_26 = arith.constant 0 : index
    %20 = vector.load %arg3[%c2_24, %c0_25, %c0_26] : memref<9x8x128xf32, #tpu.memory_space<vmem>>, vector<1x8x128xf32>
    %21 = vector.shape_cast %20 : vector<1x8x128xf32> to vector<8x128xf32>
    %cst_27 = arith.constant dense<0.000000e+00> : vector<288x128xf32>
    %22 = tpu.matmul %19, %21, %cst_27 {dimension_numbers = #tpu.dot_dimension_numbers<[1], [0], [0], [1], [0, 0, 1, 1], [], []>} : vector<288x8xf32>, vector<8x128xf32>, vector<288x128xf32> -> vector<288x128xf32>
    %c0_28 = arith.constant 0 : index
    %c0_29 = arith.constant 0 : index
    %23 = vector.load %arg7[%c0_28, %c0_29] : memref<288x128xf32, #tpu.memory_space<vmem>>, vector<288x128xf32>
    %24 = arith.addf %23, %22 : vector<288x128xf32>
    %c0_30 = arith.constant 0 : index
    %c0_31 = arith.constant 0 : index
    %25 = vector.load %arg7[%c0_30, %c0_31] : memref<288x128xf32, #tpu.memory_space<vmem>>, vector<288x128xf32>
    tpu.vector_store %arg7[%c0_30, %c0_31], %24 {strides = array<i32>} : memref<288x128xf32, #tpu.memory_space<vmem>>, vector<288x128xf32>,
    %c18 = arith.constant 18 : index
    %c0_32 = arith.constant 0 : index
    %26 = vector.load %arg6[%c18, %c0_32] : memref<326x8xf32, #tpu.memory_space<vmem>>, vector<288x8xf32>
    %c3 = arith.constant 3 : index
    %c0_33 = arith.constant 0 : index
    %c0_34 = arith.constant 0 : index
    %27 = vector.load %arg3[%c3, %c0_33, %c0_34] : memref<9x8x128xf32, #tpu.memory_space<vmem>>, vector<1x8x128xf32>
    %28 = vector.shape_cast %27 : vector<1x8x128xf32> to vector<8x128xf32>
    %cst_35 = arith.constant dense<0.000000e+00> : vector<288x128xf32>
    %29 = tpu.matmul %26, %28, %cst_35 {dimension_numbers = #tpu.dot_dimension_numbers<[1], [0], [0], [1], [0, 0, 1, 1], [], []>} : vector<288x8xf32>, vector<8x128xf32>, vector<288x128xf32> -> vector<288x128xf32>
    %c0_36 = arith.constant 0 : index
    %c0_37 = arith.constant 0 : index
    %30 = vector.load %arg7[%c0_36, %c0_37] : memref<288x128xf32, #tpu.memory_space<vmem>>, vector<288x128xf32>
    %31 = arith.addf %30, %29 : vector<288x128xf32>
    %c0_38 = arith.constant 0 : index
    %c0_39 = arith.constant 0 : index
    %32 = vector.load %arg7[%c0_38, %c0_39] : memref<288x128xf32, #tpu.memory_space<vmem>>, vector<288x128xf32>
    tpu.vector_store %arg7[%c0_38, %c0_39], %31 {strides = array<i32>} : memref<288x128xf32, #tpu.memory_space<vmem>>, vector<288x128xf32>,
    %c19 = arith.constant 19 : index
    %c0_40 = arith.constant 0 : index
    %33 = vector.load %arg6[%c19, %c0_40] : memref<326x8xf32, #tpu.memory_space<vmem>>, vector<288x8xf32>
    %c4 = arith.constant 4 : index
    %c0_41 = arith.constant 0 : index
    %c0_42 = arith.constant 0 : index
    %34 = vector.load %arg3[%c4, %c0_41, %c0_42] : memref<9x8x128xf32, #tpu.memory_space<vmem>>, vector<1x8x128xf32>
    %35 = vector.shape_cast %34 : vector<1x8x128xf32> to vector<8x128xf32>
    %cst_43 = arith.constant dense<0.000000e+00> : vector<288x128xf32>
    %36 = tpu.matmul %33, %35, %cst_43 {dimension_numbers = #tpu.dot_dimension_numbers<[1], [0], [0], [1], [0, 0, 1, 1], [], []>} : vector<288x8xf32>, vector<8x128xf32>, vector<288x128xf32> -> vector<288x128xf32>
    %c0_44 = arith.constant 0 : index
    %c0_45 = arith.constant 0 : index
    %37 = vector.load %arg7[%c0_44, %c0_45] : memref<288x128xf32, #tpu.memory_space<vmem>>, vector<288x128xf32>
    %38 = arith.addf %37, %36 : vector<288x128xf32>
    %c0_46 = arith.constant 0 : index
    %c0_47 = arith.constant 0 : index
    %39 = vector.load %arg7[%c0_46, %c0_47] : memref<288x128xf32, #tpu.memory_space<vmem>>, vector<288x128xf32>
    tpu.vector_store %arg7[%c0_46, %c0_47], %38 {strides = array<i32>} : memref<288x128xf32, #tpu.memory_space<vmem>>, vector<288x128xf32>,
    %c20 = arith.constant 20 : index
    %c0_48 = arith.constant 0 : index
    %40 = vector.load %arg6[%c20, %c0_48] : memref<326x8xf32, #tpu.memory_space<vmem>>, vector<288x8xf32>
    %c5 = arith.constant 5 : index
    %c0_49 = arith.constant 0 : index
    %c0_50 = arith.constant 0 : index
    %41 = vector.load %arg3[%c5, %c0_49, %c0_50] : memref<9x8x128xf32, #tpu.memory_space<vmem>>, vector<1x8x128xf32>
    %42 = vector.shape_cast %41 : vector<1x8x128xf32> to vector<8x128xf32>
    %cst_51 = arith.constant dense<0.000000e+00> : vector<288x128xf32>
    %43 = tpu.matmul %40, %42, %cst_51 {dimension_numbers = #tpu.dot_dimension_numbers<[1], [0], [0], [1], [0, 0, 1, 1], [], []>} : vector<288x8xf32>, vector<8x128xf32>, vector<288x128xf32> -> vector<288x128xf32>
    %c0_52 = arith.constant 0 : index
    %c0_53 = arith.constant 0 : index
    %44 = vector.load %arg7[%c0_52, %c0_53] : memref<288x128xf32, #tpu.memory_space<vmem>>, vector<288x128xf32>
    %45 = arith.addf %44, %43 : vector<288x128xf32>
    %c0_54 = arith.constant 0 : index
    %c0_55 = arith.constant 0 : index
    %46 = vector.load %arg7[%c0_54, %c0_55] : memref<288x128xf32, #tpu.memory_space<vmem>>, vector<288x128xf32>
    tpu.vector_store %arg7[%c0_54, %c0_55], %45 {strides = array<i32>} : memref<288x128xf32, #tpu.memory_space<vmem>>, vector<288x128xf32>,
    %c36 = arith.constant 36 : index
    %c0_56 = arith.constant 0 : index
    %47 = vector.load %arg6[%c36, %c0_56] : memref<326x8xf32, #tpu.memory_space<vmem>>, vector<288x8xf32>
    %c6 = arith.constant 6 : index
    %c0_57 = arith.constant 0 : index
    %c0_58 = arith.constant 0 : index
    %48 = vector.load %arg3[%c6, %c0_57, %c0_58] : memref<9x8x128xf32, #tpu.memory_space<vmem>>, vector<1x8x128xf32>
    %49 = vector.shape_cast %48 : vector<1x8x128xf32> to vector<8x128xf32>
    %cst_59 = arith.constant dense<0.000000e+00> : vector<288x128xf32>
    %50 = tpu.matmul %47, %49, %cst_59 {dimension_numbers = #tpu.dot_dimension_numbers<[1], [0], [0], [1], [0, 0, 1, 1], [], []>} : vector<288x8xf32>, vector<8x128xf32>, vector<288x128xf32> -> vector<288x128xf32>
    %c0_60 = arith.constant 0 : index
    %c0_61 = arith.constant 0 : index
    %51 = vector.load %arg7[%c0_60, %c0_61] : memref<288x128xf32, #tpu.memory_space<vmem>>, vector<288x128xf32>
    %52 = arith.addf %51, %50 : vector<288x128xf32>
    %c0_62 = arith.constant 0 : index
    %c0_63 = arith.constant 0 : index
    %53 = vector.load %arg7[%c0_62, %c0_63] : memref<288x128xf32, #tpu.memory_space<vmem>>, vector<288x128xf32>
    tpu.vector_store %arg7[%c0_62, %c0_63], %52 {strides = array<i32>} : memref<288x128xf32, #tpu.memory_space<vmem>>, vector<288x128xf32>,
    %c37 = arith.constant 37 : index
    %c0_64 = arith.constant 0 : index
    %54 = vector.load %arg6[%c37, %c0_64] : memref<326x8xf32, #tpu.memory_space<vmem>>, vector<288x8xf32>
    %c7 = arith.constant 7 : index
    %c0_65 = arith.constant 0 : index
    %c0_66 = arith.constant 0 : index
    %55 = vector.load %arg3[%c7, %c0_65, %c0_66] : memref<9x8x128xf32, #tpu.memory_space<vmem>>, vector<1x8x128xf32>
    %56 = vector.shape_cast %55 : vector<1x8x128xf32> to vector<8x128xf32>
    %cst_67 = arith.constant dense<0.000000e+00> : vector<288x128xf32>
    %57 = tpu.matmul %54, %56, %cst_67 {dimension_numbers = #tpu.dot_dimension_numbers<[1], [0], [0], [1], [0, 0, 1, 1], [], []>} : vector<288x8xf32>, vector<8x128xf32>, vector<288x128xf32> -> vector<288x128xf32>
    %c0_68 = arith.constant 0 : index
    %c0_69 = arith.constant 0 : index
    %58 = vector.load %arg7[%c0_68, %c0_69] : memref<288x128xf32, #tpu.memory_space<vmem>>, vector<288x128xf32>
    %59 = arith.addf %58, %57 : vector<288x128xf32>
    %c0_70 = arith.constant 0 : index
    %c0_71 = arith.constant 0 : index
    %60 = vector.load %arg7[%c0_70, %c0_71] : memref<288x128xf32, #tpu.memory_space<vmem>>, vector<288x128xf32>
    tpu.vector_store %arg7[%c0_70, %c0_71], %59 {strides = array<i32>} : memref<288x128xf32, #tpu.memory_space<vmem>>, vector<288x128xf32>,
    %c38 = arith.constant 38 : index
    %c0_72 = arith.constant 0 : index
    %61 = vector.load %arg6[%c38, %c0_72] : memref<326x8xf32, #tpu.memory_space<vmem>>, vector<288x8xf32>
    %c8 = arith.constant 8 : index
    %c0_73 = arith.constant 0 : index
    %c0_74 = arith.constant 0 : index
    %62 = vector.load %arg3[%c8, %c0_73, %c0_74] : memref<9x8x128xf32, #tpu.memory_space<vmem>>, vector<1x8x128xf32>
    %63 = vector.shape_cast %62 : vector<1x8x128xf32> to vector<8x128xf32>
    %cst_75 = arith.constant dense<0.000000e+00> : vector<288x128xf32>
    %64 = tpu.matmul %61, %63, %cst_75 {dimension_numbers = #tpu.dot_dimension_numbers<[1], [0], [0], [1], [0, 0, 1, 1], [], []>} : vector<288x8xf32>, vector<8x128xf32>, vector<288x128xf32> -> vector<288x128xf32>
    %c0_76 = arith.constant 0 : index
    %c0_77 = arith.constant 0 : index
    %65 = vector.load %arg7[%c0_76, %c0_77] : memref<288x128xf32, #tpu.memory_space<vmem>>, vector<288x128xf32>
    %66 = arith.addf %65, %64 : vector<288x128xf32>
    %c0_78 = arith.constant 0 : index
    %c0_79 = arith.constant 0 : index
    %67 = vector.load %arg7[%c0_78, %c0_79] : memref<288x128xf32, #tpu.memory_space<vmem>>, vector<288x128xf32>
    tpu.vector_store %arg7[%c0_78, %c0_79], %66 {strides = array<i32>} : memref<288x128xf32, #tpu.memory_space<vmem>>, vector<288x128xf32>,
    %c0_80 = arith.constant 0 : index
    %c0_81 = arith.constant 0 : index
    %68 = vector.load %arg7[%c0_80, %c0_81] : memref<288x128xf32, #tpu.memory_space<vmem>>, vector<288x128xf32>
    %c0_82 = arith.constant 0 : index
    %c0_83 = arith.constant 0 : index
    %c0_84 = arith.constant 0 : index
    %69 = vector.load %arg2[%c0_82, %c0_83, %c0_84] : memref<1x1x128xf32, #tpu.memory_space<vmem>>, vector<1x1x128xf32>
    %70 = vector.shape_cast %69 : vector<1x1x128xf32> to vector<1x128xf32>
    %71 = vector.broadcast %70 : vector<1x128xf32> to vector<288x128xf32>
    %72 = arith.mulf %68, %71 : vector<288x128xf32>
    %c0_85 = arith.constant 0 : index
    %c0_86 = arith.constant 0 : index
    %c0_87 = arith.constant 0 : index
    %73 = vector.load %arg5[%c0_85, %c0_86, %c0_87] : memref<1x288x128xf32, #tpu.memory_space<vmem>>, vector<1x288x128xf32>
    %74 = vector.shape_cast %73 : vector<1x288x128xf32> to vector<288x128xf32>
    %75 = vector.shape_cast %72 : vector<288x128xf32> to vector<1x288x128xf32>
    tpu.vector_store %arg5[%c0_85, %c0_86, %c0_87], %75 {strides = array<i32>} : memref<1x288x128xf32, #tpu.memory_space<vmem>>, vector<1x288x128xf32>,
    return
  }
  func.func @transform_0(%arg0: i32) -> (i32, i32, i32) {
    %c0_i32 = arith.constant 0 : i32
    %c0_i32_0 = arith.constant 0 : i32
    %c0_i32_1 = arith.constant 0 : i32
    return %arg0, %c0_i32, %c0_i32_0 : i32, i32, i32
  }
  func.func @transform_1(%arg0: i32) -> (i32, i32, i32) {
    %c0_i32 = arith.constant 0 : i32
    %c0_i32_0 = arith.constant 0 : i32
    %c0_i32_1 = arith.constant 0 : i32
    return %arg0, %c0_i32, %c0_i32_0 : i32, i32, i32
  }
  func.func @transform_2(%arg0: i32) -> (i32, i32, i32) {
    %c0_i32 = arith.constant 0 : i32
    %c0_i32_0 = arith.constant 0 : i32
    %c0_i32_1 = arith.constant 0 : i32
    %c0_i32_2 = arith.constant 0 : i32
    return %c0_i32, %c0_i32_0, %c0_i32_1 : i32, i32, i32
  }
  func.func @transform_3(%arg0: i32) -> (i32, i32, i32) {
    %c0_i32 = arith.constant 0 : i32
    %c0_i32_0 = arith.constant 0 : i32
    %c0_i32_1 = arith.constant 0 : i32
    return %arg0, %c0_i32, %c0_i32_0 : i32, i32, i32
  }
  func.func @transform_4(%arg0: i32) -> (i32, i32, i32) {
    %c0_i32 = arith.constant 0 : i32
    %c0_i32_0 = arith.constant 0 : i32
    %c0_i32_1 = arith.constant 0 : i32
    return %arg0, %c0_i32, %c0_i32_0 : i32, i32, i32
  }
}

</mosaic_0001>

<llo_original>
// kernel: tpu_custom_call.1
$region0: #{tpu_custom_call.1}
  #allocation0 [shape = 'u32[]', space=smem, size = 0x4, offset = 0x4, fixed_abs, tag = 'smem constant byte address 0x4 - core index']
  #allocation1 [shape = 'u32[144,128]{1,0:T(1,128)}', space=vmem, size = 0x12000, scoped, tag = 'internal scratch']
  #allocation2 [shape = 'f32[326,8]{1,0:T(8,128)}', space=vmem, size = 0x29000, scoped, tag = 'scratch operand']
  #allocation3 [shape = 'f32[288,128]{1,0:T(8,128)}', space=vmem, size = 0x24000, scoped, tag = 'scratch operand']
  %s0 = inlined_call_operand.vmem [shape: f32[2,1,8], index: 0, kind: input, shape index: {}]
  %s1 = inlined_call_operand.vmem [shape: f32[2,1,128], index: 1, kind: input, shape index: {}]
  %s2 = inlined_call_operand.vmem [shape: f32[9,8,128], index: 2, kind: input, shape index: {}]
  %s3 = inlined_call_operand.vmem [shape: f32[2,326,8], index: 3, kind: input, shape index: {}]
  %s4 = inlined_call_operand.hbm [shape: f32[2,288,128], index: 4, kind: output, shape index: {}]
  %s5 = sld [smem:[#allocation0]]
  $region49: #{tpu_custom_call.1} parent=0
    _
  %s7 = ssub.s32 1, %s5
  %s8 = scalar_select 0, %s7, %s5
  $region1: #{tpu_custom_call.1} parent=0
    #allocation4 [shape = 'u8[294912]{0}', space=vmem, size = 0x48000, scoped, tag = 'output window, operand 0']
    #allocation5 [shape = 's32[2]{0}', space=sflag, size = 0x8, scoped, tag = 'scoped memory for tpu_custom_call.1']
    %9 = vsyncpa [#allocation5], 0
    %s10 = scalar_lea.sflag [#allocation5], 1
    %11 = vsyncpa %s10, 0
    loop: start=0, step=1, limit=4
    $region2: #{tpu_custom_call.1} parent=1 // loop_pre_header
      _
    $region3: #{tpu_custom_call.1} parent=1 // loop_header
      %s13 = sphi 0, %s17
      %p14 = scmp.ge.s32.totalorder %s13, 4
      %s23 = sphi 0, %s25
      %s26 = sphi 0, %s23
      %s27 = sphi 0, %s26
      %s43 = sphi 0, %s27
      %s49 = sphi 0, %s51
      %s52 = sphi 0, %s49
      %s53 = sphi 0, %s52
      %s69 = sphi 0, %s53
      %s73 = sphi 0, %s73
      %s75 = sphi 0, %s73
      %s76 = sphi 0, %s75
      %s90 = sphi 0, %s76
      %s96 = sphi 0, %s98
      %s99 = sphi 0, %s96
      %s100 = sphi 0, %s99
      %s116 = sphi 0, %s100
      %s122 = sphi 0, %s124
      %s125 = sphi 0, %s122
      %s126 = sphi 0, %s125
      %s142 = sphi 0, %s126
    $region4: #{tpu_custom_call.1} parent=1 // loop_header_branch
      %16 = sbr.rel (%p14) target = $region8
    $region5: #{tpu_custom_call.1} parent=1 // loop_body
      %s18 = ssub.s32 %s13, 1
      %s19 = ssub.s32 %s13, 2
      %s20 = sadd.s32 %s13, 1
      %s21 = ssub.s32 %s13, %s20
      %p22 = scmp.eq.s32.totalorder %s21, 0
      %s24 = sadd.s32 %s23, 1
      %s25 = scalar_select %p22, %s23, %s24
      %p28 = pneg %p22
      %p29 = scmp.eq.s32.totalorder %s13, 1
      %p30 = por %p28, %p29
      %p31 = scmp.ne.s32.totalorder %s23, %s26
      %p32 = scmp.eq.s32.totalorder %s13, 0
      %p33 = por %p31, %p32
      %p34 = scmp.ne.s32.totalorder %s23, %s26
      %p35 = scmp.eq.s32.totalorder %s18, 1
      %p36 = por %p34, %p35
      %p37 = scmp.ne.s32.totalorder %s26, %s27
      %p38 = scmp.eq.s32.totalorder %s18, 0
      %p39 = por %p37, %p38
      %p40 = scmp.ne.s32.totalorder %s26, %s27
      %p41 = scmp.eq.s32.totalorder %s19, 1
      %p42 = por %p40, %p41
      %p44 = scmp.ne.s32.totalorder %s27, %s43
      %p45 = scmp.eq.s32.totalorder %s19, 0
      %p46 = por %p44, %p45
      %s47 = ssub.s32 %s13, %s20
      %p48 = scmp.eq.s32.totalorder %s47, 0
      %s50 = sadd.s32 %s49, 1
      %s51 = scalar_select %p48, %s49, %s50
      %p54 = pneg %p48
      %p55 = scmp.eq.s32.totalorder %s13, 1
      %p56 = por %p54, %p55
      %p57 = scmp.ne.s32.totalorder %s49, %s52
      %p58 = scmp.eq.s32.totalorder %s13, 0
      %p59 = por %p57, %p58
      %p60 = scmp.ne.s32.totalorder %s49, %s52
      %p61 = scmp.eq.s32.totalorder %s18, 1
      %p62 = por %p60, %p61
      %p63 = scmp.ne.s32.totalorder %s52, %s53
      %p64 = scmp.eq.s32.totalorder %s18, 0
      %p65 = por %p63, %p64
      %p66 = scmp.ne.s32.totalorder %s52, %s53
      %p67 = scmp.eq.s32.totalorder %s19, 1
      %p68 = por %p66, %p67
      %p70 = scmp.ne.s32.totalorder %s53, %s69
      %p71 = scmp.eq.s32.totalorder %s19, 0
      %p72 = por %p70, %p71
      %s74 = sadd.s32 %s73, 1
      %p77 = scmp.eq.s32.totalorder %s13, 1
      %p78 = scmp.ne.s32.totalorder %s73, %s75
      %p79 = scmp.eq.s32.totalorder %s13, 0
      %p80 = por %p78, %p79
      %p81 = scmp.ne.s32.totalorder %s73, %s75
      %p82 = scmp.eq.s32.totalorder %s18, 1
      %p83 = por %p81, %p82
      %p84 = scmp.ne.s32.totalorder %s75, %s76
      %p85 = scmp.eq.s32.totalorder %s18, 0
      %p86 = por %p84, %p85
      %p87 = scmp.ne.s32.totalorder %s75, %s76
      %p88 = scmp.eq.s32.totalorder %s19, 1
      %p89 = por %p87, %p88
      %p91 = scmp.ne.s32.totalorder %s76, %s90
      %p92 = scmp.eq.s32.totalorder %s19, 0
      %p93 = por %p91, %p92
      %s94 = ssub.s32 %s13, %s20
      %p95 = scmp.eq.s32.totalorder %s94, 0
      %s97 = sadd.s32 %s96, 1
      %s98 = scalar_select %p95, %s96, %s97
      %p101 = pneg %p95
      %p102 = scmp.eq.s32.totalorder %s13, 1
      %p103 = por %p101, %p102
      %p104 = scmp.ne.s32.totalorder %s96, %s99
      %p105 = scmp.eq.s32.totalorder %s13, 0
      %p106 = por %p104, %p105
      %p107 = scmp.ne.s32.totalorder %s96, %s99
      %p108 = scmp.eq.s32.totalorder %s18, 1
      %p109 = por %p107, %p108
      %p110 = scmp.ne.s32.totalorder %s99, %s100
      %p111 = scmp.eq.s32.totalorder %s18, 0
      %p112 = por %p110, %p111
      %p113 = scmp.ne.s32.totalorder %s99, %s100
      %p114 = scmp.eq.s32.totalorder %s19, 1
      %p115 = por %p113, %p114
      %p117 = scmp.ne.s32.totalorder %s100, %s116
      %p118 = scmp.eq.s32.totalorder %s19, 0
      %p119 = por %p117, %p118
      %s120 = ssub.s32 %s13, %s20
      %p121 = scmp.eq.s32.totalorder %s120, 0
      %s123 = sadd.s32 %s122, 1
      %s124 = scalar_select %p121, %s122, %s123
      %p127 = pneg %p121
      %p128 = scmp.eq.s32.totalorder %s13, 1
      %p129 = por %p127, %p128
      %p130 = scmp.ne.s32.totalorder %s122, %s125
      %p131 = scmp.eq.s32.totalorder %s13, 0
      %p132 = por %p130, %p131
      %p133 = scmp.ne.s32.totalorder %s122, %s125
      %p134 = scmp.eq.s32.totalorder %s18, 1
      %p135 = por %p133, %p134
      %p136 = scmp.ne.s32.totalorder %s125, %s126
      %p137 = scmp.eq.s32.totalorder %s18, 0
      %p138 = por %p136, %p137
      %p139 = scmp.ne.s32.totalorder %s125, %s126
      %p140 = scmp.eq.s32.totalorder %s19, 1
      %p141 = por %p139, %p140
      %p143 = scmp.ne.s32.totalorder %s126, %s142
      %p144 = scmp.eq.s32.totalorder %s19, 0
      %p145 = por %p143, %p144
      %p146 = scmp.le.s32.totalorder 1, %s13
      %p147 = scmp.lt.s32.totalorder %s13, 3
      %p148 = pnand %p146, %p147
      %p149 = pneg %p148
      // Predicated region
      $region9: #{tpu_custom_call.1} parent=5 // pred_check
        _
      $region10: #{tpu_custom_call.1} parent=5 // pred_check_branch
        %151 = sbr.rel (%p148) target = $region12
      $region11: #{tpu_custom_call.1} parent=5 // pred_region
        %s152 = ssub.s32 %s13, 1
        // Predicated region
        $region13: #{tpu_custom_call.1} parent=11 // pred_check
          %p153 = pneg %p86
        $region14: #{tpu_custom_call.1} parent=11 // pred_check_branch
          %155 = sbr.rel (%p153) target = $region16
        $region15: #{tpu_custom_call.1} parent=11 // pred_region
          _
        $region16: #{tpu_custom_call.1} parent=11 // pred_fallthru
          _
      $region12: #{tpu_custom_call.1} parent=5 // pred_fallthru
        _
      %p156 = scmp.lt.s32.totalorder %s13, 2
      // Predicated region
      $region17: #{tpu_custom_call.1} parent=5 // pred_check
        %p157 = pneg %p156
      $region18: #{tpu_custom_call.1} parent=5 // pred_check_branch
        %159 = sbr.rel (%p157) target = $region20
      $region19: #{tpu_custom_call.1} parent=5 // pred_region
        // Predicated region
        $region21: #{tpu_custom_call.1} parent=19 // pred_check
          %p160 = pneg %p33
        $region22: #{tpu_custom_call.1} parent=19 // pred_check_branch
          %162 = sbr.rel (%p160) target = $region24
        $region23: #{tpu_custom_call.1} parent=19 // pred_region
          %p163 = scmp.lt.s32.totalorder %s13, 1
          %s164 = scalar_select %p163, %s13, 1
          %s165 = scalar_lea.vmem %s0, %s164
        $region24: #{tpu_custom_call.1} parent=19 // pred_fallthru
          _
        // Predicated region
        $region25: #{tpu_custom_call.1} parent=19 // pred_check
          %p166 = pneg %p59
        $region26: #{tpu_custom_call.1} parent=19 // pred_check_branch
          %168 = sbr.rel (%p166) target = $region28
        $region27: #{tpu_custom_call.1} parent=19 // pred_region
          %p169 = scmp.lt.s32.totalorder %s13, 1
          %s170 = scalar_select %p169, %s13, 1
          %s171 = scalar_lea.vmem %s1, %s170
        $region28: #{tpu_custom_call.1} parent=19 // pred_fallthru
          _
        // Predicated region
        $region29: #{tpu_custom_call.1} parent=19 // pred_check
          %p172 = pneg %p106
        $region30: #{tpu_custom_call.1} parent=19 // pred_check_branch
          %174 = sbr.rel (%p172) target = $region32
        $region31: #{tpu_custom_call.1} parent=19 // pred_region
          %p175 = scmp.lt.s32.totalorder %s13, 1
          %s176 = scalar_select %p175, %s13, 1
          %s177 = smul.addr %s176, 41
          %s178 = smul.addr %s177, 8
          %s179 = scalar_lea.vmem %s3, %s178
        $region32: #{tpu_custom_call.1} parent=19 // pred_fallthru
          _
      $region20: #{tpu_custom_call.1} parent=5 // pred_fallthru
        _
      %p180 = scmp.le.s32.totalorder 1, %s13
      %p181 = scmp.lt.s32.totalorder %s13, 3
      %p182 = pnand %p180, %p181
      %p183 = pneg %p182
      // Predicated region
      $region33: #{tpu_custom_call.1} parent=5 // pred_check
        _
      $region34: #{tpu_custom_call.1} parent=5 // pred_check_branch
        %185 = sbr.rel (%p182) target = $region36
      $region35: #{tpu_custom_call.1} parent=5 // pred_region
        %s186 = ssub.s32 %s13, 1
        %p187 = scmp.lt.s32.totalorder %s18, 1
        %s188 = scalar_select %p187, %s18, 1
        %s189 = scalar_lea.vmem %s0, %s188
        %p190 = pneg %p39
        %p191 = pneg %p36
        %p192 = scmp.lt.s32.totalorder %s18, 1
        %s193 = scalar_select %p192, %s18, 1
        %s194 = scalar_lea.vmem %s1, %s193
        %p195 = pneg %p65
        %p196 = pneg %p62
        %p197 = pneg %p86
        %p198 = pneg %p83
        %p199 = scmp.lt.s32.totalorder %s18, 1
        %s200 = scalar_select %p199, %s18, 1
        %s201 = smul.addr %s200, 41
        %s202 = smul.addr %s201, 8
        %s203 = scalar_lea.vmem %s3, %s202
        %p204 = pneg %p112
        %p205 = pneg %p109
        %p206 = pneg %p138
        %p207 = pneg %p135
        %s208 = sand.u32 %s125, 1
        %s209 = scalar_lea.sflag [#allocation5], %s208
        %s210 = sand.u32 %s125, 1
        %s211 = smul.addr %s210, 288
        %s212 = scalar_lea.vmem [#allocation4], %s211
        %p213 = scmp.lt.s32.totalorder %s18, 1
        %s214 = scalar_select %p213, %s18, 1
        %s215 = scalar_lea.vmem %s0, %s214
        %p216 = scmp.lt.s32.totalorder %s18, 1
        %s217 = scalar_select %p216, %s18, 1
        %s218 = scalar_lea.vmem %s1, %s217
        %p219 = scmp.lt.s32.totalorder %s18, 1
        %s220 = scalar_select %p219, %s18, 1
        %s221 = smul.addr %s220, 41
        %s222 = smul.addr %s221, 8
        %s223 = scalar_lea.vmem %s3, %s222
        %v224 = vld [vmem:[%s223] sm:$0xff]
        %v225 = vld [vmem:[%s223 + $0x8] sm:$0xff]
        %v226 = vld [vmem:[%s223 + $0x10] sm:$0xff]
        %v227 = vld [vmem:[%s223 + $0x18] sm:$0xff]
        %v228 = vld [vmem:[%s223 + $0x20] sm:$0xff]
        %v229 = vld [vmem:[%s223 + $0x28] sm:$0xff]
        %v230 = vld [vmem:[%s223 + $0x30] sm:$0xff]
        %v231 = vld [vmem:[%s223 + $0x38] sm:$0xff]
        %v232 = vld [vmem:[%s223 + $0x40] sm:$0xff]
        %v233 = vld [vmem:[%s223 + $0x48] sm:$0xff]
        %v234 = vld [vmem:[%s223 + $0x50] sm:$0xff]
        %v235 = vld [vmem:[%s223 + $0x58] sm:$0xff]
        %v236 = vld [vmem:[%s223 + $0x60] sm:$0xff]
        %v237 = vld [vmem:[%s223 + $0x68] sm:$0xff]
        %v238 = vld [vmem:[%s223 + $0x70] sm:$0xff]
        %v239 = vld [vmem:[%s223 + $0x78] sm:$0xff]
        %v240 = vld [vmem:[%s223 + $0x80] sm:$0xff]
        %v241 = vld [vmem:[%s223 + $0x88] sm:$0xff]
        %v242 = vld [vmem:[%s223 + $0x90] sm:$0xff]
        %v243 = vld [vmem:[%s223 + $0x98] sm:$0xff]
        %v244 = vld [vmem:[%s223 + $0xa0] sm:$0xff]
        %v245 = vld [vmem:[%s223 + $0xa8] sm:$0xff]
        %v246 = vld [vmem:[%s223 + $0xb0] sm:$0xff]
        %v247 = vld [vmem:[%s223 + $0xb8] sm:$0xff]
        %v248 = vld [vmem:[%s223 + $0xc0] sm:$0xff]
        %v249 = vld [vmem:[%s223 + $0xc8] sm:$0xff]
        %v250 = vld [vmem:[%s223 + $0xd0] sm:$0xff]
        %v251 = vld [vmem:[%s223 + $0xd8] sm:$0xff]
        %v252 = vld [vmem:[%s223 + $0xe0] sm:$0xff]
        %v253 = vld [vmem:[%s223 + $0xe8] sm:$0xff]
        %v254 = vld [vmem:[%s223 + $0xf0] sm:$0xff]
        %v255 = vld [vmem:[%s223 + $0xf8] sm:$0xff]
        %v256 = vld [vmem:[%s223 + $0x100] sm:$0xff]
        %v257 = vld [vmem:[%s223 + $0x108] sm:$0xff]
        %v258 = vld [vmem:[%s223 + $0x110] sm:$0xff]
        %v259 = vld [vmem:[%s223 + $0x118] sm:$0xff]
        %v260 = vld [vmem:[%s223 + $0x120] sm:$0xff]
        %v261 = vld [vmem:[%s223 + $0x128] sm:$0xff]
        %v262 = vld [vmem:[%s223 + $0x130] sm:$0xff]
        %v263 = vld [vmem:[%s223 + $0x138] sm:$0xff]
        %v264 = vld [vmem:[%s223 + $0x140] sm:$0x3f]
        %v265 = vld [vmem:[%s215] sm:$0x1]
        %v267 = vlaneseq
        %v268 = vshrl.u32 %v267, 7
        %v269 = vsub.s32 0, %v268
        %v270 = vrot.slane %v265, %v269
        %v272 = vmul.f32 %v224, %v270
        %v273 = vmul.f32 %v225, %v270
        %v274 = vmul.f32 %v226, %v270
        %v275 = vmul.f32 %v227, %v270
        %v276 = vmul.f32 %v228, %v270
        %v277 = vmul.f32 %v229, %v270
        %v278 = vmul.f32 %v230, %v270
        %v279 = vmul.f32 %v231, %v270
        %v280 = vmul.f32 %v232, %v270
        %v281 = vmul.f32 %v233, %v270
        %v282 = vmul.f32 %v234, %v270
        %v283 = vmul.f32 %v235, %v270
        %v284 = vmul.f32 %v236, %v270
        %v285 = vmul.f32 %v237, %v270
        %v286 = vmul.f32 %v238, %v270
        %v287 = vmul.f32 %v239, %v270
        %v288 = vmul.f32 %v240, %v270
        %v289 = vmul.f32 %v241, %v270
        %v290 = vmul.f32 %v242, %v270
        %v291 = vmul.f32 %v243, %v270
        %v292 = vmul.f32 %v244, %v270
        %v293 = vmul.f32 %v245, %v270
        %v294 = vmul.f32 %v246, %v270
        %v295 = vmul.f32 %v247, %v270
        %v296 = vmul.f32 %v248, %v270
        %v297 = vmul.f32 %v249, %v270
        %v298 = vmul.f32 %v250, %v270
        %v299 = vmul.f32 %v251, %v270
        %v300 = vmul.f32 %v252, %v270
        %v301 = vmul.f32 %v253, %v270
        %v302 = vmul.f32 %v254, %v270
        %v303 = vmul.f32 %v255, %v270
        %v304 = vmul.f32 %v256, %v270
        %v305 = vmul.f32 %v257, %v270
        %v306 = vmul.f32 %v258, %v270
        %v307 = vmul.f32 %v259, %v270
        %v308 = vmul.f32 %v260, %v270
        %v309 = vmul.f32 %v261, %v270
        %v310 = vmul.f32 %v262, %v270
        %v311 = vmul.f32 %v263, %v270
        %v312 = vmul.f32 %v264, %v270
        %vm313 = vcmask 64512
        %314 = vst.msk [vmem:[#allocation2] sm:$0xff] %vm313, %v272
        %315 = vst.msk [vmem:[#allocation2 + $0x8] sm:$0xff] %vm313, %v273
        %316 = vst.msk [vmem:[#allocation2 + $0x10] sm:$0xff] %vm313, %v274
        %317 = vst.msk [vmem:[#allocation2 + $0x18] sm:$0xff] %vm313, %v275
        %318 = vst.msk [vmem:[#allocation2 + $0x20] sm:$0xff] %vm313, %v276
        %319 = vst.msk [vmem:[#allocation2 + $0x28] sm:$0xff] %vm313, %v277
        %320 = vst.msk [vmem:[#allocation2 + $0x30] sm:$0xff] %vm313, %v278
        %321 = vst.msk [vmem:[#allocation2 + $0x38] sm:$0xff] %vm313, %v279
        %322 = vst.msk [vmem:[#allocation2 + $0x40] sm:$0xff] %vm313, %v280
        %323 = vst.msk [vmem:[#allocation2 + $0x48] sm:$0xff] %vm313, %v281
        %324 = vst.msk [vmem:[#allocation2 + $0x50] sm:$0xff] %vm313, %v282
        %325 = vst.msk [vmem:[#allocation2 + $0x58] sm:$0xff] %vm313, %v283
        %326 = vst.msk [vmem:[#allocation2 + $0x60] sm:$0xff] %vm313, %v284
        %327 = vst.msk [vmem:[#allocation2 + $0x68] sm:$0xff] %vm313, %v285
        %328 = vst.msk [vmem:[#allocation2 + $0x70] sm:$0xff] %vm313, %v286
        %329 = vst.msk [vmem:[#allocation2 + $0x78] sm:$0xff] %vm313, %v287
        %330 = vst.msk [vmem:[#allocation2 + $0x80] sm:$0xff] %vm313, %v288
        %331 = vst.msk [vmem:[#allocation2 + $0x88] sm:$0xff] %vm313, %v289
        %332 = vst.msk [vmem:[#allocation2 + $0x90] sm:$0xff] %vm313, %v290
        %333 = vst.msk [vmem:[#allocation2 + $0x98] sm:$0xff] %vm313, %v291
        %334 = vst.msk [vmem:[#allocation2 + $0xa0] sm:$0xff] %vm313, %v292
        %335 = vst.msk [vmem:[#allocation2 + $0xa8] sm:$0xff] %vm313, %v293
        %336 = vst.msk [vmem:[#allocation2 + $0xb0] sm:$0xff] %vm313, %v294
        %337 = vst.msk [vmem:[#allocation2 + $0xb8] sm:$0xff] %vm313, %v295
        %338 = vst.msk [vmem:[#allocation2 + $0xc0] sm:$0xff] %vm313, %v296
        %339 = vst.msk [vmem:[#allocation2 + $0xc8] sm:$0xff] %vm313, %v297
        %340 = vst.msk [vmem:[#allocation2 + $0xd0] sm:$0xff] %vm313, %v298
        %341 = vst.msk [vmem:[#allocation2 + $0xd8] sm:$0xff] %vm313, %v299
        %342 = vst.msk [vmem:[#allocation2 + $0xe0] sm:$0xff] %vm313, %v300
        %343 = vst.msk [vmem:[#allocation2 + $0xe8] sm:$0xff] %vm313, %v301
        %344 = vst.msk [vmem:[#allocation2 + $0xf0] sm:$0xff] %vm313, %v302
        %345 = vst.msk [vmem:[#allocation2 + $0xf8] sm:$0xff] %vm313, %v303
        %346 = vst.msk [vmem:[#allocation2 + $0x100] sm:$0xff] %vm313, %v304
        %347 = vst.msk [vmem:[#allocation2 + $0x108] sm:$0xff] %vm313, %v305
        %348 = vst.msk [vmem:[#allocation2 + $0x110] sm:$0xff] %vm313, %v306
        %349 = vst.msk [vmem:[#allocation2 + $0x118] sm:$0xff] %vm313, %v307
        %350 = vst.msk [vmem:[#allocation2 + $0x120] sm:$0xff] %vm313, %v308
        %351 = vst.msk [vmem:[#allocation2 + $0x128] sm:$0xff] %vm313, %v309
        %352 = vst.msk [vmem:[#allocation2 + $0x130] sm:$0xff] %vm313, %v310
        %353 = vst.msk [vmem:[#allocation2 + $0x138] sm:$0xff] %vm313, %v311
        %vm354 = vcmask 62464
        %355 = vst.msk [vmem:[#allocation2 + $0x140] sm:$0x3f] %vm354, %v312
        %v356 = vld [vmem:[#allocation2] sm:$0xff]
        %v357 = vld [vmem:[#allocation2 + $0x8] sm:$0xff]
        %v358 = vld [vmem:[#allocation2 + $0x10] sm:$0xff]
        %v359 = vld [vmem:[#allocation2 + $0x18] sm:$0xff]
        %v360 = vld [vmem:[#allocation2 + $0x20] sm:$0xff]
        %v361 = vld [vmem:[#allocation2 + $0x28] sm:$0xff]
        %v362 = vld [vmem:[#allocation2 + $0x30] sm:$0xff]
        %v363 = vld [vmem:[#allocation2 + $0x38] sm:$0xff]
        %v364 = vld [vmem:[#allocation2 + $0x40] sm:$0xff]
        %v365 = vld [vmem:[#allocation2 + $0x48] sm:$0xff]
        %v366 = vld [vmem:[#allocation2 + $0x50] sm:$0xff]
        %v367 = vld [vmem:[#allocation2 + $0x58] sm:$0xff]
        %v368 = vld [vmem:[#allocation2 + $0x60] sm:$0xff]
        %v369 = vld [vmem:[#allocation2 + $0x68] sm:$0xff]
        %v370 = vld [vmem:[#allocation2 + $0x70] sm:$0xff]
        %v371 = vld [vmem:[#allocation2 + $0x78] sm:$0xff]
        %v372 = vld [vmem:[#allocation2 + $0x80] sm:$0xff]
        %v373 = vld [vmem:[#allocation2 + $0x88] sm:$0xff]
        %v374 = vld [vmem:[#allocation2 + $0x90] sm:$0xff]
        %v375 = vld [vmem:[#allocation2 + $0x98] sm:$0xff]
        %v376 = vld [vmem:[#allocation2 + $0xa0] sm:$0xff]
        %v377 = vld [vmem:[#allocation2 + $0xa8] sm:$0xff]
        %v378 = vld [vmem:[#allocation2 + $0xb0] sm:$0xff]
        %v379 = vld [vmem:[#allocation2 + $0xb8] sm:$0xff]
        %v380 = vld [vmem:[#allocation2 + $0xc0] sm:$0xff]
        %v381 = vld [vmem:[#allocation2 + $0xc8] sm:$0xff]
        %v382 = vld [vmem:[#allocation2 + $0xd0] sm:$0xff]
        %v383 = vld [vmem:[#allocation2 + $0xd8] sm:$0xff]
        %v384 = vld [vmem:[#allocation2 + $0xe0] sm:$0xff]
        %v385 = vld [vmem:[#allocation2 + $0xe8] sm:$0xff]
        %v386 = vld [vmem:[#allocation2 + $0xf0] sm:$0xff]
        %v387 = vld [vmem:[#allocation2 + $0xf8] sm:$0xff]
        %v388 = vld [vmem:[#allocation2 + $0x100] sm:$0xff]
        %v389 = vld [vmem:[#allocation2 + $0x108] sm:$0xff]
        %v390 = vld [vmem:[#allocation2 + $0x110] sm:$0xff]
        %v391 = vld [vmem:[#allocation2 + $0x118] sm:$0xff]
        %v392 = vld [vmem:[%s2] sm:$0xff]
        %v394 = vsel %vm313, %v356, 0
        %v397 = vsel %vm313, %v357, 0
        %v400 = vsel %vm313, %v358, 0
        %v403 = vsel %vm313, %v359, 0
        %v406 = vsel %vm313, %v360, 0
        %v409 = vsel %vm313, %v361, 0
        %v412 = vsel %vm313, %v362, 0
        %v415 = vsel %vm313, %v363, 0
        %v418 = vsel %vm313, %v364, 0
        %v421 = vsel %vm313, %v365, 0
        %v424 = vsel %vm313, %v366, 0
        %v427 = vsel %vm313, %v367, 0
        %v430 = vsel %vm313, %v368, 0
        %v433 = vsel %vm313, %v369, 0
        %v436 = vsel %vm313, %v370, 0
        %v439 = vsel %vm313, %v371, 0
        %v442 = vsel %vm313, %v372, 0
        %v445 = vsel %vm313, %v373, 0
        %v448 = vsel %vm313, %v374, 0
        %v451 = vsel %vm313, %v375, 0
        %v454 = vsel %vm313, %v376, 0
        %v457 = vsel %vm313, %v377, 0
        %v460 = vsel %vm313, %v378, 0
        %v463 = vsel %vm313, %v379, 0
        %v466 = vsel %vm313, %v380, 0
        %v469 = vsel %vm313, %v381, 0
        %v472 = vsel %vm313, %v382, 0
        %v475 = vsel %vm313, %v383, 0
        %v478 = vsel %vm313, %v384, 0
        %v481 = vsel %vm313, %v385, 0
        %v484 = vsel %vm313, %v386, 0
        %v487 = vsel %vm313, %v387, 0
        %v490 = vsel %vm313, %v388, 0
        %v493 = vsel %vm313, %v389, 0
        %v496 = vsel %vm313, %v390, 0
        %v499 = vsel %vm313, %v391, 0
        %501 = vmatprep.subr.mxu0 0.0
        %502 = vmatpush1.msra.mxu0 %v392
        %503 = vmatprep.subr.mxu0 0.0
        %504 = vmatpush1.msra.mxu0 0.0
        %505 = vmatprep.subr.mxu0 0.0
        %506 = vmatpush1.msra.mxu0 0.0
        %507 = vmatprep.subr.mxu0 0.0
        %508 = vmatpush1.msra.mxu0 0.0
        %509 = vmatprep.subr.mxu0 0.0
        %510 = vmatpush1.msra.mxu0 0.0
        %511 = vmatprep.subr.mxu0 0.0
        %512 = vmatpush1.msra.mxu0 0.0
        %513 = vmatprep.subr.mxu0 0.0
        %514 = vmatpush1.msra.mxu0 0.0
        %515 = vmatprep.subr.mxu0 0.0
        %516 = vmatpush1.msra.mxu0 0.0
        %517 = vmatprep.subr.mxu0 0.0
        %518 = vmatpush1.msra.mxu0 0.0
        %519 = vmatprep.subr.mxu0 0.0
        %520 = vmatpush1.msra.mxu0 0.0
        %521 = vmatprep.subr.mxu0 0.0
        %522 = vmatpush1.msra.mxu0 0.0
        %523 = vmatprep.subr.mxu0 0.0
        %524 = vmatpush1.msra.mxu0 0.0
        %525 = vmatprep.subr.mxu0 0.0
        %526 = vmatpush1.msra.mxu0 0.0
        %527 = vmatprep.subr.mxu0 0.0
        %528 = vmatpush1.msra.mxu0 0.0
        %529 = vmatprep.subr.mxu0 0.0
        %530 = vmatpush1.msra.mxu0 0.0
        %531 = vmatprep.subr.mxu0 0.0
        %532 = vmatpush1.msra.mxu0 0.0
        %533 = vmatprep.subr.mxu0 0.0
        %534 = vmatpush1.msra.mxu0 0.0
        %535 = vmatprep.subr.mxu0 0.0
        %536 = vmatpush1.msra.mxu0 0.0
        %537 = vmatprep.subr.mxu0 0.0
        %538 = vmatpush1.msra.mxu0 0.0
        %539 = vmatprep.subr.mxu0 0.0
        %540 = vmatpush1.msra.mxu0 0.0
        %541 = vmatprep.subr.mxu0 0.0
        %542 = vmatpush1.msra.mxu0 0.0
        %543 = vmatprep.subr.mxu0 0.0
        %544 = vmatpush1.msra.mxu0 0.0
        %545 = vmatprep.subr.mxu0 0.0
        %546 = vmatpush1.msra.mxu0 0.0
        %547 = vmatprep.subr.mxu0 0.0
        %548 = vmatpush1.msra.mxu0 0.0
        %549 = vmatprep.subr.mxu0 0.0
        %550 = vmatpush1.msra.mxu0 0.0
        %551 = vmatprep.subr.mxu0 0.0
        %552 = vmatpush1.msra.mxu0 0.0
        %553 = vmatprep.subr.mxu0 0.0
        %554 = vmatpush1.msra.mxu0 0.0
        %555 = vmatprep.subr.mxu0 0.0
        %556 = vmatpush1.msra.mxu0 0.0
        %557 = vmatprep.subr.mxu0 0.0
        %558 = vmatpush1.msra.mxu0 0.0
        %559 = vmatprep.subr.mxu0 0.0
        %560 = vmatpush1.msra.mxu0 0.0
        %561 = vmatprep.subr.mxu0 0.0
        %562 = vmatpush1.msra.mxu0 0.0
        %563 = vmatprep.subr.mxu0 0.0
        %564 = vmatpush1.msra.mxu0 0.0
        %565 = vmatprep.mubr.f32.mxu0 0.0
        %566 = vmatmul.mubr.f32.gmra.mrb[0].mxu0 %v394
        %v567 = vpop.f32.mrb[0].mxu0
        %v568 = vadd.f32 0.0, %v567
        %v569 = vpop.f32.mrb[0].mxu0
        %570 = vmatprep.mubr.f32.mxu0 0.0
        %571 = vmatmul.mubr.f32.gmra.mrb[0].mxu0 %v397
        %v572 = vpop.f32.mrb[0].mxu0
        %v573 = vadd.f32 0.0, %v572
        %v574 = vpop.f32.mrb[0].mxu0
        %575 = vmatprep.mubr.f32.mxu0 0.0
        %576 = vmatmul.mubr.f32.gmra.mrb[0].mxu0 %v400
        %v577 = vpop.f32.mrb[0].mxu0
        %v578 = vadd.f32 0.0, %v577
        %v579 = vpop.f32.mrb[0].mxu0
        %580 = vmatprep.mubr.f32.mxu0 0.0
        %581 = vmatmul.mubr.f32.gmra.mrb[0].mxu0 %v403
        %v582 = vpop.f32.mrb[0].mxu0
        %v583 = vadd.f32 0.0, %v582
        %v584 = vpop.f32.mrb[0].mxu0
        %585 = vmatprep.mubr.f32.mxu0 0.0
        %586 = vmatmul.mubr.f32.gmra.mrb[0].mxu0 %v406
        %v587 = vpop.f32.mrb[0].mxu0
        %v588 = vadd.f32 0.0, %v587
        %v589 = vpop.f32.mrb[0].mxu0
        %590 = vmatprep.mubr.f32.mxu0 0.0
        %591 = vmatmul.mubr.f32.gmra.mrb[0].mxu0 %v409
        %v592 = vpop.f32.mrb[0].mxu0
        %v593 = vadd.f32 0.0, %v592
        %v594 = vpop.f32.mrb[0].mxu0
        %595 = vmatprep.mubr.f32.mxu0 0.0
        %596 = vmatmul.mubr.f32.gmra.mrb[0].mxu0 %v412
        %v597 = vpop.f32.mrb[0].mxu0
        %v598 = vadd.f32 0.0, %v597
        %v599 = vpop.f32.mrb[0].mxu0
        %600 = vmatprep.mubr.f32.mxu0 0.0
        %601 = vmatmul.mubr.f32.gmra.mrb[0].mxu0 %v415
        %v602 = vpop.f32.mrb[0].mxu0
        %v603 = vadd.f32 0.0, %v602
        %v604 = vpop.f32.mrb[0].mxu0
        %605 = vmatprep.mubr.f32.mxu0 0.0
        %606 = vmatmul.mubr.f32.gmra.mrb[0].mxu0 %v418
        %v607 = vpop.f32.mrb[0].mxu0
        %v608 = vadd.f32 0.0, %v607
        %v609 = vpop.f32.mrb[0].mxu0
        %610 = vmatprep.mubr.f32.mxu0 0.0
        %611 = vmatmul.mubr.f32.gmra.mrb[0].mxu0 %v421
        %v612 = vpop.f32.mrb[0].mxu0
        %v613 = vadd.f32 0.0, %v612
        %v614 = vpop.f32.mrb[0].mxu0
        %615 = vmatprep.mubr.f32.mxu0 0.0
        %616 = vmatmul.mubr.f32.gmra.mrb[0].mxu0 %v424
        %v617 = vpop.f32.mrb[0].mxu0
        %v618 = vadd.f32 0.0, %v617
        %v619 = vpop.f32.mrb[0].mxu0
        %620 = vmatprep.mubr.f32.mxu0 0.0
        %621 = vmatmul.mubr.f32.gmra.mrb[0].mxu0 %v427
        %v622 = vpop.f32.mrb[0].mxu0
        %v623 = vadd.f32 0.0, %v622
        %v624 = vpop.f32.mrb[0].mxu0
        %625 = vmatprep.mubr.f32.mxu0 0.0
        %626 = vmatmul.mubr.f32.gmra.mrb[0].mxu0 %v430
        %v627 = vpop.f32.mrb[0].mxu0
        %v628 = vadd.f32 0.0, %v627
        %v629 = vpop.f32.mrb[0].mxu0
        %630 = vmatprep.mubr.f32.mxu0 0.0
        %631 = vmatmul.mubr.f32.gmra.mrb[0].mxu0 %v433
        %v632 = vpop.f32.mrb[0].mxu0
        %v633 = vadd.f32 0.0, %v632
        %v634 = vpop.f32.mrb[0].mxu0
        %635 = vmatprep.mubr.f32.mxu0 0.0
        %636 = vmatmul.mubr.f32.gmra.mrb[0].mxu0 %v436
        %v637 = vpop.f32.mrb[0].mxu0
        %v638 = vadd.f32 0.0, %v637
        %v639 = vpop.f32.mrb[0].mxu0
        %640 = vmatprep.mubr.f32.mxu0 0.0
        %641 = vmatmul.mubr.f32.gmra.mrb[0].mxu0 %v439
        %v642 = vpop.f32.mrb[0].mxu0
        %v643 = vadd.f32 0.0, %v642
        %v644 = vpop.f32.mrb[0].mxu0
        %645 = vmatprep.mubr.f32.mxu0 0.0
        %646 = vmatmul.mubr.f32.gmra.mrb[0].mxu0 %v442
        %v647 = vpop.f32.mrb[0].mxu0
        %v648 = vadd.f32 0.0, %v647
        %v649 = vpop.f32.mrb[0].mxu0
        %650 = vmatprep.mubr.f32.mxu0 0.0
        %651 = vmatmul.mubr.f32.gmra.mrb[0].mxu0 %v445
        %v652 = vpop.f32.mrb[0].mxu0
        %v653 = vadd.f32 0.0, %v652
        %v654 = vpop.f32.mrb[0].mxu0
        %655 = vmatprep.mubr.f32.mxu0 0.0
        %656 = vmatmul.mubr.f32.gmra.mrb[0].mxu0 %v448
        %v657 = vpop.f32.mrb[0].mxu0
        %v658 = vadd.f32 0.0, %v657
        %v659 = vpop.f32.mrb[0].mxu0
        %660 = vmatprep.mubr.f32.mxu0 0.0
        %661 = vmatmul.mubr.f32.gmra.mrb[0].mxu0 %v451
        %v662 = vpop.f32.mrb[0].mxu0
        %v663 = vadd.f32 0.0, %v662
        %v664 = vpop.f32.mrb[0].mxu0
        %665 = vmatprep.mubr.f32.mxu0 0.0
        %666 = vmatmul.mubr.f32.gmra.mrb[0].mxu0 %v454
        %v667 = vpop.f32.mrb[0].mxu0
        %v668 = vadd.f32 0.0, %v667
        %v669 = vpop.f32.mrb[0].mxu0
        %670 = vmatprep.mubr.f32.mxu0 0.0
        %671 = vmatmul.mubr.f32.gmra.mrb[0].mxu0 %v457
        %v672 = vpop.f32.mrb[0].mxu0
        %v673 = vadd.f32 0.0, %v672
        %v674 = vpop.f32.mrb[0].mxu0
        %675 = vmatprep.mubr.f32.mxu0 0.0
        %676 = vmatmul.mubr.f32.gmra.mrb[0].mxu0 %v460
        %v677 = vpop.f32.mrb[0].mxu0
        %v678 = vadd.f32 0.0, %v677
        %v679 = vpop.f32.mrb[0].mxu0
        %680 = vmatprep.mubr.f32.mxu0 0.0
        %681 = vmatmul.mubr.f32.gmra.mrb[0].mxu0 %v463
        %v682 = vpop.f32.mrb[0].mxu0
        %v683 = vadd.f32 0.0, %v682
        %v684 = vpop.f32.mrb[0].mxu0
        %685 = vmatprep.mubr.f32.mxu0 0.0
        %686 = vmatmul.mubr.f32.gmra.mrb[0].mxu0 %v466
        %v687 = vpop.f32.mrb[0].mxu0
        %v688 = vadd.f32 0.0, %v687
        %v689 = vpop.f32.mrb[0].mxu0
        %690 = vmatprep.mubr.f32.mxu0 0.0
        %691 = vmatmul.mubr.f32.gmra.mrb[0].mxu0 %v469
        %v692 = vpop.f32.mrb[0].mxu0
        %v693 = vadd.f32 0.0, %v692
        %v694 = vpop.f32.mrb[0].mxu0
        %695 = vmatprep.mubr.f32.mxu0 0.0
        %696 = vmatmul.mubr.f32.gmra.mrb[0].mxu0 %v472
        %v697 = vpop.f32.mrb[0].mxu0
        %v698 = vadd.f32 0.0, %v697
        %v699 = vpop.f32.mrb[0].mxu0
        %700 = vmatprep.mubr.f32.mxu0 0.0
        %701 = vmatmul.mubr.f32.gmra.mrb[0].mxu0 %v475
        %v702 = vpop.f32.mrb[0].mxu0
        %v703 = vadd.f32 0.0, %v702
        %v704 = vpop.f32.mrb[0].mxu0
        %705 = vmatprep.mubr.f32.mxu0 0.0
        %706 = vmatmul.mubr.f32.gmra.mrb[0].mxu0 %v478
        %v707 = vpop.f32.mrb[0].mxu0
        %v708 = vadd.f32 0.0, %v707
        %v709 = vpop.f32.mrb[0].mxu0
        %710 = vmatprep.mubr.f32.mxu0 0.0
        %711 = vmatmul.mubr.f32.gmra.mrb[0].mxu0 %v481
        %v712 = vpop.f32.mrb[0].mxu0
        %v713 = vadd.f32 0.0, %v712
        %v714 = vpop.f32.mrb[0].mxu0
        %715 = vmatprep.mubr.f32.mxu0 0.0
        %716 = vmatmul.mubr.f32.gmra.mrb[0].mxu0 %v484
        %v717 = vpop.f32.mrb[0].mxu0
        %v718 = vadd.f32 0.0, %v717
        %v719 = vpop.f32.mrb[0].mxu0
        %720 = vmatprep.mubr.f32.mxu0 0.0
        %721 = vmatmul.mubr.f32.gmra.mrb[0].mxu0 %v487
        %v722 = vpop.f32.mrb[0].mxu0
        %v723 = vadd.f32 0.0, %v722
        %v724 = vpop.f32.mrb[0].mxu0
        %725 = vmatprep.mubr.f32.mxu0 0.0
        %726 = vmatmul.mubr.f32.gmra.mrb[0].mxu0 %v490
        %v727 = vpop.f32.mrb[0].mxu0
        %v728 = vadd.f32 0.0, %v727
        %v729 = vpop.f32.mrb[0].mxu0
        %730 = vmatprep.mubr.f32.mxu0 0.0
        %731 = vmatmul.mubr.f32.gmra.mrb[0].mxu0 %v493
        %v732 = vpop.f32.mrb[0].mxu0
        %v733 = vadd.f32 0.0, %v732
        %v734 = vpop.f32.mrb[0].mxu0
        %735 = vmatprep.mubr.f32.mxu0 0.0
        %736 = vmatmul.mubr.f32.gmra.mrb[0].mxu0 %v496
        %v737 = vpop.f32.mrb[0].mxu0
        %v738 = vadd.f32 0.0, %v737
        %v739 = vpop.f32.mrb[0].mxu0
        %740 = vmatprep.mubr.f32.mxu0 0.0
        %741 = vmatmul.mubr.f32.gmra.mrb[0].mxu0 %v499
        %v742 = vpop.f32.mrb[0].mxu0
        %v743 = vadd.f32 0.0, %v742
        %v744 = vpop.f32.mrb[0].mxu0
        %745 = vdwg.mxu0
        %746 = vst [vmem:[#allocation3] sm:$0xff] %v568
        %747 = vst [vmem:[#allocation3 + $0x8] sm:$0xff] %v573
        %748 = vst [vmem:[#allocation3 + $0x10] sm:$0xff] %v578
        %749 = vst [vmem:[#allocation3 + $0x18] sm:$0xff] %v583
        %750 = vst [vmem:[#allocation3 + $0x20] sm:$0xff] %v588
        %751 = vst [vmem:[#allocation3 + $0x28] sm:$0xff] %v593
        %752 = vst [vmem:[#allocation3 + $0x30] sm:$0xff] %v598
        %753 = vst [vmem:[#allocation3 + $0x38] sm:$0xff] %v603
        %754 = vst [vmem:[#allocation3 + $0x40] sm:$0xff] %v608
        %755 = vst [vmem:[#allocation3 + $0x48] sm:$0xff] %v613
        %756 = vst [vmem:[#allocation3 + $0x50] sm:$0xff] %v618
        %757 = vst [vmem:[#allocation3 + $0x58] sm:$0xff] %v623
        %758 = vst [vmem:[#allocation3 + $0x60] sm:$0xff] %v628
        %759 = vst [vmem:[#allocation3 + $0x68] sm:$0xff] %v633
        %760 = vst [vmem:[#allocation3 + $0x70] sm:$0xff] %v638
        %761 = vst [vmem:[#allocation3 + $0x78] sm:$0xff] %v643
        %762 = vst [vmem:[#allocation3 + $0x80] sm:$0xff] %v648
        %763 = vst [vmem:[#allocation3 + $0x88] sm:$0xff] %v653
        %764 = vst [vmem:[#allocation3 + $0x90] sm:$0xff] %v658
        %765 = vst [vmem:[#allocation3 + $0x98] sm:$0xff] %v663
        %766 = vst [vmem:[#allocation3 + $0xa0] sm:$0xff] %v668
        %767 = vst [vmem:[#allocation3 + $0xa8] sm:$0xff] %v673
        %768 = vst [vmem:[#allocation3 + $0xb0] sm:$0xff] %v678
        %769 = vst [vmem:[#allocation3 + $0xb8] sm:$0xff] %v683
        %770 = vst [vmem:[#allocation3 + $0xc0] sm:$0xff] %v688
        %771 = vst [vmem:[#allocation3 + $0xc8] sm:$0xff] %v693
        %772 = vst [vmem:[#allocation3 + $0xd0] sm:$0xff] %v698
        %773 = vst [vmem:[#allocation3 + $0xd8] sm:$0xff] %v703
        %774 = vst [vmem:[#allocation3 + $0xe0] sm:$0xff] %v708
        %775 = vst [vmem:[#allocation3 + $0xe8] sm:$0xff] %v713
        %776 = vst [vmem:[#allocation3 + $0xf0] sm:$0xff] %v718
        %777 = vst [vmem:[#allocation3 + $0xf8] sm:$0xff] %v723
        %778 = vst [vmem:[#allocation3 + $0x100] sm:$0xff] %v728
        %779 = vst [vmem:[#allocation3 + $0x108] sm:$0xff] %v733
        %780 = vst [vmem:[#allocation3 + $0x110] sm:$0xff] %v738
        %781 = vst [vmem:[#allocation3 + $0x118] sm:$0xff] %v743
        %v782 = vld [vmem:[#allocation2 + $0x1] sm:$0xff]
        %v783 = vld [vmem:[#allocation2 + $0x9] sm:$0xff]
        %v784 = vld [vmem:[#allocation2 + $0x11] sm:$0xff]
        %v785 = vld [vmem:[#allocation2 + $0x19] sm:$0xff]
        %v786 = vld [vmem:[#allocation2 + $0x21] sm:$0xff]
        %v787 = vld [vmem:[#allocation2 + $0x29] sm:$0xff]
        %v788 = vld [vmem:[#allocation2 + $0x31] sm:$0xff]
        %v789 = vld [vmem:[#allocation2 + $0x39] sm:$0xff]
        %v790 = vld [vmem:[#allocation2 + $0x41] sm:$0xff]
        %v791 = vld [vmem:[#allocation2 + $0x49] sm:$0xff]
        %v792 = vld [vmem:[#allocation2 + $0x51] sm:$0xff]
        %v793 = vld [vmem:[#allocation2 + $0x59] sm:$0xff]
        %v794 = vld [vmem:[#allocation2 + $0x61] sm:$0xff]
        %v795 = vld [vmem:[#allocation2 + $0x69] sm:$0xff]
        %v796 = vld [vmem:[#allocation2 + $0x71] sm:$0xff]
        %v797 = vld [vmem:[#allocation2 + $0x79] sm:$0xff]
        %v798 = vld [vmem:[#allocation2 + $0x81] sm:$0xff]
        %v799 = vld [vmem:[#allocation2 + $0x89] sm:$0xff]
        %v800 = vld [vmem:[#allocation2 + $0x91] sm:$0xff]
        %v801 = vld [vmem:[#allocation2 + $0x99] sm:$0xff]
        %v802 = vld [vmem:[#allocation2 + $0xa1] sm:$0xff]
        %v803 = vld [vmem:[#allocation2 + $0xa9] sm:$0xff]
        %v804 = vld [vmem:[#allocation2 + $0xb1] sm:$0xff]
        %v805 = vld [vmem:[#allocation2 + $0xb9] sm:$0xff]
        %v806 = vld [vmem:[#allocation2 + $0xc1] sm:$0xff]
        %v807 = vld [vmem:[#allocation2 + $0xc9] sm:$0xff]
        %v808 = vld [vmem:[#allocation2 + $0xd1] sm:$0xff]
        %v809 = vld [vmem:[#allocation2 + $0xd9] sm:$0xff]
        %v810 = vld [vmem:[#allocation2 + $0xe1] sm:$0xff]
        %v811 = vld [vmem:[#allocation2 + $0xe9] sm:$0xff]
        %v812 = vld [vmem:[#allocation2 + $0xf1] sm:$0xff]
        %v813 = vld [vmem:[#allocation2 + $0xf9] sm:$0xff]
        %v814 = vld [vmem:[#allocation2 + $0x101] sm:$0xff]
        %v815 = vld [vmem:[#allocation2 + $0x109] sm:$0xff]
        %v816 = vld [vmem:[#allocation2 + $0x111] sm:$0xff]
        %v817 = vld [vmem:[#allocation2 + $0x119] sm:$0xff]
        %s818 = scalar_lea.vmem %s2, 8
        %v819 = vld [vmem:[%s818] sm:$0xff]
        %v821 = vsel %vm313, %v782, 0
        %v824 = vsel %vm313, %v783, 0
        %v827 = vsel %vm313, %v784, 0
        %v830 = vsel %vm313, %v785, 0
        %v833 = vsel %vm313, %v786, 0
        %v836 = vsel %vm313, %v787, 0
        %v839 = vsel %vm313, %v788, 0
        %v842 = vsel %vm313, %v789, 0
        %v845 = vsel %vm313, %v790, 0
        %v848 = vsel %vm313, %v791, 0
        %v851 = vsel %vm313, %v792, 0
        %v854 = vsel %vm313, %v793, 0
        %v857 = vsel %vm313, %v794, 0
        %v860 = vsel %vm313, %v795, 0
        %v863 = vsel %vm313, %v796, 0
        %v866 = vsel %vm313, %v797, 0
        %v869 = vsel %vm313, %v798, 0
        %v872 = vsel %vm313, %v799, 0
        %v875 = vsel %vm313, %v800, 0
        %v878 = vsel %vm313, %v801, 0
        %v881 = vsel %vm313, %v802, 0
        %v884 = vsel %vm313, %v803, 0
        %v887 = vsel %vm313, %v804, 0
        %v890 = vsel %vm313, %v805, 0
        %v893 = vsel %vm313, %v806, 0
        %v896 = vsel %vm313, %v807, 0
        %v899 = vsel %vm313, %v808, 0
        %v902 = vsel %vm313, %v809, 0
        %v905 = vsel %vm313, %v810, 0
        %v908 = vsel %vm313, %v811, 0
        %v911 = vsel %vm313, %v812, 0
        %v914 = vsel %vm313, %v813, 0
        %v917 = vsel %vm313, %v814, 0
        %v920 = vsel %vm313, %v815, 0
        %v923 = vsel %vm313, %v816, 0
        %v926 = vsel %vm313, %v817, 0
        %928 = vmatprep.subr.mxu0 0.0
        %929 = vmatpush1.msra.mxu0 %v819
        %930 = vmatprep.subr.mxu0 0.0
        %931 = vmatpush1.msra.mxu0 0.0
        %932 = vmatprep.subr.mxu0 0.0
        %933 = vmatpush1.msra.mxu0 0.0
        %934 = vmatprep.subr.mxu0 0.0
        %935 = vmatpush1.msra.mxu0 0.0
        %936 = vmatprep.subr.mxu0 0.0
        %937 = vmatpush1.msra.mxu0 0.0
        %938 = vmatprep.subr.mxu0 0.0
        %939 = vmatpush1.msra.mxu0 0.0
        %940 = vmatprep.subr.mxu0 0.0
        %941 = vmatpush1.msra.mxu0 0.0
        %942 = vmatprep.subr.mxu0 0.0
        %943 = vmatpush1.msra.mxu0 0.0
        %944 = vmatprep.subr.mxu0 0.0
        %945 = vmatpush1.msra.mxu0 0.0
        %946 = vmatprep.subr.mxu0 0.0
        %947 = vmatpush1.msra.mxu0 0.0
        %948 = vmatprep.subr.mxu0 0.0
        %949 = vmatpush1.msra.mxu0 0.0
        %950 = vmatprep.subr.mxu0 0.0
        %951 = vmatpush1.msra.mxu0 0.0
        %952 = vmatprep.subr.mxu0 0.0
        %953 = vmatpush1.msra.mxu0 0.0
        %954 = vmatprep.subr.mxu0 0.0
        %955 = vmatpush1.msra.mxu0 0.0
        %956 = vmatprep.subr.mxu0 0.0
        %957 = vmatpush1.msra.mxu0 0.0
        %958 = vmatprep.subr.mxu0 0.0
        %959 = vmatpush1.msra.mxu0 0.0
        %960 = vmatprep.subr.mxu0 0.0
        %961 = vmatpush1.msra.mxu0 0.0
        %962 = vmatprep.subr.mxu0 0.0
        %963 = vmatpush1.msra.mxu0 0.0
        %964 = vmatprep.subr.mxu0 0.0
        %965 = vmatpush1.msra.mxu0 0.0
        %966 = vmatprep.subr.mxu0 0.0
        %967 = vmatpush1.msra.mxu0 0.0
        %968 = vmatprep.subr.mxu0 0.0
        %969 = vmatpush1.msra.mxu0 0.0
        %970 = vmatprep.subr.mxu0 0.0
        %971 = vmatpush1.msra.mxu0 0.0
        %972 = vmatprep.subr.mxu0 0.0
        %973 = vmatpush1.msra.mxu0 0.0
        %974 = vmatprep.subr.mxu0 0.0
        %975 = vmatpush1.msra.mxu0 0.0
        %976 = vmatprep.subr.mxu0 0.0
        %977 = vmatpush1.msra.mxu0 0.0
        %978 = vmatprep.subr.mxu0 0.0
        %979 = vmatpush1.msra.mxu0 0.0
        %980 = vmatprep.subr.mxu0 0.0
        %981 = vmatpush1.msra.mxu0 0.0
        %982 = vmatprep.subr.mxu0 0.0
        %983 = vmatpush1.msra.mxu0 0.0
        %984 = vmatprep.subr.mxu0 0.0
        %985 = vmatpush1.msra.mxu0 0.0
        %986 = vmatprep.subr.mxu0 0.0
        %987 = vmatpush1.msra.mxu0 0.0
        %988 = vmatprep.subr.mxu0 0.0
        %989 = vmatpush1.msra.mxu0 0.0
        %990 = vmatprep.subr.mxu0 0.0
        %991 = vmatpush1.msra.mxu0 0.0
        %992 = vmatprep.mubr.f32.mxu0 0.0
        %993 = vmatmul.mubr.f32.gmra.mrb[0].mxu0 %v821
        %v994 = vpop.f32.mrb[0].mxu0
        %v995 = vadd.f32 0.0, %v994
        %v996 = vpop.f32.mrb[0].mxu0
        %997 = vmatprep.mubr.f32.mxu0 0.0
        %998 = vmatmul.mubr.f32.gmra.mrb[0].mxu0 %v824
        %v999 = vpop.f32.mrb[0].mxu0
        %v1000 = vadd.f32 0.0, %v999
        %v1001 = vpop.f32.mrb[0].mxu0
        %1002 = vmatprep.mubr.f32.mxu0 0.0
        %1003 = vmatmul.mubr.f32.gmra.mrb[0].mxu0 %v827
        %v1004 = vpop.f32.mrb[0].mxu0
        %v1005 = vadd.f32 0.0, %v1004
        %v1006 = vpop.f32.mrb[0].mxu0
        %1007 = vmatprep.mubr.f32.mxu0 0.0
        %1008 = vmatmul.mubr.f32.gmra.mrb[0].mxu0 %v830
        %v1009 = vpop.f32.mrb[0].mxu0
        %v1010 = vadd.f32 0.0, %v1009
        %v1011 = vpop.f32.mrb[0].mxu0
        %1012 = vmatprep.mubr.f32.mxu0 0.0
        %1013 = vmatmul.mubr.f32.gmra.mrb[0].mxu0 %v833
        %v1014 = vpop.f32.mrb[0].mxu0
        %v1015 = vadd.f32 0.0, %v1014
        %v1016 = vpop.f32.mrb[0].mxu0
        %1017 = vmatprep.mubr.f32.mxu0 0.0
        %1018 = vmatmul.mubr.f32.gmra.mrb[0].mxu0 %v836
        %v1019 = vpop.f32.mrb[0].mxu0
        %v1020 = vadd.f32 0.0, %v1019
        %v1021 = vpop.f32.mrb[0].mxu0
        %1022 = vmatprep.mubr.f32.mxu0 0.0
        %1023 = vmatmul.mubr.f32.gmra.mrb[0].mxu0 %v839
        %v1024 = vpop.f32.mrb[0].mxu0
        %v1025 = vadd.f32 0.0, %v1024
        %v1026 = vpop.f32.mrb[0].mxu0
        %1027 = vmatprep.mubr.f32.mxu0 0.0
        %1028 = vmatmul.mubr.f32.gmra.mrb[0].mxu0 %v842
        %v1029 = vpop.f32.mrb[0].mxu0
        %v1030 = vadd.f32 0.0, %v1029
        %v1031 = vpop.f32.mrb[0].mxu0
        %1032 = vmatprep.mubr.f32.mxu0 0.0
        %1033 = vmatmul.mubr.f32.gmra.mrb[0].mxu0 %v845
        %v1034 = vpop.f32.mrb[0].mxu0
        %v1035 = vadd.f32 0.0, %v1034
        %v1036 = vpop.f32.mrb[0].mxu0
        %1037 = vmatprep.mubr.f32.mxu0 0.0
        %1038 = vmatmul.mubr.f32.gmra.mrb[0].mxu0 %v848
        %v1039 = vpop.f32.mrb[0].mxu0
        %v1040 = vadd.f32 0.0, %v1039
        %v1041 = vpop.f32.mrb[0].mxu0
        %1042 = vmatprep.mubr.f32.mxu0 0.0
        %1043 = vmatmul.mubr.f32.gmra.mrb[0].mxu0 %v851
        %v1044 = vpop.f32.mrb[0].mxu0
        %v1045 = vadd.f32 0.0, %v1044
        %v1046 = vpop.f32.mrb[0].mxu0
        %1047 = vmatprep.mubr.f32.mxu0 0.0
        %1048 = vmatmul.mubr.f32.gmra.mrb[0].mxu0 %v854
        %v1049 = vpop.f32.mrb[0].mxu0
        %v1050 = vadd.f32 0.0, %v1049
        %v1051 = vpop.f32.mrb[0].mxu0
        %1052 = vmatprep.mubr.f32.mxu0 0.0
        %1053 = vmatmul.mubr.f32.gmra.mrb[0].mxu0 %v857
        %v1054 = vpop.f32.mrb[0].mxu0
        %v1055 = vadd.f32 0.0, %v1054
        %v1056 = vpop.f32.mrb[0].mxu0
        %1057 = vmatprep.mubr.f32.mxu0 0.0
        %1058 = vmatmul.mubr.f32.gmra.mrb[0].mxu0 %v860
        %v1059 = vpop.f32.mrb[0].mxu0
        %v1060 = vadd.f32 0.0, %v1059
        %v1061 = vpop.f32.mrb[0].mxu0
        %1062 = vmatprep.mubr.f32.mxu0 0.0
        %1063 = vmatmul.mubr.f32.gmra.mrb[0].mxu0 %v863
        %v1064 = vpop.f32.mrb[0].mxu0
        %v1065 = vadd.f32 0.0, %v1064
        %v1066 = vpop.f32.mrb[0].mxu0
        %1067 = vmatprep.mubr.f32.mxu0 0.0
        %1068 = vmatmul.mubr.f32.gmra.mrb[0].mxu0 %v866
        %v1069 = vpop.f32.mrb[0].mxu0
        %v1070 = vadd.f32 0.0, %v1069
        %v1071 = vpop.f32.mrb[0].mxu0
        %1072 = vmatprep.mubr.f32.mxu0 0.0
        %1073 = vmatmul.mubr.f32.gmra.mrb[0].mxu0 %v869
        %v1074 = vpop.f32.mrb[0].mxu0
        %v1075 = vadd.f32 0.0, %v1074
        %v1076 = vpop.f32.mrb[0].mxu0
        %1077 = vmatprep.mubr.f32.mxu0 0.0
        %1078 = vmatmul.mubr.f32.gmra.mrb[0].mxu0 %v872
        %v1079 = vpop.f32.mrb[0].mxu0
        %v1080 = vadd.f32 0.0, %v1079
        %v1081 = vpop.f32.mrb[0].mxu0
        %1082 = vmatprep.mubr.f32.mxu0 0.0
        %1083 = vmatmul.mubr.f32.gmra.mrb[0].mxu0 %v875
        %v1084 = vpop.f32.mrb[0].mxu0
        %v1085 = vadd.f32 0.0, %v1084
        %v1086 = vpop.f32.mrb[0].mxu0
        %1087 = vmatprep.mubr.f32.mxu0 0.0
        %1088 = vmatmul.mubr.f32.gmra.mrb[0].mxu0 %v878
        %v1089 = vpop.f32.mrb[0].mxu0
        %v1090 = vadd.f32 0.0, %v1089
        %v1091 = vpop.f32.mrb[0].mxu0
        %1092 = vmatprep.mubr.f32.mxu0 0.0
        %1093 = vmatmul.mubr.f32.gmra.mrb[0].mxu0 %v881
        %v1094 = vpop.f32.mrb[0].mxu0
        %v1095 = vadd.f32 0.0, %v1094
        %v1096 = vpop.f32.mrb[0].mxu0
        %1097 = vmatprep.mubr.f32.mxu0 0.0
        %1098 = vmatmul.mubr.f32.gmra.mrb[0].mxu0 %v884
        %v1099 = vpop.f32.mrb[0].mxu0
        %v1100 = vadd.f32 0.0, %v1099
        %v1101 = vpop.f32.mrb[0].mxu0
        %1102 = vmatprep.mubr.f32.mxu0 0.0
        %1103 = vmatmul.mubr.f32.gmra.mrb[0].mxu0 %v887
        %v1104 = vpop.f32.mrb[0].mxu0
        %v1105 = vadd.f32 0.0, %v1104
        %v1106 = vpop.f32.mrb[0].mxu0
        %1107 = vmatprep.mubr.f32.mxu0 0.0
        %1108 = vmatmul.mubr.f32.gmra.mrb[0].mxu0 %v890
        %v1109 = vpop.f32.mrb[0].mxu0
        %v1110 = vadd.f32 0.0, %v1109
        %v1111 = vpop.f32.mrb[0].mxu0
        %1112 = vmatprep.mubr.f32.mxu0 0.0
        %1113 = vmatmul.mubr.f32.gmra.mrb[0].mxu0 %v893
        %v1114 = vpop.f32.mrb[0].mxu0
        %v1115 = vadd.f32 0.0, %v1114
        %v1116 = vpop.f32.mrb[0].mxu0
        %1117 = vmatprep.mubr.f32.mxu0 0.0
        %1118 = vmatmul.mubr.f32.gmra.mrb[0].mxu0 %v896
        %v1119 = vpop.f32.mrb[0].mxu0
        %v1120 = vadd.f32 0.0, %v1119
        %v1121 = vpop.f32.mrb[0].mxu0
        %1122 = vmatprep.mubr.f32.mxu0 0.0
        %1123 = vmatmul.mubr.f32.gmra.mrb[0].mxu0 %v899
        %v1124 = vpop.f32.mrb[0].mxu0
        %v1125 = vadd.f32 0.0, %v1124
        %v1126 = vpop.f32.mrb[0].mxu0
        %1127 = vmatprep.mubr.f32.mxu0 0.0
        %1128 = vmatmul.mubr.f32.gmra.mrb[0].mxu0 %v902
        %v1129 = vpop.f32.mrb[0].mxu0
        %v1130 = vadd.f32 0.0, %v1129
        %v1131 = vpop.f32.mrb[0].mxu0
        %1132 = vmatprep.mubr.f32.mxu0 0.0
        %1133 = vmatmul.mubr.f32.gmra.mrb[0].mxu0 %v905
        %v1134 = vpop.f32.mrb[0].mxu0
        %v1135 = vadd.f32 0.0, %v1134
        %v1136 = vpop.f32.mrb[0].mxu0
        %1137 = vmatprep.mubr.f32.mxu0 0.0
        %1138 = vmatmul.mubr.f32.gmra.mrb[0].mxu0 %v908
        %v1139 = vpop.f32.mrb[0].mxu0
        %v1140 = vadd.f32 0.0, %v1139
        %v1141 = vpop.f32.mrb[0].mxu0
        %1142 = vmatprep.mubr.f32.mxu0 0.0
        %1143 = vmatmul.mubr.f32.gmra.mrb[0].mxu0 %v911
        %v1144 = vpop.f32.mrb[0].mxu0
        %v1145 = vadd.f32 0.0, %v1144
        %v1146 = vpop.f32.mrb[0].mxu0
        %1147 = vmatprep.mubr.f32.mxu0 0.0
        %1148 = vmatmul.mubr.f32.gmra.mrb[0].mxu0 %v914
        %v1149 = vpop.f32.mrb[0].mxu0
        %v1150 = vadd.f32 0.0, %v1149
        %v1151 = vpop.f32.mrb[0].mxu0
        %1152 = vmatprep.mubr.f32.mxu0 0.0
        %1153 = vmatmul.mubr.f32.gmra.mrb[0].mxu0 %v917
        %v1154 = vpop.f32.mrb[0].mxu0
        %v1155 = vadd.f32 0.0, %v1154
        %v1156 = vpop.f32.mrb[0].mxu0
        %1157 = vmatprep.mubr.f32.mxu0 0.0
        %1158 = vmatmul.mubr.f32.gmra.mrb[0].mxu0 %v920
        %v1159 = vpop.f32.mrb[0].mxu0
        %v1160 = vadd.f32 0.0, %v1159
        %v1161 = vpop.f32.mrb[0].mxu0
        %1162 = vmatprep.mubr.f32.mxu0 0.0
        %1163 = vmatmul.mubr.f32.gmra.mrb[0].mxu0 %v923
        %v1164 = vpop.f32.mrb[0].mxu0
        %v1165 = vadd.f32 0.0, %v1164
        %v1166 = vpop.f32.mrb[0].mxu0
        %1167 = vmatprep.mubr.f32.mxu0 0.0
        %1168 = vmatmul.mubr.f32.gmra.mrb[0].mxu0 %v926
        %v1169 = vpop.f32.mrb[0].mxu0
        %v1170 = vadd.f32 0.0, %v1169
        %v1171 = vpop.f32.mrb[0].mxu0
        %1172 = vdwg.mxu0
        %v1173 = vld [vmem:[#allocation3] sm:$0xff]
        %v1174 = vld [vmem:[#allocation3 + $0x8] sm:$0xff]
        %v1175 = vld [vmem:[#allocation3 + $0x10] sm:$0xff]
        %v1176 = vld [vmem:[#allocation3 + $0x18] sm:$0xff]
        %v1177 = vld [vmem:[#allocation3 + $0x20] sm:$0xff]
        %v1178 = vld [vmem:[#allocation3 + $0x28] sm:$0xff]
        %v1179 = vld [vmem:[#allocation3 + $0x30] sm:$0xff]
        %v1180 = vld [vmem:[#allocation3 + $0x38] sm:$0xff]
        %v1181 = vld [vmem:[#allocation3 + $0x40] sm:$0xff]
        %v1182 = vld [vmem:[#allocation3 + $0x48] sm:$0xff]
        %v1183 = vld [vmem:[#allocation3 + $0x50] sm:$0xff]
        %v1184 = vld [vmem:[#allocation3 + $0x58] sm:$0xff]
        %v1185 = vld [vmem:[#allocation3 + $0x60] sm:$0xff]
        %v1186 = vld [vmem:[#allocation3 + $0x68] sm:$0xff]
        %v1187 = vld [vmem:[#allocation3 + $0x70] sm:$0xff]
        %v1188 = vld [vmem:[#allocation3 + $0x78] sm:$0xff]
        %v1189 = vld [vmem:[#allocation3 + $0x80] sm:$0xff]
        %v1190 = vld [vmem:[#allocation3 + $0x88] sm:$0xff]
        %v1191 = vld [vmem:[#allocation3 + $0x90] sm:$0xff]
        %v1192 = vld [vmem:[#allocation3 + $0x98] sm:$0xff]
        %v1193 = vld [vmem:[#allocation3 + $0xa0] sm:$0xff]
        %v1194 = vld [vmem:[#allocation3 + $0xa8] sm:$0xff]
        %v1195 = vld [vmem:[#allocation3 + $0xb0] sm:$0xff]
        %v1196 = vld [vmem:[#allocation3 + $0xb8] sm:$0xff]
        %v1197 = vld [vmem:[#allocation3 + $0xc0] sm:$0xff]
        %v1198 = vld [vmem:[#allocation3 + $0xc8] sm:$0xff]
        %v1199 = vld [vmem:[#allocation3 + $0xd0] sm:$0xff]
        %v1200 = vld [vmem:[#allocation3 + $0xd8] sm:$0xff]
        %v1201 = vld [vmem:[#allocation3 + $0xe0] sm:$0xff]
        %v1202 = vld [vmem:[#allocation3 + $0xe8] sm:$0xff]
        %v1203 = vld [vmem:[#allocation3 + $0xf0] sm:$0xff]
        %v1204 = vld [vmem:[#allocation3 + $0xf8] sm:$0xff]
        %v1205 = vld [vmem:[#allocation3 + $0x100] sm:$0xff]
        %v1206 = vld [vmem:[#allocation3 + $0x108] sm:$0xff]
        %v1207 = vld [vmem:[#allocation3 + $0x110] sm:$0xff]
        %v1208 = vld [vmem:[#allocation3 + $0x118] sm:$0xff]
        %v1209 = vadd.f32 %v1173, %v995
        %v1210 = vadd.f32 %v1174, %v1000
        %v1211 = vadd.f32 %v1175, %v1005
        %v1212 = vadd.f32 %v1176, %v1010
        %v1213 = vadd.f32 %v1177, %v1015
        %v1214 = vadd.f32 %v1178, %v1020
        %v1215 = vadd.f32 %v1179, %v1025
        %v1216 = vadd.f32 %v1180, %v1030
        %v1217 = vadd.f32 %v1181, %v1035
        %v1218 = vadd.f32 %v1182, %v1040
        %v1219 = vadd.f32 %v1183, %v1045
        %v1220 = vadd.f32 %v1184, %v1050
        %v1221 = vadd.f32 %v1185, %v1055
        %v1222 = vadd.f32 %v1186, %v1060
        %v1223 = vadd.f32 %v1187, %v1065
        %v1224 = vadd.f32 %v1188, %v1070
        %v1225 = vadd.f32 %v1189, %v1075
        %v1226 = vadd.f32 %v1190, %v1080
        %v1227 = vadd.f32 %v1191, %v1085
        %v1228 = vadd.f32 %v1192, %v1090
        %v1229 = vadd.f32 %v1193, %v1095
        %v1230 = vadd.f32 %v1194, %v1100
        %v1231 = vadd.f32 %v1195, %v1105
        %v1232 = vadd.f32 %v1196, %v1110
        %v1233 = vadd.f32 %v1197, %v1115
        %v1234 = vadd.f32 %v1198, %v1120
        %v1235 = vadd.f32 %v1199, %v1125
        %v1236 = vadd.f32 %v1200, %v1130
        %v1237 = vadd.f32 %v1201, %v1135
        %v1238 = vadd.f32 %v1202, %v1140
        %v1239 = vadd.f32 %v1203, %v1145
        %v1240 = vadd.f32 %v1204, %v1150
        %v1241 = vadd.f32 %v1205, %v1155
        %v1242 = vadd.f32 %v1206, %v1160
        %v1243 = vadd.f32 %v1207, %v1165
        %v1244 = vadd.f32 %v1208, %v1170
        %1245 = vst [vmem:[#allocation3] sm:$0xff] %v1209
        %1246 = vst [vmem:[#allocation3 + $0x8] sm:$0xff] %v1210
        %1247 = vst [vmem:[#allocation3 + $0x10] sm:$0xff] %v1211
        %1248 = vst [vmem:[#allocation3 + $0x18] sm:$0xff] %v1212
        %1249 = vst [vmem:[#allocation3 + $0x20] sm:$0xff] %v1213
        %1250 = vst [vmem:[#allocation3 + $0x28] sm:$0xff] %v1214
        %1251 = vst [vmem:[#allocation3 + $0x30] sm:$0xff] %v1215
        %1252 = vst [vmem:[#allocation3 + $0x38] sm:$0xff] %v1216
        %1253 = vst [vmem:[#allocation3 + $0x40] sm:$0xff] %v1217
        %1254 = vst [vmem:[#allocation3 + $0x48] sm:$0xff] %v1218
        %1255 = vst [vmem:[#allocation3 + $0x50] sm:$0xff] %v1219
        %1256 = vst [vmem:[#allocation3 + $0x58] sm:$0xff] %v1220
        %1257 = vst [vmem:[#allocation3 + $0x60] sm:$0xff] %v1221
        %1258 = vst [vmem:[#allocation3 + $0x68] sm:$0xff] %v1222
        %1259 = vst [vmem:[#allocation3 + $0x70] sm:$0xff] %v1223
        %1260 = vst [vmem:[#allocation3 + $0x78] sm:$0xff] %v1224
        %1261 = vst [vmem:[#allocation3 + $0x80] sm:$0xff] %v1225
        %1262 = vst [vmem:[#allocation3 + $0x88] sm:$0xff] %v1226
        %1263 = vst [vmem:[#allocation3 + $0x90] sm:$0xff] %v1227
        %1264 = vst [vmem:[#allocation3 + $0x98] sm:$0xff] %v1228
        %1265 = vst [vmem:[#allocation3 + $0xa0] sm:$0xff] %v1229
        %1266 = vst [vmem:[#allocation3 + $0xa8] sm:$0xff] %v1230
        %1267 = vst [vmem:[#allocation3 + $0xb0] sm:$0xff] %v1231
        %1268 = vst [vmem:[#allocation3 + $0xb8] sm:$0xff] %v1232
        %1269 = vst [vmem:[#allocation3 + $0xc0] sm:$0xff] %v1233
        %1270 = vst [vmem:[#allocation3 + $0xc8] sm:$0xff] %v1234
        %1271 = vst [vmem:[#allocation3 + $0xd0] sm:$0xff] %v1235
        %1272 = vst [vmem:[#allocation3 + $0xd8] sm:$0xff] %v1236
        %1273 = vst [vmem:[#allocation3 + $0xe0] sm:$0xff] %v1237
        %1274 = vst [vmem:[#allocation3 + $0xe8] sm:$0xff] %v1238
        %1275 = vst [vmem:[#allocation3 + $0xf0] sm:$0xff] %v1239
        %1276 = vst [vmem:[#allocation3 + $0xf8] sm:$0xff] %v1240
        %1277 = vst [vmem:[#allocation3 + $0x100] sm:$0xff] %v1241
        %1278 = vst [vmem:[#allocation3 + $0x108] sm:$0xff] %v1242
        %1279 = vst [vmem:[#allocation3 + $0x110] sm:$0xff] %v1243
        %1280 = vst [vmem:[#allocation3 + $0x118] sm:$0xff] %v1244
        %v1281 = vld [vmem:[#allocation2 + $0x2] sm:$0xff]
        %v1282 = vld [vmem:[#allocation2 + $0xa] sm:$0xff]
        %v1283 = vld [vmem:[#allocation2 + $0x12] sm:$0xff]
        %v1284 = vld [vmem:[#allocation2 + $0x1a] sm:$0xff]
        %v1285 = vld [vmem:[#allocation2 + $0x22] sm:$0xff]
        %v1286 = vld [vmem:[#allocation2 + $0x2a] sm:$0xff]
        %v1287 = vld [vmem:[#allocation2 + $0x32] sm:$0xff]
        %v1288 = vld [vmem:[#allocation2 + $0x3a] sm:$0xff]
        %v1289 = vld [vmem:[#allocation2 + $0x42] sm:$0xff]
        %v1290 = vld [vmem:[#allocation2 + $0x4a] sm:$0xff]
        %v1291 = vld [vmem:[#allocation2 + $0x52] sm:$0xff]
        %v1292 = vld [vmem:[#allocation2 + $0x5a] sm:$0xff]
        %v1293 = vld [vmem:[#allocation2 + $0x62] sm:$0xff]
        %v1294 = vld [vmem:[#allocation2 + $0x6a] sm:$0xff]
        %v1295 = vld [vmem:[#allocation2 + $0x72] sm:$0xff]
        %v1296 = vld [vmem:[#allocation2 + $0x7a] sm:$0xff]
        %v1297 = vld [vmem:[#allocation2 + $0x82] sm:$0xff]
        %v1298 = vld [vmem:[#allocation2 + $0x8a] sm:$0xff]
        %v1299 = vld [vmem:[#allocation2 + $0x92] sm:$0xff]
        %v1300 = vld [vmem:[#allocation2 + $0x9a] sm:$0xff]
        %v1301 = vld [vmem:[#allocation2 + $0xa2] sm:$0xff]
        %v1302 = vld [vmem:[#allocation2 + $0xaa] sm:$0xff]
        %v1303 = vld [vmem:[#allocation2 + $0xb2] sm:$0xff]
        %v1304 = vld [vmem:[#allocation2 + $0xba] sm:$0xff]
        %v1305 = vld [vmem:[#allocation2 + $0xc2] sm:$0xff]
        %v1306 = vld [vmem:[#allocation2 + $0xca] sm:$0xff]
        %v1307 = vld [vmem:[#allocation2 + $0xd2] sm:$0xff]
        %v1308 = vld [vmem:[#allocation2 + $0xda] sm:$0xff]
        %v1309 = vld [vmem:[#allocation2 + $0xe2] sm:$0xff]
        %v1310 = vld [vmem:[#allocation2 + $0xea] sm:$0xff]
        %v1311 = vld [vmem:[#allocation2 + $0xf2] sm:$0xff]
        %v1312 = vld [vmem:[#allocation2 + $0xfa] sm:$0xff]
        %v1313 = vld [vmem:[#allocation2 + $0x102] sm:$0xff]
        %v1314 = vld [vmem:[#allocation2 + $0x10a] sm:$0xff]
        %v1315 = vld [vmem:[#allocation2 + $0x112] sm:$0xff]
        %v1316 = vld [vmem:[#allocation2 + $0x11a] sm:$0xff]
        %s1317 = scalar_lea.vmem %s2, 16
        %v1318 = vld [vmem:[%s1317] sm:$0xff]
        %v1320 = vsel %vm313, %v1281, 0
        %v1323 = vsel %vm313, %v1282, 0
        %v1326 = vsel %vm313, %v1283, 0
        %v1329 = vsel %vm313, %v1284, 0
        %v1332 = vsel %vm313, %v1285, 0
        %v1335 = vsel %vm313, %v1286, 0
        %v1338 = vsel %vm313, %v1287, 0
        %v1341 = vsel %vm313, %v1288, 0
        %v1344 = vsel %vm313, %v1289, 0
        %v1347 = vsel %vm313, %v1290, 0
        %v1350 = vsel %vm313, %v1291, 0
        %v1353 = vsel %vm313, %v1292, 0
        %v1356 = vsel %vm313, %v1293, 0
        %v1359 = vsel %vm313, %v1294, 0
        %v1362 = vsel %vm313, %v1295, 0
        %v1365 = vsel %vm313, %v1296, 0
        %v1368 = vsel %vm313, %v1297, 0
        %v1371 = vsel %vm313, %v1298, 0
        %v1374 = vsel %vm313, %v1299, 0
        %v1377 = vsel %vm313, %v1300, 0
        %v1380 = vsel %vm313, %v1301, 0
        %v1383 = vsel %vm313, %v1302, 0
        %v1386 = vsel %vm313, %v1303, 0
        %v1389 = vsel %vm313, %v1304, 0
        %v1392 = vsel %vm313, %v1305, 0
        %v1395 = vsel %vm313, %v1306, 0
        %v1398 = vsel %vm313, %v1307, 0
        %v1401 = vsel %vm313, %v1308, 0
        %v1404 = vsel %vm313, %v1309, 0
        %v1407 = vsel %vm313, %v1310, 0
        %v1410 = vsel %vm313, %v1311, 0
        %v1413 = vsel %vm313, %v1312, 0
        %v1416 = vsel %vm313, %v1313, 0
        %v1419 = vsel %vm313, %v1314, 0
        %v1422 = vsel %vm313, %v1315, 0
        %v1425 = vsel %vm313, %v1316, 0
        %1427 = vmatprep.subr.mxu0 0.0
        %1428 = vmatpush1.msra.mxu0 %v1318
        %1429 = vmatprep.subr.mxu0 0.0
        %1430 = vmatpush1.msra.mxu0 0.0
        %1431 = vmatprep.subr.mxu0 0.0
        %1432 = vmatpush1.msra.mxu0 0.0
        %1433 = vmatprep.subr.mxu0 0.0
        %1434 = vmatpush1.msra.mxu0 0.0
        %1435 = vmatprep.subr.mxu0 0.0
        %1436 = vmatpush1.msra.mxu0 0.0
        %1437 = vmatprep.subr.mxu0 0.0
        %1438 = vmatpush1.msra.mxu0 0.0
        %1439 = vmatprep.subr.mxu0 0.0
        %1440 = vmatpush1.msra.mxu0 0.0
        %1441 = vmatprep.subr.mxu0 0.0
        %1442 = vmatpush1.msra.mxu0 0.0
        %1443 = vmatprep.subr.mxu0 0.0
        %1444 = vmatpush1.msra.mxu0 0.0
        %1445 = vmatprep.subr.mxu0 0.0
        %1446 = vmatpush1.msra.mxu0 0.0
        %1447 = vmatprep.subr.mxu0 0.0
        %1448 = vmatpush1.msra.mxu0 0.0
        %1449 = vmatprep.subr.mxu0 0.0
        %1450 = vmatpush1.msra.mxu0 0.0
        %1451 = vmatprep.subr.mxu0 0.0
        %1452 = vmatpush1.msra.mxu0 0.0
        %1453 = vmatprep.subr.mxu0 0.0
        %1454 = vmatpush1.msra.mxu0 0.0
        %1455 = vmatprep.subr.mxu0 0.0
        %1456 = vmatpush1.msra.mxu0 0.0
        %1457 = vmatprep.subr.mxu0 0.0
        %1458 = vmatpush1.msra.mxu0 0.0
        %1459 = vmatprep.subr.mxu0 0.0
        %1460 = vmatpush1.msra.mxu0 0.0
        %1461 = vmatprep.subr.mxu0 0.0
        %1462 = vmatpush1.msra.mxu0 0.0
        %1463 = vmatprep.subr.mxu0 0.0
        %1464 = vmatpush1.msra.mxu0 0.0
        %1465 = vmatprep.subr.mxu0 0.0
        %1466 = vmatpush1.msra.mxu0 0.0
        %1467 = vmatprep.subr.mxu0 0.0
        %1468 = vmatpush1.msra.mxu0 0.0
        %1469 = vmatprep.subr.mxu0 0.0
        %1470 = vmatpush1.msra.mxu0 0.0
        %1471 = vmatprep.subr.mxu0 0.0
        %1472 = vmatpush1.msra.mxu0 0.0
        %1473 = vmatprep.subr.mxu0 0.0
        %1474 = vmatpush1.msra.mxu0 0.0
        %1475 = vmatprep.subr.mxu0 0.0
        %1476 = vmatpush1.msra.mxu0 0.0
        %1477 = vmatprep.subr.mxu0 0.0
        %1478 = vmatpush1.msra.mxu0 0.0
        %1479 = vmatprep.subr.mxu0 0.0
        %1480 = vmatpush1.msra.mxu0 0.0
        %1481 = vmatprep.subr.mxu0 0.0
        %1482 = vmatpush1.msra.mxu0 0.0
        %1483 = vmatprep.subr.mxu0 0.0
        %1484 = vmatpush1.msra.mxu0 0.0
        %1485 = vmatprep.subr.mxu0 0.0
        %1486 = vmatpush1.msra.mxu0 0.0
        %1487 = vmatprep.subr.mxu0 0.0
        %1488 = vmatpush1.msra.mxu0 0.0
        %1489 = vmatprep.subr.mxu0 0.0
        %1490 = vmatpush1.msra.mxu0 0.0
        %1491 = vmatprep.mubr.f32.mxu0 0.0
        %1492 = vmatmul.mubr.f32.gmra.mrb[0].mxu0 %v1320
        %v1493 = vpop.f32.mrb[0].mxu0
        %v1494 = vadd.f32 0.0, %v1493
        %v1495 = vpop.f32.mrb[0].mxu0
        %1496 = vmatprep.mubr.f32.mxu0 0.0
        %1497 = vmatmul.mubr.f32.gmra.mrb[0].mxu0 %v1323
        %v1498 = vpop.f32.mrb[0].mxu0
        %v1499 = vadd.f32 0.0, %v1498
        %v1500 = vpop.f32.mrb[0].mxu0
        %1501 = vmatprep.mubr.f32.mxu0 0.0
        %1502 = vmatmul.mubr.f32.gmra.mrb[0].mxu0 %v1326
        %v1503 = vpop.f32.mrb[0].mxu0
        %v1504 = vadd.f32 0.0, %v1503
        %v1505 = vpop.f32.mrb[0].mxu0
        %1506 = vmatprep.mubr.f32.mxu0 0.0
        %1507 = vmatmul.mubr.f32.gmra.mrb[0].mxu0 %v1329
        %v1508 = vpop.f32.mrb[0].mxu0
        %v1509 = vadd.f32 0.0, %v1508
        %v1510 = vpop.f32.mrb[0].mxu0
        %1511 = vmatprep.mubr.f32.mxu0 0.0
        %1512 = vmatmul.mubr.f32.gmra.mrb[0].mxu0 %v1332
        %v1513 = vpop.f32.mrb[0].mxu0
        %v1514 = vadd.f32 0.0, %v1513
        %v1515 = vpop.f32.mrb[0].mxu0
        %1516 = vmatprep.mubr.f32.mxu0 0.0
        %1517 = vmatmul.mubr.f32.gmra.mrb[0].mxu0 %v1335
        %v1518 = vpop.f32.mrb[0].mxu0
        %v1519 = vadd.f32 0.0, %v1518
        %v1520 = vpop.f32.mrb[0].mxu0
        %1521 = vmatprep.mubr.f32.mxu0 0.0
        %1522 = vmatmul.mubr.f32.gmra.mrb[0].mxu0 %v1338
        %v1523 = vpop.f32.mrb[0].mxu0
        %v1524 = vadd.f32 0.0, %v1523
        %v1525 = vpop.f32.mrb[0].mxu0
        %1526 = vmatprep.mubr.f32.mxu0 0.0
        %1527 = vmatmul.mubr.f32.gmra.mrb[0].mxu0 %v1341
        %v1528 = vpop.f32.mrb[0].mxu0
        %v1529 = vadd.f32 0.0, %v1528
        %v1530 = vpop.f32.mrb[0].mxu0
        %1531 = vmatprep.mubr.f32.mxu0 0.0
        %1532 = vmatmul.mubr.f32.gmra.mrb[0].mxu0 %v1344
        %v1533 = vpop.f32.mrb[0].mxu0
        %v1534 = vadd.f32 0.0, %v1533
        %v1535 = vpop.f32.mrb[0].mxu0
        %1536 = vmatprep.mubr.f32.mxu0 0.0
        %1537 = vmatmul.mubr.f32.gmra.mrb[0].mxu0 %v1347
        %v1538 = vpop.f32.mrb[0].mxu0
        %v1539 = vadd.f32 0.0, %v1538
        %v1540 = vpop.f32.mrb[0].mxu0
        %1541 = vmatprep.mubr.f32.mxu0 0.0
        %1542 = vmatmul.mubr.f32.gmra.mrb[0].mxu0 %v1350
        %v1543 = vpop.f32.mrb[0].mxu0
        %v1544 = vadd.f32 0.0, %v1543
        %v1545 = vpop.f32.mrb[0].mxu0
        %1546 = vmatprep.mubr.f32.mxu0 0.0
        %1547 = vmatmul.mubr.f32.gmra.mrb[0].mxu0 %v1353
        %v1548 = vpop.f32.mrb[0].mxu0
        %v1549 = vadd.f32 0.0, %v1548
        %v1550 = vpop.f32.mrb[0].mxu0
        %1551 = vmatprep.mubr.f32.mxu0 0.0
        %1552 = vmatmul.mubr.f32.gmra.mrb[0].mxu0 %v1356
        %v1553 = vpop.f32.mrb[0].mxu0
        %v1554 = vadd.f32 0.0, %v1553
        %v1555 = vpop.f32.mrb[0].mxu0
        %1556 = vmatprep.mubr.f32.mxu0 0.0
        %1557 = vmatmul.mubr.f32.gmra.mrb[0].mxu0 %v1359
        %v1558 = vpop.f32.mrb[0].mxu0
        %v1559 = vadd.f32 0.0, %v1558
        %v1560 = vpop.f32.mrb[0].mxu0
        %1561 = vmatprep.mubr.f32.mxu0 0.0
        %1562 = vmatmul.mubr.f32.gmra.mrb[0].mxu0 %v1362
        %v1563 = vpop.f32.mrb[0].mxu0
        %v1564 = vadd.f32 0.0, %v1563
        %v1565 = vpop.f32.mrb[0].mxu0
        %1566 = vmatprep.mubr.f32.mxu0 0.0
        %1567 = vmatmul.mubr.f32.gmra.mrb[0].mxu0 %v1365
        %v1568 = vpop.f32.mrb[0].mxu0
        %v1569 = vadd.f32 0.0, %v1568
        %v1570 = vpop.f32.mrb[0].mxu0
        %1571 = vmatprep.mubr.f32.mxu0 0.0
        %1572 = vmatmul.mubr.f32.gmra.mrb[0].mxu0 %v1368
        %v1573 = vpop.f32.mrb[0].mxu0
        %v1574 = vadd.f32 0.0, %v1573
        %v1575 = vpop.f32.mrb[0].mxu0
        %1576 = vmatprep.mubr.f32.mxu0 0.0
        %1577 = vmatmul.mubr.f32.gmra.mrb[0].mxu0 %v1371
        %v1578 = vpop.f32.mrb[0].mxu0
        %v1579 = vadd.f32 0.0, %v1578
        %v1580 = vpop.f32.mrb[0].mxu0
        %1581 = vmatprep.mubr.f32.mxu0 0.0
        %1582 = vmatmul.mubr.f32.gmra.mrb[0].mxu0 %v1374
        %v1583 = vpop.f32.mrb[0].mxu0
        %v1584 = vadd.f32 0.0, %v1583
        %v1585 = vpop.f32.mrb[0].mxu0
        %1586 = vmatprep.mubr.f32.mxu0 0.0
        %1587 = vmatmul.mubr.f32.gmra.mrb[0].mxu0 %v1377
        %v1588 = vpop.f32.mrb[0].mxu0
        %v1589 = vadd.f32 0.0, %v1588
        %v1590 = vpop.f32.mrb[0].mxu0
        %1591 = vmatprep.mubr.f32.mxu0 0.0
        %1592 = vmatmul.mubr.f32.gmra.mrb[0].mxu0 %v1380
        %v1593 = vpop.f32.mrb[0].mxu0
        %v1594 = vadd.f32 0.0, %v1593
        %v1595 = vpop.f32.mrb[0].mxu0
        %1596 = vmatprep.mubr.f32.mxu0 0.0
        %1597 = vmatmul.mubr.f32.gmra.mrb[0].mxu0 %v1383
        %v1598 = vpop.f32.mrb[0].mxu0
        %v1599 = vadd.f32 0.0, %v1598
        %v1600 = vpop.f32.mrb[0].mxu0
        %1601 = vmatprep.mubr.f32.mxu0 0.0
        %1602 = vmatmul.mubr.f32.gmra.mrb[0].mxu0 %v1386
        %v1603 = vpop.f32.mrb[0].mxu0
        %v1604 = vadd.f32 0.0, %v1603
        %v1605 = vpop.f32.mrb[0].mxu0
        %1606 = vmatprep.mubr.f32.mxu0 0.0
        %1607 = vmatmul.mubr.f32.gmra.mrb[0].mxu0 %v1389
        %v1608 = vpop.f32.mrb[0].mxu0
        %v1609 = vadd.f32 0.0, %v1608
        %v1610 = vpop.f32.mrb[0].mxu0
        %1611 = vmatprep.mubr.f32.mxu0 0.0
        %1612 = vmatmul.mubr.f32.gmra.mrb[0].mxu0 %v1392
        %v1613 = vpop.f32.mrb[0].mxu0
        %v1614 = vadd.f32 0.0, %v1613
        %v1615 = vpop.f32.mrb[0].mxu0
        %1616 = vmatprep.mubr.f32.mxu0 0.0
        %1617 = vmatmul.mubr.f32.gmra.mrb[0].mxu0 %v1395
        %v1618 = vpop.f32.mrb[0].mxu0
        %v1619 = vadd.f32 0.0, %v1618
        %v1620 = vpop.f32.mrb[0].mxu0
        %1621 = vmatprep.mubr.f32.mxu0 0.0
        %1622 = vmatmul.mubr.f32.gmra.mrb[0].mxu0 %v1398
        %v1623 = vpop.f32.mrb[0].mxu0
        %v1624 = vadd.f32 0.0, %v1623
        %v1625 = vpop.f32.mrb[0].mxu0
        %1626 = vmatprep.mubr.f32.mxu0 0.0
        %1627 = vmatmul.mubr.f32.gmra.mrb[0].mxu0 %v1401
        %v1628 = vpop.f32.mrb[0].mxu0
        %v1629 = vadd.f32 0.0, %v1628
        %v1630 = vpop.f32.mrb[0].mxu0
        %1631 = vmatprep.mubr.f32.mxu0 0.0
        %1632 = vmatmul.mubr.f32.gmra.mrb[0].mxu0 %v1404
        %v1633 = vpop.f32.mrb[0].mxu0
        %v1634 = vadd.f32 0.0, %v1633
        %v1635 = vpop.f32.mrb[0].mxu0
        %1636 = vmatprep.mubr.f32.mxu0 0.0
        %1637 = vmatmul.mubr.f32.gmra.mrb[0].mxu0 %v1407
        %v1638 = vpop.f32.mrb[0].mxu0
        %v1639 = vadd.f32 0.0, %v1638
        %v1640 = vpop.f32.mrb[0].mxu0
        %1641 = vmatprep.mubr.f32.mxu0 0.0
        %1642 = vmatmul.mubr.f32.gmra.mrb[0].mxu0 %v1410
        %v1643 = vpop.f32.mrb[0].mxu0
        %v1644 = vadd.f32 0.0, %v1643
        %v1645 = vpop.f32.mrb[0].mxu0
        %1646 = vmatprep.mubr.f32.mxu0 0.0
        %1647 = vmatmul.mubr.f32.gmra.mrb[0].mxu0 %v1413
        %v1648 = vpop.f32.mrb[0].mxu0
        %v1649 = vadd.f32 0.0, %v1648
        %v1650 = vpop.f32.mrb[0].mxu0
        %1651 = vmatprep.mubr.f32.mxu0 0.0
        %1652 = vmatmul.mubr.f32.gmra.mrb[0].mxu0 %v1416
        %v1653 = vpop.f32.mrb[0].mxu0
        %v1654 = vadd.f32 0.0, %v1653
        %v1655 = vpop.f32.mrb[0].mxu0
        %1656 = vmatprep.mubr.f32.mxu0 0.0
        %1657 = vmatmul.mubr.f32.gmra.mrb[0].mxu0 %v1419
        %v1658 = vpop.f32.mrb[0].mxu0
        %v1659 = vadd.f32 0.0, %v1658
        %v1660 = vpop.f32.mrb[0].mxu0
        %1661 = vmatprep.mubr.f32.mxu0 0.0
        %1662 = vmatmul.mubr.f32.gmra.mrb[0].mxu0 %v1422
        %v1663 = vpop.f32.mrb[0].mxu0
        %v1664 = vadd.f32 0.0, %v1663
        %v1665 = vpop.f32.mrb[0].mxu0
        %1666 = vmatprep.mubr.f32.mxu0 0.0
        %1667 = vmatmul.mubr.f32.gmra.mrb[0].mxu0 %v1425
        %v1668 = vpop.f32.mrb[0].mxu0
        %v1669 = vadd.f32 0.0, %v1668
        %v1670 = vpop.f32.mrb[0].mxu0
        %1671 = vdwg.mxu0
        %v1672 = vld [vmem:[#allocation3] sm:$0xff]
        %v1673 = vld [vmem:[#allocation3 + $0x8] sm:$0xff]
        %v1674 = vld [vmem:[#allocation3 + $0x10] sm:$0xff]
        %v1675 = vld [vmem:[#allocation3 + $0x18] sm:$0xff]
        %v1676 = vld [vmem:[#allocation3 + $0x20] sm:$0xff]
        %v1677 = vld [vmem:[#allocation3 + $0x28] sm:$0xff]
        %v1678 = vld [vmem:[#allocation3 + $0x30] sm:$0xff]
        %v1679 = vld [vmem:[#allocation3 + $0x38] sm:$0xff]
        %v1680 = vld [vmem:[#allocation3 + $0x40] sm:$0xff]
        %v1681 = vld [vmem:[#allocation3 + $0x48] sm:$0xff]
        %v1682 = vld [vmem:[#allocation3 + $0x50] sm:$0xff]
        %v1683 = vld [vmem:[#allocation3 + $0x58] sm:$0xff]
        %v1684 = vld [vmem:[#allocation3 + $0x60] sm:$0xff]
        %v1685 = vld [vmem:[#allocation3 + $0x68] sm:$0xff]
        %v1686 = vld [vmem:[#allocation3 + $0x70] sm:$0xff]
        %v1687 = vld [vmem:[#allocation3 + $0x78] sm:$0xff]
        %v1688 = vld [vmem:[#allocation3 + $0x80] sm:$0xff]
        %v1689 = vld [vmem:[#allocation3 + $0x88] sm:$0xff]
        %v1690 = vld [vmem:[#allocation3 + $0x90] sm:$0xff]
        %v1691 = vld [vmem:[#allocation3 + $0x98] sm:$0xff]
        %v1692 = vld [vmem:[#allocation3 + $0xa0] sm:$0xff]
        %v1693 = vld [vmem:[#allocation3 + $0xa8] sm:$0xff]
        %v1694 = vld [vmem:[#allocation3 + $0xb0] sm:$0xff]
        %v1695 = vld [vmem:[#allocation3 + $0xb8] sm:$0xff]
        %v1696 = vld [vmem:[#allocation3 + $0xc0] sm:$0xff]
        %v1697 = vld [vmem:[#allocation3 + $0xc8] sm:$0xff]
        %v1698 = vld [vmem:[#allocation3 + $0xd0] sm:$0xff]
        %v1699 = vld [vmem:[#allocation3 + $0xd8] sm:$0xff]
        %v1700 = vld [vmem:[#allocation3 + $0xe0] sm:$0xff]
        %v1701 = vld [vmem:[#allocation3 + $0xe8] sm:$0xff]
        %v1702 = vld [vmem:[#allocation3 + $0xf0] sm:$0xff]
        %v1703 = vld [vmem:[#allocation3 + $0xf8] sm:$0xff]
        %v1704 = vld [vmem:[#allocation3 + $0x100] sm:$0xff]
        %v1705 = vld [vmem:[#allocation3 + $0x108] sm:$0xff]
        %v1706 = vld [vmem:[#allocation3 + $0x110] sm:$0xff]
        %v1707 = vld [vmem:[#allocation3 + $0x118] sm:$0xff]
        %v1708 = vadd.f32 %v1672, %v1494
        %v1709 = vadd.f32 %v1673, %v1499
        %v1710 = vadd.f32 %v1674, %v1504
        %v1711 = vadd.f32 %v1675, %v1509
        %v1712 = vadd.f32 %v1676, %v1514
        %v1713 = vadd.f32 %v1677, %v1519
        %v1714 = vadd.f32 %v1678, %v1524
        %v1715 = vadd.f32 %v1679, %v1529
        %v1716 = vadd.f32 %v1680, %v1534
        %v1717 = vadd.f32 %v1681, %v1539
        %v1718 = vadd.f32 %v1682, %v1544
        %v1719 = vadd.f32 %v1683, %v1549
        %v1720 = vadd.f32 %v1684, %v1554
        %v1721 = vadd.f32 %v1685, %v1559
        %v1722 = vadd.f32 %v1686, %v1564
        %v1723 = vadd.f32 %v1687, %v1569
        %v1724 = vadd.f32 %v1688, %v1574
        %v1725 = vadd.f32 %v1689, %v1579
        %v1726 = vadd.f32 %v1690, %v1584
        %v1727 = vadd.f32 %v1691, %v1589
        %v1728 = vadd.f32 %v1692, %v1594
        %v1729 = vadd.f32 %v1693, %v1599
        %v1730 = vadd.f32 %v1694, %v1604
        %v1731 = vadd.f32 %v1695, %v1609
        %v1732 = vadd.f32 %v1696, %v1614
        %v1733 = vadd.f32 %v1697, %v1619
        %v1734 = vadd.f32 %v1698, %v1624
        %v1735 = vadd.f32 %v1699, %v1629
        %v1736 = vadd.f32 %v1700, %v1634
        %v1737 = vadd.f32 %v1701, %v1639
        %v1738 = vadd.f32 %v1702, %v1644
        %v1739 = vadd.f32 %v1703, %v1649
        %v1740 = vadd.f32 %v1704, %v1654
        %v1741 = vadd.f32 %v1705, %v1659
        %v1742 = vadd.f32 %v1706, %v1664
        %v1743 = vadd.f32 %v1707, %v1669
        %1744 = vst [vmem:[#allocation3] sm:$0xff] %v1708
        %1745 = vst [vmem:[#allocation3 + $0x8] sm:$0xff] %v1709
        %1746 = vst [vmem:[#allocation3 + $0x10] sm:$0xff] %v1710
        %1747 = vst [vmem:[#allocation3 + $0x18] sm:$0xff] %v1711
        %1748 = vst [vmem:[#allocation3 + $0x20] sm:$0xff] %v1712
        %1749 = vst [vmem:[#allocation3 + $0x28] sm:$0xff] %v1713
        %1750 = vst [vmem:[#allocation3 + $0x30] sm:$0xff] %v1714
        %1751 = vst [vmem:[#allocation3 + $0x38] sm:$0xff] %v1715
        %1752 = vst [vmem:[#allocation3 + $0x40] sm:$0xff] %v1716
        %1753 = vst [vmem:[#allocation3 + $0x48] sm:$0xff] %v1717
        %1754 = vst [vmem:[#allocation3 + $0x50] sm:$0xff] %v1718
        %1755 = vst [vmem:[#allocation3 + $0x58] sm:$0xff] %v1719
        %1756 = vst [vmem:[#allocation3 + $0x60] sm:$0xff] %v1720
        %1757 = vst [vmem:[#allocation3 + $0x68] sm:$0xff] %v1721
        %1758 = vst [vmem:[#allocation3 + $0x70] sm:$0xff] %v1722
        %1759 = vst [vmem:[#allocation3 + $0x78] sm:$0xff] %v1723
        %1760 = vst [vmem:[#allocation3 + $0x80] sm:$0xff] %v1724
        %1761 = vst [vmem:[#allocation3 + $0x88] sm:$0xff] %v1725
        %1762 = vst [vmem:[#allocation3 + $0x90] sm:$0xff] %v1726
        %1763 = vst [vmem:[#allocation3 + $0x98] sm:$0xff] %v1727
        %1764 = vst [vmem:[#allocation3 + $0xa0] sm:$0xff] %v1728
        %1765 = vst [vmem:[#allocation3 + $0xa8] sm:$0xff] %v1729
        %1766 = vst [vmem:[#allocation3 + $0xb0] sm:$0xff] %v1730
        %1767 = vst [vmem:[#allocation3 + $0xb8] sm:$0xff] %v1731
        %1768 = vst [vmem:[#allocation3 + $0xc0] sm:$0xff] %v1732
        %1769 = vst [vmem:[#allocation3 + $0xc8] sm:$0xff] %v1733
        %1770 = vst [vmem:[#allocation3 + $0xd0] sm:$0xff] %v1734
        %1771 = vst [vmem:[#allocation3 + $0xd8] sm:$0xff] %v1735
        %1772 = vst [vmem:[#allocation3 + $0xe0] sm:$0xff] %v1736
        %1773 = vst [vmem:[#allocation3 + $0xe8] sm:$0xff] %v1737
        %1774 = vst [vmem:[#allocation3 + $0xf0] sm:$0xff] %v1738
        %1775 = vst [vmem:[#allocation3 + $0xf8] sm:$0xff] %v1739
        %1776 = vst [vmem:[#allocation3 + $0x100] sm:$0xff] %v1740
        %1777 = vst [vmem:[#allocation3 + $0x108] sm:$0xff] %v1741
        %1778 = vst [vmem:[#allocation3 + $0x110] sm:$0xff] %v1742
        %1779 = vst [vmem:[#allocation3 + $0x118] sm:$0xff] %v1743
        %v1780 = vld [vmem:[#allocation2 + $0x12] sm:$0xff]
        %v1781 = vld [vmem:[#allocation2 + $0x1a] sm:$0xff]
        %v1782 = vld [vmem:[#allocation2 + $0x22] sm:$0xff]
        %v1783 = vld [vmem:[#allocation2 + $0x2a] sm:$0xff]
        %v1784 = vld [vmem:[#allocation2 + $0x32] sm:$0xff]
        %v1785 = vld [vmem:[#allocation2 + $0x3a] sm:$0xff]
        %v1786 = vld [vmem:[#allocation2 + $0x42] sm:$0xff]
        %v1787 = vld [vmem:[#allocation2 + $0x4a] sm:$0xff]
        %v1788 = vld [vmem:[#allocation2 + $0x52] sm:$0xff]
        %v1789 = vld [vmem:[#allocation2 + $0x5a] sm:$0xff]
        %v1790 = vld [vmem:[#allocation2 + $0x62] sm:$0xff]
        %v1791 = vld [vmem:[#allocation2 + $0x6a] sm:$0xff]
        %v1792 = vld [vmem:[#allocation2 + $0x72] sm:$0xff]
        %v1793 = vld [vmem:[#allocation2 + $0x7a] sm:$0xff]
        %v1794 = vld [vmem:[#allocation2 + $0x82] sm:$0xff]
        %v1795 = vld [vmem:[#allocation2 + $0x8a] sm:$0xff]
        %v1796 = vld [vmem:[#allocation2 + $0x92] sm:$0xff]
        %v1797 = vld [vmem:[#allocation2 + $0x9a] sm:$0xff]
        %v1798 = vld [vmem:[#allocation2 + $0xa2] sm:$0xff]
        %v1799 = vld [vmem:[#allocation2 + $0xaa] sm:$0xff]
        %v1800 = vld [vmem:[#allocation2 + $0xb2] sm:$0xff]
        %v1801 = vld [vmem:[#allocation2 + $0xba] sm:$0xff]
        %v1802 = vld [vmem:[#allocation2 + $0xc2] sm:$0xff]
        %v1803 = vld [vmem:[#allocation2 + $0xca] sm:$0xff]
        %v1804 = vld [vmem:[#allocation2 + $0xd2] sm:$0xff]
        %v1805 = vld [vmem:[#allocation2 + $0xda] sm:$0xff]
        %v1806 = vld [vmem:[#allocation2 + $0xe2] sm:$0xff]
        %v1807 = vld [vmem:[#allocation2 + $0xea] sm:$0xff]
        %v1808 = vld [vmem:[#allocation2 + $0xf2] sm:$0xff]
        %v1809 = vld [vmem:[#allocation2 + $0xfa] sm:$0xff]
        %v1810 = vld [vmem:[#allocation2 + $0x102] sm:$0xff]
        %v1811 = vld [vmem:[#allocation2 + $0x10a] sm:$0xff]
        %v1812 = vld [vmem:[#allocation2 + $0x112] sm:$0xff]
        %v1813 = vld [vmem:[#allocation2 + $0x11a] sm:$0xff]
        %v1814 = vld [vmem:[#allocation2 + $0x122] sm:$0xff]
        %v1815 = vld [vmem:[#allocation2 + $0x12a] sm:$0xff]
        %s1816 = scalar_lea.vmem %s2, 24
        %v1817 = vld [vmem:[%s1816] sm:$0xff]
        %v1819 = vsel %vm313, %v1780, 0
        %v1822 = vsel %vm313, %v1781, 0
        %v1825 = vsel %vm313, %v1782, 0
        %v1828 = vsel %vm313, %v1783, 0
        %v1831 = vsel %vm313, %v1784, 0
        %v1834 = vsel %vm313, %v1785, 0
        %v1837 = vsel %vm313, %v1786, 0
        %v1840 = vsel %vm313, %v1787, 0
        %v1843 = vsel %vm313, %v1788, 0
        %v1846 = vsel %vm313, %v1789, 0
        %v1849 = vsel %vm313, %v1790, 0
        %v1852 = vsel %vm313, %v1791, 0
        %v1855 = vsel %vm313, %v1792, 0
        %v1858 = vsel %vm313, %v1793, 0
        %v1861 = vsel %vm313, %v1794, 0
        %v1864 = vsel %vm313, %v1795, 0
        %v1867 = vsel %vm313, %v1796, 0
        %v1870 = vsel %vm313, %v1797, 0
        %v1873 = vsel %vm313, %v1798, 0
        %v1876 = vsel %vm313, %v1799, 0
        %v1879 = vsel %vm313, %v1800, 0
        %v1882 = vsel %vm313, %v1801, 0
        %v1885 = vsel %vm313, %v1802, 0
        %v1888 = vsel %vm313, %v1803, 0
        %v1891 = vsel %vm313, %v1804, 0
        %v1894 = vsel %vm313, %v1805, 0
        %v1897 = vsel %vm313, %v1806, 0
        %v1900 = vsel %vm313, %v1807, 0
        %v1903 = vsel %vm313, %v1808, 0
        %v1906 = vsel %vm313, %v1809, 0
        %v1909 = vsel %vm313, %v1810, 0
        %v1912 = vsel %vm313, %v1811, 0
        %v1915 = vsel %vm313, %v1812, 0
        %v1918 = vsel %vm313, %v1813, 0
        %v1921 = vsel %vm313, %v1814, 0
        %v1924 = vsel %vm313, %v1815, 0
        %1926 = vmatprep.subr.mxu0 0.0
        %1927 = vmatpush1.msra.mxu0 %v1817
        %1928 = vmatprep.subr.mxu0 0.0
        %1929 = vmatpush1.msra.mxu0 0.0
        %1930 = vmatprep.subr.mxu0 0.0
        %1931 = vmatpush1.msra.mxu0 0.0
        %1932 = vmatprep.subr.mxu0 0.0
        %1933 = vmatpush1.msra.mxu0 0.0
        %1934 = vmatprep.subr.mxu0 0.0
        %1935 = vmatpush1.msra.mxu0 0.0
        %1936 = vmatprep.subr.mxu0 0.0
        %1937 = vmatpush1.msra.mxu0 0.0
        %1938 = vmatprep.subr.mxu0 0.0
        %1939 = vmatpush1.msra.mxu0 0.0
        %1940 = vmatprep.subr.mxu0 0.0
        %1941 = vmatpush1.msra.mxu0 0.0
        %1942 = vmatprep.subr.mxu0 0.0
        %1943 = vmatpush1.msra.mxu0 0.0
        %1944 = vmatprep.subr.mxu0 0.0
        %1945 = vmatpush1.msra.mxu0 0.0
        %1946 = vmatprep.subr.mxu0 0.0
        %1947 = vmatpush1.msra.mxu0 0.0
        %1948 = vmatprep.subr.mxu0 0.0
        %1949 = vmatpush1.msra.mxu0 0.0
        %1950 = vmatprep.subr.mxu0 0.0
        %1951 = vmatpush1.msra.mxu0 0.0
        %1952 = vmatprep.subr.mxu0 0.0
        %1953 = vmatpush1.msra.mxu0 0.0
        %1954 = vmatprep.subr.mxu0 0.0
        %1955 = vmatpush1.msra.mxu0 0.0
        %1956 = vmatprep.subr.mxu0 0.0
        %1957 = vmatpush1.msra.mxu0 0.0
        %1958 = vmatprep.subr.mxu0 0.0
        %1959 = vmatpush1.msra.mxu0 0.0
        %1960 = vmatprep.subr.mxu0 0.0
        %1961 = vmatpush1.msra.mxu0 0.0
        %1962 = vmatprep.subr.mxu0 0.0
        %1963 = vmatpush1.msra.mxu0 0.0
        %1964 = vmatprep.subr.mxu0 0.0
        %1965 = vmatpush1.msra.mxu0 0.0
        %1966 = vmatprep.subr.mxu0 0.0
        %1967 = vmatpush1.msra.mxu0 0.0
        %1968 = vmatprep.subr.mxu0 0.0
        %1969 = vmatpush1.msra.mxu0 0.0
        %1970 = vmatprep.subr.mxu0 0.0
        %1971 = vmatpush1.msra.mxu0 0.0
        %1972 = vmatprep.subr.mxu0 0.0
        %1973 = vmatpush1.msra.mxu0 0.0
        %1974 = vmatprep.subr.mxu0 0.0
        %1975 = vmatpush1.msra.mxu0 0.0
        %1976 = vmatprep.subr.mxu0 0.0
        %1977 = vmatpush1.msra.mxu0 0.0
        %1978 = vmatprep.subr.mxu0 0.0
        %1979 = vmatpush1.msra.mxu0 0.0
        %1980 = vmatprep.subr.mxu0 0.0
        %1981 = vmatpush1.msra.mxu0 0.0
        %1982 = vmatprep.subr.mxu0 0.0
        %1983 = vmatpush1.msra.mxu0 0.0
        %1984 = vmatprep.subr.mxu0 0.0
        %1985 = vmatpush1.msra.mxu0 0.0
        %1986 = vmatprep.subr.mxu0 0.0
        %1987 = vmatpush1.msra.mxu0 0.0
        %1988 = vmatprep.subr.mxu0 0.0
        %1989 = vmatpush1.msra.mxu0 0.0
        %1990 = vmatprep.mubr.f32.mxu0 0.0
        %1991 = vmatmul.mubr.f32.gmra.mrb[0].mxu0 %v1819
        %v1992 = vpop.f32.mrb[0].mxu0
        %v1993 = vadd.f32 0.0, %v1992
        %v1994 = vpop.f32.mrb[0].mxu0
        %1995 = vmatprep.mubr.f32.mxu0 0.0
        %1996 = vmatmul.mubr.f32.gmra.mrb[0].mxu0 %v1822
        %v1997 = vpop.f32.mrb[0].mxu0
        %v1998 = vadd.f32 0.0, %v1997
        %v1999 = vpop.f32.mrb[0].mxu0
        %2000 = vmatprep.mubr.f32.mxu0 0.0
        %2001 = vmatmul.mubr.f32.gmra.mrb[0].mxu0 %v1825
        %v2002 = vpop.f32.mrb[0].mxu0
        %v2003 = vadd.f32 0.0, %v2002
        %v2004 = vpop.f32.mrb[0].mxu0
        %2005 = vmatprep.mubr.f32.mxu0 0.0
        %2006 = vmatmul.mubr.f32.gmra.mrb[0].mxu0 %v1828
        %v2007 = vpop.f32.mrb[0].mxu0
        %v2008 = vadd.f32 0.0, %v2007
        %v2009 = vpop.f32.mrb[0].mxu0
        %2010 = vmatprep.mubr.f32.mxu0 0.0
        %2011 = vmatmul.mubr.f32.gmra.mrb[0].mxu0 %v1831
        %v2012 = vpop.f32.mrb[0].mxu0
        %v2013 = vadd.f32 0.0, %v2012
        %v2014 = vpop.f32.mrb[0].mxu0
        %2015 = vmatprep.mubr.f32.mxu0 0.0
        %2016 = vmatmul.mubr.f32.gmra.mrb[0].mxu0 %v1834
        %v2017 = vpop.f32.mrb[0].mxu0
        %v2018 = vadd.f32 0.0, %v2017
        %v2019 = vpop.f32.mrb[0].mxu0
        %2020 = vmatprep.mubr.f32.mxu0 0.0
        %2021 = vmatmul.mubr.f32.gmra.mrb[0].mxu0 %v1837
        %v2022 = vpop.f32.mrb[0].mxu0
        %v2023 = vadd.f32 0.0, %v2022
        %v2024 = vpop.f32.mrb[0].mxu0
        %2025 = vmatprep.mubr.f32.mxu0 0.0
        %2026 = vmatmul.mubr.f32.gmra.mrb[0].mxu0 %v1840
        %v2027 = vpop.f32.mrb[0].mxu0
        %v2028 = vadd.f32 0.0, %v2027
        %v2029 = vpop.f32.mrb[0].mxu0
        %2030 = vmatprep.mubr.f32.mxu0 0.0
        %2031 = vmatmul.mubr.f32.gmra.mrb[0].mxu0 %v1843
        %v2032 = vpop.f32.mrb[0].mxu0
        %v2033 = vadd.f32 0.0, %v2032
        %v2034 = vpop.f32.mrb[0].mxu0
        %2035 = vmatprep.mubr.f32.mxu0 0.0
        %2036 = vmatmul.mubr.f32.gmra.mrb[0].mxu0 %v1846
        %v2037 = vpop.f32.mrb[0].mxu0
        %v2038 = vadd.f32 0.0, %v2037
        %v2039 = vpop.f32.mrb[0].mxu0
        %2040 = vmatprep.mubr.f32.mxu0 0.0
        %2041 = vmatmul.mubr.f32.gmra.mrb[0].mxu0 %v1849
        %v2042 = vpop.f32.mrb[0].mxu0
        %v2043 = vadd.f32 0.0, %v2042
        %v2044 = vpop.f32.mrb[0].mxu0
        %2045 = vmatprep.mubr.f32.mxu0 0.0
        %2046 = vmatmul.mubr.f32.gmra.mrb[0].mxu0 %v1852
        %v2047 = vpop.f32.mrb[0].mxu0
        %v2048 = vadd.f32 0.0, %v2047
        %v2049 = vpop.f32.mrb[0].mxu0
        %2050 = vmatprep.mubr.f32.mxu0 0.0
        %2051 = vmatmul.mubr.f32.gmra.mrb[0].mxu0 %v1855
        %v2052 = vpop.f32.mrb[0].mxu0
        %v2053 = vadd.f32 0.0, %v2052
        %v2054 = vpop.f32.mrb[0].mxu0
        %2055 = vmatprep.mubr.f32.mxu0 0.0
        %2056 = vmatmul.mubr.f32.gmra.mrb[0].mxu0 %v1858
        %v2057 = vpop.f32.mrb[0].mxu0
        %v2058 = vadd.f32 0.0, %v2057
        %v2059 = vpop.f32.mrb[0].mxu0
        %2060 = vmatprep.mubr.f32.mxu0 0.0
        %2061 = vmatmul.mubr.f32.gmra.mrb[0].mxu0 %v1861
        %v2062 = vpop.f32.mrb[0].mxu0
        %v2063 = vadd.f32 0.0, %v2062
        %v2064 = vpop.f32.mrb[0].mxu0
        %2065 = vmatprep.mubr.f32.mxu0 0.0
        %2066 = vmatmul.mubr.f32.gmra.mrb[0].mxu0 %v1864
        %v2067 = vpop.f32.mrb[0].mxu0
        %v2068 = vadd.f32 0.0, %v2067
        %v2069 = vpop.f32.mrb[0].mxu0
        %2070 = vmatprep.mubr.f32.mxu0 0.0
        %2071 = vmatmul.mubr.f32.gmra.mrb[0].mxu0 %v1867
        %v2072 = vpop.f32.mrb[0].mxu0
        %v2073 = vadd.f32 0.0, %v2072
        %v2074 = vpop.f32.mrb[0].mxu0
        %2075 = vmatprep.mubr.f32.mxu0 0.0
        %2076 = vmatmul.mubr.f32.gmra.mrb[0].mxu0 %v1870
        %v2077 = vpop.f32.mrb[0].mxu0
        %v2078 = vadd.f32 0.0, %v2077
        %v2079 = vpop.f32.mrb[0].mxu0
        %2080 = vmatprep.mubr.f32.mxu0 0.0
        %2081 = vmatmul.mubr.f32.gmra.mrb[0].mxu0 %v1873
        %v2082 = vpop.f32.mrb[0].mxu0
        %v2083 = vadd.f32 0.0, %v2082
        %v2084 = vpop.f32.mrb[0].mxu0
        %2085 = vmatprep.mubr.f32.mxu0 0.0
        %2086 = vmatmul.mubr.f32.gmra.mrb[0].mxu0 %v1876
        %v2087 = vpop.f32.mrb[0].mxu0
        %v2088 = vadd.f32 0.0, %v2087
        %v2089 = vpop.f32.mrb[0].mxu0
        %2090 = vmatprep.mubr.f32.mxu0 0.0
        %2091 = vmatmul.mubr.f32.gmra.mrb[0].mxu0 %v1879
        %v2092 = vpop.f32.mrb[0].mxu0
        %v2093 = vadd.f32 0.0, %v2092
        %v2094 = vpop.f32.mrb[0].mxu0
        %2095 = vmatprep.mubr.f32.mxu0 0.0
        %2096 = vmatmul.mubr.f32.gmra.mrb[0].mxu0 %v1882
        %v2097 = vpop.f32.mrb[0].mxu0
        %v2098 = vadd.f32 0.0, %v2097
        %v2099 = vpop.f32.mrb[0].mxu0
        %2100 = vmatprep.mubr.f32.mxu0 0.0
        %2101 = vmatmul.mubr.f32.gmra.mrb[0].mxu0 %v1885
        %v2102 = vpop.f32.mrb[0].mxu0
        %v2103 = vadd.f32 0.0, %v2102
        %v2104 = vpop.f32.mrb[0].mxu0
        %2105 = vmatprep.mubr.f32.mxu0 0.0
        %2106 = vmatmul.mubr.f32.gmra.mrb[0].mxu0 %v1888
        %v2107 = vpop.f32.mrb[0].mxu0
        %v2108 = vadd.f32 0.0, %v2107
        %v2109 = vpop.f32.mrb[0].mxu0
        %2110 = vmatprep.mubr.f32.mxu0 0.0
        %2111 = vmatmul.mubr.f32.gmra.mrb[0].mxu0 %v1891
        %v2112 = vpop.f32.mrb[0].mxu0
        %v2113 = vadd.f32 0.0, %v2112
        %v2114 = vpop.f32.mrb[0].mxu0
        %2115 = vmatprep.mubr.f32.mxu0 0.0
        %2116 = vmatmul.mubr.f32.gmra.mrb[0].mxu0 %v1894
        %v2117 = vpop.f32.mrb[0].mxu0
        %v2118 = vadd.f32 0.0, %v2117
        %v2119 = vpop.f32.mrb[0].mxu0
        %2120 = vmatprep.mubr.f32.mxu0 0.0
        %2121 = vmatmul.mubr.f32.gmra.mrb[0].mxu0 %v1897
        %v2122 = vpop.f32.mrb[0].mxu0
        %v2123 = vadd.f32 0.0, %v2122
        %v2124 = vpop.f32.mrb[0].mxu0
        %2125 = vmatprep.mubr.f32.mxu0 0.0
        %2126 = vmatmul.mubr.f32.gmra.mrb[0].mxu0 %v1900
        %v2127 = vpop.f32.mrb[0].mxu0
        %v2128 = vadd.f32 0.0, %v2127
        %v2129 = vpop.f32.mrb[0].mxu0
        %2130 = vmatprep.mubr.f32.mxu0 0.0
        %2131 = vmatmul.mubr.f32.gmra.mrb[0].mxu0 %v1903
        %v2132 = vpop.f32.mrb[0].mxu0
        %v2133 = vadd.f32 0.0, %v2132
        %v2134 = vpop.f32.mrb[0].mxu0
        %2135 = vmatprep.mubr.f32.mxu0 0.0
        %2136 = vmatmul.mubr.f32.gmra.mrb[0].mxu0 %v1906
        %v2137 = vpop.f32.mrb[0].mxu0
        %v2138 = vadd.f32 0.0, %v2137
        %v2139 = vpop.f32.mrb[0].mxu0
        %2140 = vmatprep.mubr.f32.mxu0 0.0
        %2141 = vmatmul.mubr.f32.gmra.mrb[0].mxu0 %v1909
        %v2142 = vpop.f32.mrb[0].mxu0
        %v2143 = vadd.f32 0.0, %v2142
        %v2144 = vpop.f32.mrb[0].mxu0
        %2145 = vmatprep.mubr.f32.mxu0 0.0
        %2146 = vmatmul.mubr.f32.gmra.mrb[0].mxu0 %v1912
        %v2147 = vpop.f32.mrb[0].mxu0
        %v2148 = vadd.f32 0.0, %v2147
        %v2149 = vpop.f32.mrb[0].mxu0
        %2150 = vmatprep.mubr.f32.mxu0 0.0
        %2151 = vmatmul.mubr.f32.gmra.mrb[0].mxu0 %v1915
        %v2152 = vpop.f32.mrb[0].mxu0
        %v2153 = vadd.f32 0.0, %v2152
        %v2154 = vpop.f32.mrb[0].mxu0
        %2155 = vmatprep.mubr.f32.mxu0 0.0
        %2156 = vmatmul.mubr.f32.gmra.mrb[0].mxu0 %v1918
        %v2157 = vpop.f32.mrb[0].mxu0
        %v2158 = vadd.f32 0.0, %v2157
        %v2159 = vpop.f32.mrb[0].mxu0
        %2160 = vmatprep.mubr.f32.mxu0 0.0
        %2161 = vmatmul.mubr.f32.gmra.mrb[0].mxu0 %v1921
        %v2162 = vpop.f32.mrb[0].mxu0
        %v2163 = vadd.f32 0.0, %v2162
        %v2164 = vpop.f32.mrb[0].mxu0
        %2165 = vmatprep.mubr.f32.mxu0 0.0
        %2166 = vmatmul.mubr.f32.gmra.mrb[0].mxu0 %v1924
        %v2167 = vpop.f32.mrb[0].mxu0
        %v2168 = vadd.f32 0.0, %v2167
        %v2169 = vpop.f32.mrb[0].mxu0
        %2170 = vdwg.mxu0
        %v2171 = vld [vmem:[#allocation3] sm:$0xff]
        %v2172 = vld [vmem:[#allocation3 + $0x8] sm:$0xff]
        %v2173 = vld [vmem:[#allocation3 + $0x10] sm:$0xff]
        %v2174 = vld [vmem:[#allocation3 + $0x18] sm:$0xff]
        %v2175 = vld [vmem:[#allocation3 + $0x20] sm:$0xff]
        %v2176 = vld [vmem:[#allocation3 + $0x28] sm:$0xff]
        %v2177 = vld [vmem:[#allocation3 + $0x30] sm:$0xff]
        %v2178 = vld [vmem:[#allocation3 + $0x38] sm:$0xff]
        %v2179 = vld [vmem:[#allocation3 + $0x40] sm:$0xff]
        %v2180 = vld [vmem:[#allocation3 + $0x48] sm:$0xff]
        %v2181 = vld [vmem:[#allocation3 + $0x50] sm:$0xff]
        %v2182 = vld [vmem:[#allocation3 + $0x58] sm:$0xff]
        %v2183 = vld [vmem:[#allocation3 + $0x60] sm:$0xff]
        %v2184 = vld [vmem:[#allocation3 + $0x68] sm:$0xff]
        %v2185 = vld [vmem:[#allocation3 + $0x70] sm:$0xff]
        %v2186 = vld [vmem:[#allocation3 + $0x78] sm:$0xff]
        %v2187 = vld [vmem:[#allocation3 + $0x80] sm:$0xff]
        %v2188 = vld [vmem:[#allocation3 + $0x88] sm:$0xff]
        %v2189 = vld [vmem:[#allocation3 + $0x90] sm:$0xff]
        %v2190 = vld [vmem:[#allocation3 + $0x98] sm:$0xff]
        %v2191 = vld [vmem:[#allocation3 + $0xa0] sm:$0xff]
        %v2192 = vld [vmem:[#allocation3 + $0xa8] sm:$0xff]
        %v2193 = vld [vmem:[#allocation3 + $0xb0] sm:$0xff]
        %v2194 = vld [vmem:[#allocation3 + $0xb8] sm:$0xff]
        %v2195 = vld [vmem:[#allocation3 + $0xc0] sm:$0xff]
        %v2196 = vld [vmem:[#allocation3 + $0xc8] sm:$0xff]
        %v2197 = vld [vmem:[#allocation3 + $0xd0] sm:$0xff]
        %v2198 = vld [vmem:[#allocation3 + $0xd8] sm:$0xff]
        %v2199 = vld [vmem:[#allocation3 + $0xe0] sm:$0xff]
        %v2200 = vld [vmem:[#allocation3 + $0xe8] sm:$0xff]
        %v2201 = vld [vmem:[#allocation3 + $0xf0] sm:$0xff]
        %v2202 = vld [vmem:[#allocation3 + $0xf8] sm:$0xff]
        %v2203 = vld [vmem:[#allocation3 + $0x100] sm:$0xff]
        %v2204 = vld [vmem:[#allocation3 + $0x108] sm:$0xff]
        %v2205 = vld [vmem:[#allocation3 + $0x110] sm:$0xff]
        %v2206 = vld [vmem:[#allocation3 + $0x118] sm:$0xff]
        %v2207 = vadd.f32 %v2171, %v1993
        %v2208 = vadd.f32 %v2172, %v1998
        %v2209 = vadd.f32 %v2173, %v2003
        %v2210 = vadd.f32 %v2174, %v2008
        %v2211 = vadd.f32 %v2175, %v2013
        %v2212 = vadd.f32 %v2176, %v2018
        %v2213 = vadd.f32 %v2177, %v2023
        %v2214 = vadd.f32 %v2178, %v2028
        %v2215 = vadd.f32 %v2179, %v2033
        %v2216 = vadd.f32 %v2180, %v2038
        %v2217 = vadd.f32 %v2181, %v2043
        %v2218 = vadd.f32 %v2182, %v2048
        %v2219 = vadd.f32 %v2183, %v2053
        %v2220 = vadd.f32 %v2184, %v2058
        %v2221 = vadd.f32 %v2185, %v2063
        %v2222 = vadd.f32 %v2186, %v2068
        %v2223 = vadd.f32 %v2187, %v2073
        %v2224 = vadd.f32 %v2188, %v2078
        %v2225 = vadd.f32 %v2189, %v2083
        %v2226 = vadd.f32 %v2190, %v2088
        %v2227 = vadd.f32 %v2191, %v2093
        %v2228 = vadd.f32 %v2192, %v2098
        %v2229 = vadd.f32 %v2193, %v2103
        %v2230 = vadd.f32 %v2194, %v2108
        %v2231 = vadd.f32 %v2195, %v2113
        %v2232 = vadd.f32 %v2196, %v2118
        %v2233 = vadd.f32 %v2197, %v2123
        %v2234 = vadd.f32 %v2198, %v2128
        %v2235 = vadd.f32 %v2199, %v2133
        %v2236 = vadd.f32 %v2200, %v2138
        %v2237 = vadd.f32 %v2201, %v2143
        %v2238 = vadd.f32 %v2202, %v2148
        %v2239 = vadd.f32 %v2203, %v2153
        %v2240 = vadd.f32 %v2204, %v2158
        %v2241 = vadd.f32 %v2205, %v2163
        %v2242 = vadd.f32 %v2206, %v2168
        %2243 = vst [vmem:[#allocation3] sm:$0xff] %v2207
        %2244 = vst [vmem:[#allocation3 + $0x8] sm:$0xff] %v2208
        %2245 = vst [vmem:[#allocation3 + $0x10] sm:$0xff] %v2209
        %2246 = vst [vmem:[#allocation3 + $0x18] sm:$0xff] %v2210
        %2247 = vst [vmem:[#allocation3 + $0x20] sm:$0xff] %v2211
        %2248 = vst [vmem:[#allocation3 + $0x28] sm:$0xff] %v2212
        %2249 = vst [vmem:[#allocation3 + $0x30] sm:$0xff] %v2213
        %2250 = vst [vmem:[#allocation3 + $0x38] sm:$0xff] %v2214
        %2251 = vst [vmem:[#allocation3 + $0x40] sm:$0xff] %v2215
        %2252 = vst [vmem:[#allocation3 + $0x48] sm:$0xff] %v2216
        %2253 = vst [vmem:[#allocation3 + $0x50] sm:$0xff] %v2217
        %2254 = vst [vmem:[#allocation3 + $0x58] sm:$0xff] %v2218
        %2255 = vst [vmem:[#allocation3 + $0x60] sm:$0xff] %v2219
        %2256 = vst [vmem:[#allocation3 + $0x68] sm:$0xff] %v2220
        %2257 = vst [vmem:[#allocation3 + $0x70] sm:$0xff] %v2221
        %2258 = vst [vmem:[#allocation3 + $0x78] sm:$0xff] %v2222
        %2259 = vst [vmem:[#allocation3 + $0x80] sm:$0xff] %v2223
        %2260 = vst [vmem:[#allocation3 + $0x88] sm:$0xff] %v2224
        %2261 = vst [vmem:[#allocation3 + $0x90] sm:$0xff] %v2225
        %2262 = vst [vmem:[#allocation3 + $0x98] sm:$0xff] %v2226
        %2263 = vst [vmem:[#allocation3 + $0xa0] sm:$0xff] %v2227
        %2264 = vst [vmem:[#allocation3 + $0xa8] sm:$0xff] %v2228
        %2265 = vst [vmem:[#allocation3 + $0xb0] sm:$0xff] %v2229
        %2266 = vst [vmem:[#allocation3 + $0xb8] sm:$0xff] %v2230
        %2267 = vst [vmem:[#allocation3 + $0xc0] sm:$0xff] %v2231
        %2268 = vst [vmem:[#allocation3 + $0xc8] sm:$0xff] %v2232
        %2269 = vst [vmem:[#allocation3 + $0xd0] sm:$0xff] %v2233
        %2270 = vst [vmem:[#allocation3 + $0xd8] sm:$0xff] %v2234
        %2271 = vst [vmem:[#allocation3 + $0xe0] sm:$0xff] %v2235
        %2272 = vst [vmem:[#allocation3 + $0xe8] sm:$0xff] %v2236
        %2273 = vst [vmem:[#allocation3 + $0xf0] sm:$0xff] %v2237
        %2274 = vst [vmem:[#allocation3 + $0xf8] sm:$0xff] %v2238
        %2275 = vst [vmem:[#allocation3 + $0x100] sm:$0xff] %v2239
        %2276 = vst [vmem:[#allocation3 + $0x108] sm:$0xff] %v2240
        %2277 = vst [vmem:[#allocation3 + $0x110] sm:$0xff] %v2241
        %2278 = vst [vmem:[#allocation3 + $0x118] sm:$0xff] %v2242
        %v2279 = vld [vmem:[#allocation2 + $0x13] sm:$0xff]
        %v2280 = vld [vmem:[#allocation2 + $0x1b] sm:$0xff]
        %v2281 = vld [vmem:[#allocation2 + $0x23] sm:$0xff]
        %v2282 = vld [vmem:[#allocation2 + $0x2b] sm:$0xff]
        %v2283 = vld [vmem:[#allocation2 + $0x33] sm:$0xff]
        %v2284 = vld [vmem:[#allocation2 + $0x3b] sm:$0xff]
        %v2285 = vld [vmem:[#allocation2 + $0x43] sm:$0xff]
        %v2286 = vld [vmem:[#allocation2 + $0x4b] sm:$0xff]
        %v2287 = vld [vmem:[#allocation2 + $0x53] sm:$0xff]
        %v2288 = vld [vmem:[#allocation2 + $0x5b] sm:$0xff]
        %v2289 = vld [vmem:[#allocation2 + $0x63] sm:$0xff]
        %v2290 = vld [vmem:[#allocation2 + $0x6b] sm:$0xff]
        %v2291 = vld [vmem:[#allocation2 + $0x73] sm:$0xff]
        %v2292 = vld [vmem:[#allocation2 + $0x7b] sm:$0xff]
        %v2293 = vld [vmem:[#allocation2 + $0x83] sm:$0xff]
        %v2294 = vld [vmem:[#allocation2 + $0x8b] sm:$0xff]
        %v2295 = vld [vmem:[#allocation2 + $0x93] sm:$0xff]
        %v2296 = vld [vmem:[#allocation2 + $0x9b] sm:$0xff]
        %v2297 = vld [vmem:[#allocation2 + $0xa3] sm:$0xff]
        %v2298 = vld [vmem:[#allocation2 + $0xab] sm:$0xff]
        %v2299 = vld [vmem:[#allocation2 + $0xb3] sm:$0xff]
        %v2300 = vld [vmem:[#allocation2 + $0xbb] sm:$0xff]
        %v2301 = vld [vmem:[#allocation2 + $0xc3] sm:$0xff]
        %v2302 = vld [vmem:[#allocation2 + $0xcb] sm:$0xff]
        %v2303 = vld [vmem:[#allocation2 + $0xd3] sm:$0xff]
        %v2304 = vld [vmem:[#allocation2 + $0xdb] sm:$0xff]
        %v2305 = vld [vmem:[#allocation2 + $0xe3] sm:$0xff]
        %v2306 = vld [vmem:[#allocation2 + $0xeb] sm:$0xff]
        %v2307 = vld [vmem:[#allocation2 + $0xf3] sm:$0xff]
        %v2308 = vld [vmem:[#allocation2 + $0xfb] sm:$0xff]
        %v2309 = vld [vmem:[#allocation2 + $0x103] sm:$0xff]
        %v2310 = vld [vmem:[#allocation2 + $0x10b] sm:$0xff]
        %v2311 = vld [vmem:[#allocation2 + $0x113] sm:$0xff]
        %v2312 = vld [vmem:[#allocation2 + $0x11b] sm:$0xff]
        %v2313 = vld [vmem:[#allocation2 + $0x123] sm:$0xff]
        %v2314 = vld [vmem:[#allocation2 + $0x12b] sm:$0xff]
        %s2315 = scalar_lea.vmem %s2, 32
        %v2316 = vld [vmem:[%s2315] sm:$0xff]
        %v2318 = vsel %vm313, %v2279, 0
        %v2321 = vsel %vm313, %v2280, 0
        %v2324 = vsel %vm313, %v2281, 0
        %v2327 = vsel %vm313, %v2282, 0
        %v2330 = vsel %vm313, %v2283, 0
        %v2333 = vsel %vm313, %v2284, 0
        %v2336 = vsel %vm313, %v2285, 0
        %v2339 = vsel %vm313, %v2286, 0
        %v2342 = vsel %vm313, %v2287, 0
        %v2345 = vsel %vm313, %v2288, 0
        %v2348 = vsel %vm313, %v2289, 0
        %v2351 = vsel %vm313, %v2290, 0
        %v2354 = vsel %vm313, %v2291, 0
        %v2357 = vsel %vm313, %v2292, 0
        %v2360 = vsel %vm313, %v2293, 0
        %v2363 = vsel %vm313, %v2294, 0
        %v2366 = vsel %vm313, %v2295, 0
        %v2369 = vsel %vm313, %v2296, 0
        %v2372 = vsel %vm313, %v2297, 0
        %v2375 = vsel %vm313, %v2298, 0
        %v2378 = vsel %vm313, %v2299, 0
        %v2381 = vsel %vm313, %v2300, 0
        %v2384 = vsel %vm313, %v2301, 0
        %v2387 = vsel %vm313, %v2302, 0
        %v2390 = vsel %vm313, %v2303, 0
        %v2393 = vsel %vm313, %v2304, 0
        %v2396 = vsel %vm313, %v2305, 0
        %v2399 = vsel %vm313, %v2306, 0
        %v2402 = vsel %vm313, %v2307, 0
        %v2405 = vsel %vm313, %v2308, 0
        %v2408 = vsel %vm313, %v2309, 0
        %v2411 = vsel %vm313, %v2310, 0
        %v2414 = vsel %vm313, %v2311, 0
        %v2417 = vsel %vm313, %v2312, 0
        %v2420 = vsel %vm313, %v2313, 0
        %v2423 = vsel %vm313, %v2314, 0
        %2425 = vmatprep.subr.mxu0 0.0
        %2426 = vmatpush1.msra.mxu0 %v2316
        %2427 = vmatprep.subr.mxu0 0.0
        %2428 = vmatpush1.msra.mxu0 0.0
        %2429 = vmatprep.subr.mxu0 0.0
        %2430 = vmatpush1.msra.mxu0 0.0
        %2431 = vmatprep.subr.mxu0 0.0
        %2432 = vmatpush1.msra.mxu0 0.0
        %2433 = vmatprep.subr.mxu0 0.0
        %2434 = vmatpush1.msra.mxu0 0.0
        %2435 = vmatprep.subr.mxu0 0.0
        %2436 = vmatpush1.msra.mxu0 0.0
        %2437 = vmatprep.subr.mxu0 0.0
        %2438 = vmatpush1.msra.mxu0 0.0
        %2439 = vmatprep.subr.mxu0 0.0
        %2440 = vmatpush1.msra.mxu0 0.0
        %2441 = vmatprep.subr.mxu0 0.0
        %2442 = vmatpush1.msra.mxu0 0.0
        %2443 = vmatprep.subr.mxu0 0.0
        %2444 = vmatpush1.msra.mxu0 0.0
        %2445 = vmatprep.subr.mxu0 0.0
        %2446 = vmatpush1.msra.mxu0 0.0
        %2447 = vmatprep.subr.mxu0 0.0
        %2448 = vmatpush1.msra.mxu0 0.0
        %2449 = vmatprep.subr.mxu0 0.0
        %2450 = vmatpush1.msra.mxu0 0.0
        %2451 = vmatprep.subr.mxu0 0.0
        %2452 = vmatpush1.msra.mxu0 0.0
        %2453 = vmatprep.subr.mxu0 0.0
        %2454 = vmatpush1.msra.mxu0 0.0
        %2455 = vmatprep.subr.mxu0 0.0
        %2456 = vmatpush1.msra.mxu0 0.0
        %2457 = vmatprep.subr.mxu0 0.0
        %2458 = vmatpush1.msra.mxu0 0.0
        %2459 = vmatprep.subr.mxu0 0.0
        %2460 = vmatpush1.msra.mxu0 0.0
        %2461 = vmatprep.subr.mxu0 0.0
        %2462 = vmatpush1.msra.mxu0 0.0
        %2463 = vmatprep.subr.mxu0 0.0
        %2464 = vmatpush1.msra.mxu0 0.0
        %2465 = vmatprep.subr.mxu0 0.0
        %2466 = vmatpush1.msra.mxu0 0.0
        %2467 = vmatprep.subr.mxu0 0.0
        %2468 = vmatpush1.msra.mxu0 0.0
        %2469 = vmatprep.subr.mxu0 0.0
        %2470 = vmatpush1.msra.mxu0 0.0
        %2471 = vmatprep.subr.mxu0 0.0
        %2472 = vmatpush1.msra.mxu0 0.0
        %2473 = vmatprep.subr.mxu0 0.0
        %2474 = vmatpush1.msra.mxu0 0.0
        %2475 = vmatprep.subr.mxu0 0.0
        %2476 = vmatpush1.msra.mxu0 0.0
        %2477 = vmatprep.subr.mxu0 0.0
        %2478 = vmatpush1.msra.mxu0 0.0
        %2479 = vmatprep.subr.mxu0 0.0
        %2480 = vmatpush1.msra.mxu0 0.0
        %2481 = vmatprep.subr.mxu0 0.0
        %2482 = vmatpush1.msra.mxu0 0.0
        %2483 = vmatprep.subr.mxu0 0.0
        %2484 = vmatpush1.msra.mxu0 0.0
        %2485 = vmatprep.subr.mxu0 0.0
        %2486 = vmatpush1.msra.mxu0 0.0
        %2487 = vmatprep.subr.mxu0 0.0
        %2488 = vmatpush1.msra.mxu0 0.0
        %2489 = vmatprep.mubr.f32.mxu0 0.0
        %2490 = vmatmul.mubr.f32.gmra.mrb[0].mxu0 %v2318
        %v2491 = vpop.f32.mrb[0].mxu0
        %v2492 = vadd.f32 0.0, %v2491
        %v2493 = vpop.f32.mrb[0].mxu0
        %2494 = vmatprep.mubr.f32.mxu0 0.0
        %2495 = vmatmul.mubr.f32.gmra.mrb[0].mxu0 %v2321
        %v2496 = vpop.f32.mrb[0].mxu0
        %v2497 = vadd.f32 0.0, %v2496
        %v2498 = vpop.f32.mrb[0].mxu0
        %2499 = vmatprep.mubr.f32.mxu0 0.0
        %2500 = vmatmul.mubr.f32.gmra.mrb[0].mxu0 %v2324
        %v2501 = vpop.f32.mrb[0].mxu0
        %v2502 = vadd.f32 0.0, %v2501
        %v2503 = vpop.f32.mrb[0].mxu0
        %2504 = vmatprep.mubr.f32.mxu0 0.0
        %2505 = vmatmul.mubr.f32.gmra.mrb[0].mxu0 %v2327
        %v2506 = vpop.f32.mrb[0].mxu0
        %v2507 = vadd.f32 0.0, %v2506
        %v2508 = vpop.f32.mrb[0].mxu0
        %2509 = vmatprep.mubr.f32.mxu0 0.0
        %2510 = vmatmul.mubr.f32.gmra.mrb[0].mxu0 %v2330
        %v2511 = vpop.f32.mrb[0].mxu0
        %v2512 = vadd.f32 0.0, %v2511
        %v2513 = vpop.f32.mrb[0].mxu0
        %2514 = vmatprep.mubr.f32.mxu0 0.0
        %2515 = vmatmul.mubr.f32.gmra.mrb[0].mxu0 %v2333
        %v2516 = vpop.f32.mrb[0].mxu0
        %v2517 = vadd.f32 0.0, %v2516
        %v2518 = vpop.f32.mrb[0].mxu0
        %2519 = vmatprep.mubr.f32.mxu0 0.0
        %2520 = vmatmul.mubr.f32.gmra.mrb[0].mxu0 %v2336
        %v2521 = vpop.f32.mrb[0].mxu0
        %v2522 = vadd.f32 0.0, %v2521
        %v2523 = vpop.f32.mrb[0].mxu0
        %2524 = vmatprep.mubr.f32.mxu0 0.0
        %2525 = vmatmul.mubr.f32.gmra.mrb[0].mxu0 %v2339
        %v2526 = vpop.f32.mrb[0].mxu0
        %v2527 = vadd.f32 0.0, %v2526
        %v2528 = vpop.f32.mrb[0].mxu0
        %2529 = vmatprep.mubr.f32.mxu0 0.0
        %2530 = vmatmul.mubr.f32.gmra.mrb[0].mxu0 %v2342
        %v2531 = vpop.f32.mrb[0].mxu0
        %v2532 = vadd.f32 0.0, %v2531
        %v2533 = vpop.f32.mrb[0].mxu0
        %2534 = vmatprep.mubr.f32.mxu0 0.0
        %2535 = vmatmul.mubr.f32.gmra.mrb[0].mxu0 %v2345
        %v2536 = vpop.f32.mrb[0].mxu0
        %v2537 = vadd.f32 0.0, %v2536
        %v2538 = vpop.f32.mrb[0].mxu0
        %2539 = vmatprep.mubr.f32.mxu0 0.0
        %2540 = vmatmul.mubr.f32.gmra.mrb[0].mxu0 %v2348
        %v2541 = vpop.f32.mrb[0].mxu0
        %v2542 = vadd.f32 0.0, %v2541
        %v2543 = vpop.f32.mrb[0].mxu0
        %2544 = vmatprep.mubr.f32.mxu0 0.0
        %2545 = vmatmul.mubr.f32.gmra.mrb[0].mxu0 %v2351
        %v2546 = vpop.f32.mrb[0].mxu0
        %v2547 = vadd.f32 0.0, %v2546
        %v2548 = vpop.f32.mrb[0].mxu0
        %2549 = vmatprep.mubr.f32.mxu0 0.0
        %2550 = vmatmul.mubr.f32.gmra.mrb[0].mxu0 %v2354
        %v2551 = vpop.f32.mrb[0].mxu0
        %v2552 = vadd.f32 0.0, %v2551
        %v2553 = vpop.f32.mrb[0].mxu0
        %2554 = vmatprep.mubr.f32.mxu0 0.0
        %2555 = vmatmul.mubr.f32.gmra.mrb[0].mxu0 %v2357
        %v2556 = vpop.f32.mrb[0].mxu0
        %v2557 = vadd.f32 0.0, %v2556
        %v2558 = vpop.f32.mrb[0].mxu0
        %2559 = vmatprep.mubr.f32.mxu0 0.0
        %2560 = vmatmul.mubr.f32.gmra.mrb[0].mxu0 %v2360
        %v2561 = vpop.f32.mrb[0].mxu0
        %v2562 = vadd.f32 0.0, %v2561
        %v2563 = vpop.f32.mrb[0].mxu0
        %2564 = vmatprep.mubr.f32.mxu0 0.0
        %2565 = vmatmul.mubr.f32.gmra.mrb[0].mxu0 %v2363
        %v2566 = vpop.f32.mrb[0].mxu0
        %v2567 = vadd.f32 0.0, %v2566
        %v2568 = vpop.f32.mrb[0].mxu0
        %2569 = vmatprep.mubr.f32.mxu0 0.0
        %2570 = vmatmul.mubr.f32.gmra.mrb[0].mxu0 %v2366
        %v2571 = vpop.f32.mrb[0].mxu0
        %v2572 = vadd.f32 0.0, %v2571
        %v2573 = vpop.f32.mrb[0].mxu0
        %2574 = vmatprep.mubr.f32.mxu0 0.0
        %2575 = vmatmul.mubr.f32.gmra.mrb[0].mxu0 %v2369
        %v2576 = vpop.f32.mrb[0].mxu0
        %v2577 = vadd.f32 0.0, %v2576
        %v2578 = vpop.f32.mrb[0].mxu0
        %2579 = vmatprep.mubr.f32.mxu0 0.0
        %2580 = vmatmul.mubr.f32.gmra.mrb[0].mxu0 %v2372
        %v2581 = vpop.f32.mrb[0].mxu0
        %v2582 = vadd.f32 0.0, %v2581
        %v2583 = vpop.f32.mrb[0].mxu0
        %2584 = vmatprep.mubr.f32.mxu0 0.0
        %2585 = vmatmul.mubr.f32.gmra.mrb[0].mxu0 %v2375
        %v2586 = vpop.f32.mrb[0].mxu0
        %v2587 = vadd.f32 0.0, %v2586
        %v2588 = vpop.f32.mrb[0].mxu0
        %2589 = vmatprep.mubr.f32.mxu0 0.0
        %2590 = vmatmul.mubr.f32.gmra.mrb[0].mxu0 %v2378
        %v2591 = vpop.f32.mrb[0].mxu0
        %v2592 = vadd.f32 0.0, %v2591
        %v2593 = vpop.f32.mrb[0].mxu0
        %2594 = vmatprep.mubr.f32.mxu0 0.0
        %2595 = vmatmul.mubr.f32.gmra.mrb[0].mxu0 %v2381
        %v2596 = vpop.f32.mrb[0].mxu0
        %v2597 = vadd.f32 0.0, %v2596
        %v2598 = vpop.f32.mrb[0].mxu0
        %2599 = vmatprep.mubr.f32.mxu0 0.0
        %2600 = vmatmul.mubr.f32.gmra.mrb[0].mxu0 %v2384
        %v2601 = vpop.f32.mrb[0].mxu0
        %v2602 = vadd.f32 0.0, %v2601
        %v2603 = vpop.f32.mrb[0].mxu0
        %2604 = vmatprep.mubr.f32.mxu0 0.0
        %2605 = vmatmul.mubr.f32.gmra.mrb[0].mxu0 %v2387
        %v2606 = vpop.f32.mrb[0].mxu0
        %v2607 = vadd.f32 0.0, %v2606
        %v2608 = vpop.f32.mrb[0].mxu0
        %2609 = vmatprep.mubr.f32.mxu0 0.0
        %2610 = vmatmul.mubr.f32.gmra.mrb[0].mxu0 %v2390
        %v2611 = vpop.f32.mrb[0].mxu0
        %v2612 = vadd.f32 0.0, %v2611
        %v2613 = vpop.f32.mrb[0].mxu0
        %2614 = vmatprep.mubr.f32.mxu0 0.0
        %2615 = vmatmul.mubr.f32.gmra.mrb[0].mxu0 %v2393
        %v2616 = vpop.f32.mrb[0].mxu0
        %v2617 = vadd.f32 0.0, %v2616
        %v2618 = vpop.f32.mrb[0].mxu0
        %2619 = vmatprep.mubr.f32.mxu0 0.0
        %2620 = vmatmul.mubr.f32.gmra.mrb[0].mxu0 %v2396
        %v2621 = vpop.f32.mrb[0].mxu0
        %v2622 = vadd.f32 0.0, %v2621
        %v2623 = vpop.f32.mrb[0].mxu0
        %2624 = vmatprep.mubr.f32.mxu0 0.0
        %2625 = vmatmul.mubr.f32.gmra.mrb[0].mxu0 %v2399
        %v2626 = vpop.f32.mrb[0].mxu0
        %v2627 = vadd.f32 0.0, %v2626
        %v2628 = vpop.f32.mrb[0].mxu0
        %2629 = vmatprep.mubr.f32.mxu0 0.0
        %2630 = vmatmul.mubr.f32.gmra.mrb[0].mxu0 %v2402
        %v2631 = vpop.f32.mrb[0].mxu0
        %v2632 = vadd.f32 0.0, %v2631
        %v2633 = vpop.f32.mrb[0].mxu0
        %2634 = vmatprep.mubr.f32.mxu0 0.0
        %2635 = vmatmul.mubr.f32.gmra.mrb[0].mxu0 %v2405
        %v2636 = vpop.f32.mrb[0].mxu0
        %v2637 = vadd.f32 0.0, %v2636
        %v2638 = vpop.f32.mrb[0].mxu0
        %2639 = vmatprep.mubr.f32.mxu0 0.0
        %2640 = vmatmul.mubr.f32.gmra.mrb[0].mxu0 %v2408
        %v2641 = vpop.f32.mrb[0].mxu0
        %v2642 = vadd.f32 0.0, %v2641
        %v2643 = vpop.f32.mrb[0].mxu0
        %2644 = vmatprep.mubr.f32.mxu0 0.0
        %2645 = vmatmul.mubr.f32.gmra.mrb[0].mxu0 %v2411
        %v2646 = vpop.f32.mrb[0].mxu0
        %v2647 = vadd.f32 0.0, %v2646
        %v2648 = vpop.f32.mrb[0].mxu0
        %2649 = vmatprep.mubr.f32.mxu0 0.0
        %2650 = vmatmul.mubr.f32.gmra.mrb[0].mxu0 %v2414
        %v2651 = vpop.f32.mrb[0].mxu0
        %v2652 = vadd.f32 0.0, %v2651
        %v2653 = vpop.f32.mrb[0].mxu0
        %2654 = vmatprep.mubr.f32.mxu0 0.0
        %2655 = vmatmul.mubr.f32.gmra.mrb[0].mxu0 %v2417
        %v2656 = vpop.f32.mrb[0].mxu0
        %v2657 = vadd.f32 0.0, %v2656
        %v2658 = vpop.f32.mrb[0].mxu0
        %2659 = vmatprep.mubr.f32.mxu0 0.0
        %2660 = vmatmul.mubr.f32.gmra.mrb[0].mxu0 %v2420
        %v2661 = vpop.f32.mrb[0].mxu0
        %v2662 = vadd.f32 0.0, %v2661
        %v2663 = vpop.f32.mrb[0].mxu0
        %2664 = vmatprep.mubr.f32.mxu0 0.0
        %2665 = vmatmul.mubr.f32.gmra.mrb[0].mxu0 %v2423
        %v2666 = vpop.f32.mrb[0].mxu0
        %v2667 = vadd.f32 0.0, %v2666
        %v2668 = vpop.f32.mrb[0].mxu0
        %2669 = vdwg.mxu0
        %v2670 = vld [vmem:[#allocation3] sm:$0xff]
        %v2671 = vld [vmem:[#allocation3 + $0x8] sm:$0xff]
        %v2672 = vld [vmem:[#allocation3 + $0x10] sm:$0xff]
        %v2673 = vld [vmem:[#allocation3 + $0x18] sm:$0xff]
        %v2674 = vld [vmem:[#allocation3 + $0x20] sm:$0xff]
        %v2675 = vld [vmem:[#allocation3 + $0x28] sm:$0xff]
        %v2676 = vld [vmem:[#allocation3 + $0x30] sm:$0xff]
        %v2677 = vld [vmem:[#allocation3 + $0x38] sm:$0xff]
        %v2678 = vld [vmem:[#allocation3 + $0x40] sm:$0xff]
        %v2679 = vld [vmem:[#allocation3 + $0x48] sm:$0xff]
        %v2680 = vld [vmem:[#allocation3 + $0x50] sm:$0xff]
        %v2681 = vld [vmem:[#allocation3 + $0x58] sm:$0xff]
        %v2682 = vld [vmem:[#allocation3 + $0x60] sm:$0xff]
        %v2683 = vld [vmem:[#allocation3 + $0x68] sm:$0xff]
        %v2684 = vld [vmem:[#allocation3 + $0x70] sm:$0xff]
        %v2685 = vld [vmem:[#allocation3 + $0x78] sm:$0xff]
        %v2686 = vld [vmem:[#allocation3 + $0x80] sm:$0xff]
        %v2687 = vld [vmem:[#allocation3 + $0x88] sm:$0xff]
        %v2688 = vld [vmem:[#allocation3 + $0x90] sm:$0xff]
        %v2689 = vld [vmem:[#allocation3 + $0x98] sm:$0xff]
        %v2690 = vld [vmem:[#allocation3 + $0xa0] sm:$0xff]
        %v2691 = vld [vmem:[#allocation3 + $0xa8] sm:$0xff]
        %v2692 = vld [vmem:[#allocation3 + $0xb0] sm:$0xff]
        %v2693 = vld [vmem:[#allocation3 + $0xb8] sm:$0xff]
        %v2694 = vld [vmem:[#allocation3 + $0xc0] sm:$0xff]
        %v2695 = vld [vmem:[#allocation3 + $0xc8] sm:$0xff]
        %v2696 = vld [vmem:[#allocation3 + $0xd0] sm:$0xff]
        %v2697 = vld [vmem:[#allocation3 + $0xd8] sm:$0xff]
        %v2698 = vld [vmem:[#allocation3 + $0xe0] sm:$0xff]
        %v2699 = vld [vmem:[#allocation3 + $0xe8] sm:$0xff]
        %v2700 = vld [vmem:[#allocation3 + $0xf0] sm:$0xff]
        %v2701 = vld [vmem:[#allocation3 + $0xf8] sm:$0xff]
        %v2702 = vld [vmem:[#allocation3 + $0x100] sm:$0xff]
        %v2703 = vld [vmem:[#allocation3 + $0x108] sm:$0xff]
        %v2704 = vld [vmem:[#allocation3 + $0x110] sm:$0xff]
        %v2705 = vld [vmem:[#allocation3 + $0x118] sm:$0xff]
        %v2706 = vadd.f32 %v2670, %v2492
        %v2707 = vadd.f32 %v2671, %v2497
        %v2708 = vadd.f32 %v2672, %v2502
        %v2709 = vadd.f32 %v2673, %v2507
        %v2710 = vadd.f32 %v2674, %v2512
        %v2711 = vadd.f32 %v2675, %v2517
        %v2712 = vadd.f32 %v2676, %v2522
        %v2713 = vadd.f32 %v2677, %v2527
        %v2714 = vadd.f32 %v2678, %v2532
        %v2715 = vadd.f32 %v2679, %v2537
        %v2716 = vadd.f32 %v2680, %v2542
        %v2717 = vadd.f32 %v2681, %v2547
        %v2718 = vadd.f32 %v2682, %v2552
        %v2719 = vadd.f32 %v2683, %v2557
        %v2720 = vadd.f32 %v2684, %v2562
        %v2721 = vadd.f32 %v2685, %v2567
        %v2722 = vadd.f32 %v2686, %v2572
        %v2723 = vadd.f32 %v2687, %v2577
        %v2724 = vadd.f32 %v2688, %v2582
        %v2725 = vadd.f32 %v2689, %v2587
        %v2726 = vadd.f32 %v2690, %v2592
        %v2727 = vadd.f32 %v2691, %v2597
        %v2728 = vadd.f32 %v2692, %v2602
        %v2729 = vadd.f32 %v2693, %v2607
        %v2730 = vadd.f32 %v2694, %v2612
        %v2731 = vadd.f32 %v2695, %v2617
        %v2732 = vadd.f32 %v2696, %v2622
        %v2733 = vadd.f32 %v2697, %v2627
        %v2734 = vadd.f32 %v2698, %v2632
        %v2735 = vadd.f32 %v2699, %v2637
        %v2736 = vadd.f32 %v2700, %v2642
        %v2737 = vadd.f32 %v2701, %v2647
        %v2738 = vadd.f32 %v2702, %v2652
        %v2739 = vadd.f32 %v2703, %v2657
        %v2740 = vadd.f32 %v2704, %v2662
        %v2741 = vadd.f32 %v2705, %v2667
        %2742 = vst [vmem:[#allocation3] sm:$0xff] %v2706
        %2743 = vst [vmem:[#allocation3 + $0x8] sm:$0xff] %v2707
        %2744 = vst [vmem:[#allocation3 + $0x10] sm:$0xff] %v2708
        %2745 = vst [vmem:[#allocation3 + $0x18] sm:$0xff] %v2709
        %2746 = vst [vmem:[#allocation3 + $0x20] sm:$0xff] %v2710
        %2747 = vst [vmem:[#allocation3 + $0x28] sm:$0xff] %v2711
        %2748 = vst [vmem:[#allocation3 + $0x30] sm:$0xff] %v2712
        %2749 = vst [vmem:[#allocation3 + $0x38] sm:$0xff] %v2713
        %2750 = vst [vmem:[#allocation3 + $0x40] sm:$0xff] %v2714
        %2751 = vst [vmem:[#allocation3 + $0x48] sm:$0xff] %v2715
        %2752 = vst [vmem:[#allocation3 + $0x50] sm:$0xff] %v2716
        %2753 = vst [vmem:[#allocation3 + $0x58] sm:$0xff] %v2717
        %2754 = vst [vmem:[#allocation3 + $0x60] sm:$0xff] %v2718
        %2755 = vst [vmem:[#allocation3 + $0x68] sm:$0xff] %v2719
        %2756 = vst [vmem:[#allocation3 + $0x70] sm:$0xff] %v2720
        %2757 = vst [vmem:[#allocation3 + $0x78] sm:$0xff] %v2721
        %2758 = vst [vmem:[#allocation3 + $0x80] sm:$0xff] %v2722
        %2759 = vst [vmem:[#allocation3 + $0x88] sm:$0xff] %v2723
        %2760 = vst [vmem:[#allocation3 + $0x90] sm:$0xff] %v2724
        %2761 = vst [vmem:[#allocation3 + $0x98] sm:$0xff] %v2725
        %2762 = vst [vmem:[#allocation3 + $0xa0] sm:$0xff] %v2726
        %2763 = vst [vmem:[#allocation3 + $0xa8] sm:$0xff] %v2727
        %2764 = vst [vmem:[#allocation3 + $0xb0] sm:$0xff] %v2728
        %2765 = vst [vmem:[#allocation3 + $0xb8] sm:$0xff] %v2729
        %2766 = vst [vmem:[#allocation3 + $0xc0] sm:$0xff] %v2730
        %2767 = vst [vmem:[#allocation3 + $0xc8] sm:$0xff] %v2731
        %2768 = vst [vmem:[#allocation3 + $0xd0] sm:$0xff] %v2732
        %2769 = vst [vmem:[#allocation3 + $0xd8] sm:$0xff] %v2733
        %2770 = vst [vmem:[#allocation3 + $0xe0] sm:$0xff] %v2734
        %2771 = vst [vmem:[#allocation3 + $0xe8] sm:$0xff] %v2735
        %2772 = vst [vmem:[#allocation3 + $0xf0] sm:$0xff] %v2736
        %2773 = vst [vmem:[#allocation3 + $0xf8] sm:$0xff] %v2737
        %2774 = vst [vmem:[#allocation3 + $0x100] sm:$0xff] %v2738
        %2775 = vst [vmem:[#allocation3 + $0x108] sm:$0xff] %v2739
        %2776 = vst [vmem:[#allocation3 + $0x110] sm:$0xff] %v2740
        %2777 = vst [vmem:[#allocation3 + $0x118] sm:$0xff] %v2741
        %v2778 = vld [vmem:[#allocation2 + $0x14] sm:$0xff]
        %v2779 = vld [vmem:[#allocation2 + $0x1c] sm:$0xff]
        %v2780 = vld [vmem:[#allocation2 + $0x24] sm:$0xff]
        %v2781 = vld [vmem:[#allocation2 + $0x2c] sm:$0xff]
        %v2782 = vld [vmem:[#allocation2 + $0x34] sm:$0xff]
        %v2783 = vld [vmem:[#allocation2 + $0x3c] sm:$0xff]
        %v2784 = vld [vmem:[#allocation2 + $0x44] sm:$0xff]
        %v2785 = vld [vmem:[#allocation2 + $0x4c] sm:$0xff]
        %v2786 = vld [vmem:[#allocation2 + $0x54] sm:$0xff]
        %v2787 = vld [vmem:[#allocation2 + $0x5c] sm:$0xff]
        %v2788 = vld [vmem:[#allocation2 + $0x64] sm:$0xff]
        %v2789 = vld [vmem:[#allocation2 + $0x6c] sm:$0xff]
        %v2790 = vld [vmem:[#allocation2 + $0x74] sm:$0xff]
        %v2791 = vld [vmem:[#allocation2 + $0x7c] sm:$0xff]
        %v2792 = vld [vmem:[#allocation2 + $0x84] sm:$0xff]
        %v2793 = vld [vmem:[#allocation2 + $0x8c] sm:$0xff]
        %v2794 = vld [vmem:[#allocation2 + $0x94] sm:$0xff]
        %v2795 = vld [vmem:[#allocation2 + $0x9c] sm:$0xff]
        %v2796 = vld [vmem:[#allocation2 + $0xa4] sm:$0xff]
        %v2797 = vld [vmem:[#allocation2 + $0xac] sm:$0xff]
        %v2798 = vld [vmem:[#allocation2 + $0xb4] sm:$0xff]
        %v2799 = vld [vmem:[#allocation2 + $0xbc] sm:$0xff]
        %v2800 = vld [vmem:[#allocation2 + $0xc4] sm:$0xff]
        %v2801 = vld [vmem:[#allocation2 + $0xcc] sm:$0xff]
        %v2802 = vld [vmem:[#allocation2 + $0xd4] sm:$0xff]
        %v2803 = vld [vmem:[#allocation2 + $0xdc] sm:$0xff]
        %v2804 = vld [vmem:[#allocation2 + $0xe4] sm:$0xff]
        %v2805 = vld [vmem:[#allocation2 + $0xec] sm:$0xff]
        %v2806 = vld [vmem:[#allocation2 + $0xf4] sm:$0xff]
        %v2807 = vld [vmem:[#allocation2 + $0xfc] sm:$0xff]
        %v2808 = vld [vmem:[#allocation2 + $0x104] sm:$0xff]
        %v2809 = vld [vmem:[#allocation2 + $0x10c] sm:$0xff]
        %v2810 = vld [vmem:[#allocation2 + $0x114] sm:$0xff]
        %v2811 = vld [vmem:[#allocation2 + $0x11c] sm:$0xff]
        %v2812 = vld [vmem:[#allocation2 + $0x124] sm:$0xff]
        %v2813 = vld [vmem:[#allocation2 + $0x12c] sm:$0xff]
        %s2814 = scalar_lea.vmem %s2, 40
        %v2815 = vld [vmem:[%s2814] sm:$0xff]
        %v2817 = vsel %vm313, %v2778, 0
        %v2820 = vsel %vm313, %v2779, 0
        %v2823 = vsel %vm313, %v2780, 0
        %v2826 = vsel %vm313, %v2781, 0
        %v2829 = vsel %vm313, %v2782, 0
        %v2832 = vsel %vm313, %v2783, 0
        %v2835 = vsel %vm313, %v2784, 0
        %v2838 = vsel %vm313, %v2785, 0
        %v2841 = vsel %vm313, %v2786, 0
        %v2844 = vsel %vm313, %v2787, 0
        %v2847 = vsel %vm313, %v2788, 0
        %v2850 = vsel %vm313, %v2789, 0
        %v2853 = vsel %vm313, %v2790, 0
        %v2856 = vsel %vm313, %v2791, 0
        %v2859 = vsel %vm313, %v2792, 0
        %v2862 = vsel %vm313, %v2793, 0
        %v2865 = vsel %vm313, %v2794, 0
        %v2868 = vsel %vm313, %v2795, 0
        %v2871 = vsel %vm313, %v2796, 0
        %v2874 = vsel %vm313, %v2797, 0
        %v2877 = vsel %vm313, %v2798, 0
        %v2880 = vsel %vm313, %v2799, 0
        %v2883 = vsel %vm313, %v2800, 0
        %v2886 = vsel %vm313, %v2801, 0
        %v2889 = vsel %vm313, %v2802, 0
        %v2892 = vsel %vm313, %v2803, 0
        %v2895 = vsel %vm313, %v2804, 0
        %v2898 = vsel %vm313, %v2805, 0
        %v2901 = vsel %vm313, %v2806, 0
        %v2904 = vsel %vm313, %v2807, 0
        %v2907 = vsel %vm313, %v2808, 0
        %v2910 = vsel %vm313, %v2809, 0
        %v2913 = vsel %vm313, %v2810, 0
        %v2916 = vsel %vm313, %v2811, 0
        %v2919 = vsel %vm313, %v2812, 0
        %v2922 = vsel %vm313, %v2813, 0
        %2924 = vmatprep.subr.mxu0 0.0
        %2925 = vmatpush1.msra.mxu0 %v2815
        %2926 = vmatprep.subr.mxu0 0.0
        %2927 = vmatpush1.msra.mxu0 0.0
        %2928 = vmatprep.subr.mxu0 0.0
        %2929 = vmatpush1.msra.mxu0 0.0
        %2930 = vmatprep.subr.mxu0 0.0
        %2931 = vmatpush1.msra.mxu0 0.0
        %2932 = vmatprep.subr.mxu0 0.0
        %2933 = vmatpush1.msra.mxu0 0.0
        %2934 = vmatprep.subr.mxu0 0.0
        %2935 = vmatpush1.msra.mxu0 0.0
        %2936 = vmatprep.subr.mxu0 0.0
        %2937 = vmatpush1.msra.mxu0 0.0
        %2938 = vmatprep.subr.mxu0 0.0
        %2939 = vmatpush1.msra.mxu0 0.0
        %2940 = vmatprep.subr.mxu0 0.0
        %2941 = vmatpush1.msra.mxu0 0.0
        %2942 = vmatprep.subr.mxu0 0.0
        %2943 = vmatpush1.msra.mxu0 0.0
        %2944 = vmatprep.subr.mxu0 0.0
        %2945 = vmatpush1.msra.mxu0 0.0
        %2946 = vmatprep.subr.mxu0 0.0
        %2947 = vmatpush1.msra.mxu0 0.0
        %2948 = vmatprep.subr.mxu0 0.0
        %2949 = vmatpush1.msra.mxu0 0.0
        %2950 = vmatprep.subr.mxu0 0.0
        %2951 = vmatpush1.msra.mxu0 0.0
        %2952 = vmatprep.subr.mxu0 0.0
        %2953 = vmatpush1.msra.mxu0 0.0
        %2954 = vmatprep.subr.mxu0 0.0
        %2955 = vmatpush1.msra.mxu0 0.0
        %2956 = vmatprep.subr.mxu0 0.0
        %2957 = vmatpush1.msra.mxu0 0.0
        %2958 = vmatprep.subr.mxu0 0.0
        %2959 = vmatpush1.msra.mxu0 0.0
        %2960 = vmatprep.subr.mxu0 0.0
        %2961 = vmatpush1.msra.mxu0 0.0
        %2962 = vmatprep.subr.mxu0 0.0
        %2963 = vmatpush1.msra.mxu0 0.0
        %2964 = vmatprep.subr.mxu0 0.0
        %2965 = vmatpush1.msra.mxu0 0.0
        %2966 = vmatprep.subr.mxu0 0.0
        %2967 = vmatpush1.msra.mxu0 0.0
        %2968 = vmatprep.subr.mxu0 0.0
        %2969 = vmatpush1.msra.mxu0 0.0
        %2970 = vmatprep.subr.mxu0 0.0
        %2971 = vmatpush1.msra.mxu0 0.0
        %2972 = vmatprep.subr.mxu0 0.0
        %2973 = vmatpush1.msra.mxu0 0.0
        %2974 = vmatprep.subr.mxu0 0.0
        %2975 = vmatpush1.msra.mxu0 0.0
        %2976 = vmatprep.subr.mxu0 0.0
        %2977 = vmatpush1.msra.mxu0 0.0
        %2978 = vmatprep.subr.mxu0 0.0
        %2979 = vmatpush1.msra.mxu0 0.0
        %2980 = vmatprep.subr.mxu0 0.0
        %2981 = vmatpush1.msra.mxu0 0.0
        %2982 = vmatprep.subr.mxu0 0.0
        %2983 = vmatpush1.msra.mxu0 0.0
        %2984 = vmatprep.subr.mxu0 0.0
        %2985 = vmatpush1.msra.mxu0 0.0
        %2986 = vmatprep.subr.mxu0 0.0
        %2987 = vmatpush1.msra.mxu0 0.0
        %2988 = vmatprep.mubr.f32.mxu0 0.0
        %2989 = vmatmul.mubr.f32.gmra.mrb[0].mxu0 %v2817
        %v2990 = vpop.f32.mrb[0].mxu0
        %v2991 = vadd.f32 0.0, %v2990
        %v2992 = vpop.f32.mrb[0].mxu0
        %2993 = vmatprep.mubr.f32.mxu0 0.0
        %2994 = vmatmul.mubr.f32.gmra.mrb[0].mxu0 %v2820
        %v2995 = vpop.f32.mrb[0].mxu0
        %v2996 = vadd.f32 0.0, %v2995
        %v2997 = vpop.f32.mrb[0].mxu0
        %2998 = vmatprep.mubr.f32.mxu0 0.0
        %2999 = vmatmul.mubr.f32.gmra.mrb[0].mxu0 %v2823
        %v3000 = vpop.f32.mrb[0].mxu0
        %v3001 = vadd.f32 0.0, %v3000
        %v3002 = vpop.f32.mrb[0].mxu0
        %3003 = vmatprep.mubr.f32.mxu0 0.0
        %3004 = vmatmul.mubr.f32.gmra.mrb[0].mxu0 %v2826
        %v3005 = vpop.f32.mrb[0].mxu0
        %v3006 = vadd.f32 0.0, %v3005
        %v3007 = vpop.f32.mrb[0].mxu0
        %3008 = vmatprep.mubr.f32.mxu0 0.0
        %3009 = vmatmul.mubr.f32.gmra.mrb[0].mxu0 %v2829
        %v3010 = vpop.f32.mrb[0].mxu0
        %v3011 = vadd.f32 0.0, %v3010
        %v3012 = vpop.f32.mrb[0].mxu0
        %3013 = vmatprep.mubr.f32.mxu0 0.0
        %3014 = vmatmul.mubr.f32.gmra.mrb[0].mxu0 %v2832
        %v3015 = vpop.f32.mrb[0].mxu0
        %v3016 = vadd.f32 0.0, %v3015
        %v3017 = vpop.f32.mrb[0].mxu0
        %3018 = vmatprep.mubr.f32.mxu0 0.0
        %3019 = vmatmul.mubr.f32.gmra.mrb[0].mxu0 %v2835
        %v3020 = vpop.f32.mrb[0].mxu0
        %v3021 = vadd.f32 0.0, %v3020
        %v3022 = vpop.f32.mrb[0].mxu0
        %3023 = vmatprep.mubr.f32.mxu0 0.0
        %3024 = vmatmul.mubr.f32.gmra.mrb[0].mxu0 %v2838
        %v3025 = vpop.f32.mrb[0].mxu0
        %v3026 = vadd.f32 0.0, %v3025
        %v3027 = vpop.f32.mrb[0].mxu0
        %3028 = vmatprep.mubr.f32.mxu0 0.0
        %3029 = vmatmul.mubr.f32.gmra.mrb[0].mxu0 %v2841
        %v3030 = vpop.f32.mrb[0].mxu0
        %v3031 = vadd.f32 0.0, %v3030
        %v3032 = vpop.f32.mrb[0].mxu0
        %3033 = vmatprep.mubr.f32.mxu0 0.0
        %3034 = vmatmul.mubr.f32.gmra.mrb[0].mxu0 %v2844
        %v3035 = vpop.f32.mrb[0].mxu0
        %v3036 = vadd.f32 0.0, %v3035
        %v3037 = vpop.f32.mrb[0].mxu0
        %3038 = vmatprep.mubr.f32.mxu0 0.0
        %3039 = vmatmul.mubr.f32.gmra.mrb[0].mxu0 %v2847
        %v3040 = vpop.f32.mrb[0].mxu0
        %v3041 = vadd.f32 0.0, %v3040
        %v3042 = vpop.f32.mrb[0].mxu0
        %3043 = vmatprep.mubr.f32.mxu0 0.0
        %3044 = vmatmul.mubr.f32.gmra.mrb[0].mxu0 %v2850
        %v3045 = vpop.f32.mrb[0].mxu0
        %v3046 = vadd.f32 0.0, %v3045
        %v3047 = vpop.f32.mrb[0].mxu0
        %3048 = vmatprep.mubr.f32.mxu0 0.0
        %3049 = vmatmul.mubr.f32.gmra.mrb[0].mxu0 %v2853
        %v3050 = vpop.f32.mrb[0].mxu0
        %v3051 = vadd.f32 0.0, %v3050
        %v3052 = vpop.f32.mrb[0].mxu0
        %3053 = vmatprep.mubr.f32.mxu0 0.0
        %3054 = vmatmul.mubr.f32.gmra.mrb[0].mxu0 %v2856
        %v3055 = vpop.f32.mrb[0].mxu0
        %v3056 = vadd.f32 0.0, %v3055
        %v3057 = vpop.f32.mrb[0].mxu0
        %3058 = vmatprep.mubr.f32.mxu0 0.0
        %3059 = vmatmul.mubr.f32.gmra.mrb[0].mxu0 %v2859
        %v3060 = vpop.f32.mrb[0].mxu0
        %v3061 = vadd.f32 0.0, %v3060
        %v3062 = vpop.f32.mrb[0].mxu0
        %3063 = vmatprep.mubr.f32.mxu0 0.0
        %3064 = vmatmul.mubr.f32.gmra.mrb[0].mxu0 %v2862
        %v3065 = vpop.f32.mrb[0].mxu0
        %v3066 = vadd.f32 0.0, %v3065
        %v3067 = vpop.f32.mrb[0].mxu0
        %3068 = vmatprep.mubr.f32.mxu0 0.0
        %3069 = vmatmul.mubr.f32.gmra.mrb[0].mxu0 %v2865
        %v3070 = vpop.f32.mrb[0].mxu0
        %v3071 = vadd.f32 0.0, %v3070
        %v3072 = vpop.f32.mrb[0].mxu0
        %3073 = vmatprep.mubr.f32.mxu0 0.0
        %3074 = vmatmul.mubr.f32.gmra.mrb[0].mxu0 %v2868
        %v3075 = vpop.f32.mrb[0].mxu0
        %v3076 = vadd.f32 0.0, %v3075
        %v3077 = vpop.f32.mrb[0].mxu0
        %3078 = vmatprep.mubr.f32.mxu0 0.0
        %3079 = vmatmul.mubr.f32.gmra.mrb[0].mxu0 %v2871
        %v3080 = vpop.f32.mrb[0].mxu0
        %v3081 = vadd.f32 0.0, %v3080
        %v3082 = vpop.f32.mrb[0].mxu0
        %3083 = vmatprep.mubr.f32.mxu0 0.0
        %3084 = vmatmul.mubr.f32.gmra.mrb[0].mxu0 %v2874
        %v3085 = vpop.f32.mrb[0].mxu0
        %v3086 = vadd.f32 0.0, %v3085
        %v3087 = vpop.f32.mrb[0].mxu0
        %3088 = vmatprep.mubr.f32.mxu0 0.0
        %3089 = vmatmul.mubr.f32.gmra.mrb[0].mxu0 %v2877
        %v3090 = vpop.f32.mrb[0].mxu0
        %v3091 = vadd.f32 0.0, %v3090
        %v3092 = vpop.f32.mrb[0].mxu0
        %3093 = vmatprep.mubr.f32.mxu0 0.0
        %3094 = vmatmul.mubr.f32.gmra.mrb[0].mxu0 %v2880
        %v3095 = vpop.f32.mrb[0].mxu0
        %v3096 = vadd.f32 0.0, %v3095
        %v3097 = vpop.f32.mrb[0].mxu0
        %3098 = vmatprep.mubr.f32.mxu0 0.0
        %3099 = vmatmul.mubr.f32.gmra.mrb[0].mxu0 %v2883
        %v3100 = vpop.f32.mrb[0].mxu0
        %v3101 = vadd.f32 0.0, %v3100
        %v3102 = vpop.f32.mrb[0].mxu0
        %3103 = vmatprep.mubr.f32.mxu0 0.0
        %3104 = vmatmul.mubr.f32.gmra.mrb[0].mxu0 %v2886
        %v3105 = vpop.f32.mrb[0].mxu0
        %v3106 = vadd.f32 0.0, %v3105
        %v3107 = vpop.f32.mrb[0].mxu0
        %3108 = vmatprep.mubr.f32.mxu0 0.0
        %3109 = vmatmul.mubr.f32.gmra.mrb[0].mxu0 %v2889
        %v3110 = vpop.f32.mrb[0].mxu0
        %v3111 = vadd.f32 0.0, %v3110
        %v3112 = vpop.f32.mrb[0].mxu0
        %3113 = vmatprep.mubr.f32.mxu0 0.0
        %3114 = vmatmul.mubr.f32.gmra.mrb[0].mxu0 %v2892
        %v3115 = vpop.f32.mrb[0].mxu0
        %v3116 = vadd.f32 0.0, %v3115
        %v3117 = vpop.f32.mrb[0].mxu0
        %3118 = vmatprep.mubr.f32.mxu0 0.0
        %3119 = vmatmul.mubr.f32.gmra.mrb[0].mxu0 %v2895
        %v3120 = vpop.f32.mrb[0].mxu0
        %v3121 = vadd.f32 0.0, %v3120
        %v3122 = vpop.f32.mrb[0].mxu0
        %3123 = vmatprep.mubr.f32.mxu0 0.0
        %3124 = vmatmul.mubr.f32.gmra.mrb[0].mxu0 %v2898
        %v3125 = vpop.f32.mrb[0].mxu0
        %v3126 = vadd.f32 0.0, %v3125
        %v3127 = vpop.f32.mrb[0].mxu0
        %3128 = vmatprep.mubr.f32.mxu0 0.0
        %3129 = vmatmul.mubr.f32.gmra.mrb[0].mxu0 %v2901
        %v3130 = vpop.f32.mrb[0].mxu0
        %v3131 = vadd.f32 0.0, %v3130
        %v3132 = vpop.f32.mrb[0].mxu0
        %3133 = vmatprep.mubr.f32.mxu0 0.0
        %3134 = vmatmul.mubr.f32.gmra.mrb[0].mxu0 %v2904
        %v3135 = vpop.f32.mrb[0].mxu0
        %v3136 = vadd.f32 0.0, %v3135
        %v3137 = vpop.f32.mrb[0].mxu0
        %3138 = vmatprep.mubr.f32.mxu0 0.0
        %3139 = vmatmul.mubr.f32.gmra.mrb[0].mxu0 %v2907
        %v3140 = vpop.f32.mrb[0].mxu0
        %v3141 = vadd.f32 0.0, %v3140
        %v3142 = vpop.f32.mrb[0].mxu0
        %3143 = vmatprep.mubr.f32.mxu0 0.0
        %3144 = vmatmul.mubr.f32.gmra.mrb[0].mxu0 %v2910
        %v3145 = vpop.f32.mrb[0].mxu0
        %v3146 = vadd.f32 0.0, %v3145
        %v3147 = vpop.f32.mrb[0].mxu0
        %3148 = vmatprep.mubr.f32.mxu0 0.0
        %3149 = vmatmul.mubr.f32.gmra.mrb[0].mxu0 %v2913
        %v3150 = vpop.f32.mrb[0].mxu0
        %v3151 = vadd.f32 0.0, %v3150
        %v3152 = vpop.f32.mrb[0].mxu0
        %3153 = vmatprep.mubr.f32.mxu0 0.0
        %3154 = vmatmul.mubr.f32.gmra.mrb[0].mxu0 %v2916
        %v3155 = vpop.f32.mrb[0].mxu0
        %v3156 = vadd.f32 0.0, %v3155
        %v3157 = vpop.f32.mrb[0].mxu0
        %3158 = vmatprep.mubr.f32.mxu0 0.0
        %3159 = vmatmul.mubr.f32.gmra.mrb[0].mxu0 %v2919
        %v3160 = vpop.f32.mrb[0].mxu0
        %v3161 = vadd.f32 0.0, %v3160
        %v3162 = vpop.f32.mrb[0].mxu0
        %3163 = vmatprep.mubr.f32.mxu0 0.0
        %3164 = vmatmul.mubr.f32.gmra.mrb[0].mxu0 %v2922
        %v3165 = vpop.f32.mrb[0].mxu0
        %v3166 = vadd.f32 0.0, %v3165
        %v3167 = vpop.f32.mrb[0].mxu0
        %3168 = vdwg.mxu0
        %v3169 = vld [vmem:[#allocation3] sm:$0xff]
        %v3170 = vld [vmem:[#allocation3 + $0x8] sm:$0xff]
        %v3171 = vld [vmem:[#allocation3 + $0x10] sm:$0xff]
        %v3172 = vld [vmem:[#allocation3 + $0x18] sm:$0xff]
        %v3173 = vld [vmem:[#allocation3 + $0x20] sm:$0xff]
        %v3174 = vld [vmem:[#allocation3 + $0x28] sm:$0xff]
        %v3175 = vld [vmem:[#allocation3 + $0x30] sm:$0xff]
        %v3176 = vld [vmem:[#allocation3 + $0x38] sm:$0xff]
        %v3177 = vld [vmem:[#allocation3 + $0x40] sm:$0xff]
        %v3178 = vld [vmem:[#allocation3 + $0x48] sm:$0xff]
        %v3179 = vld [vmem:[#allocation3 + $0x50] sm:$0xff]
        %v3180 = vld [vmem:[#allocation3 + $0x58] sm:$0xff]
        %v3181 = vld [vmem:[#allocation3 + $0x60] sm:$0xff]
        %v3182 = vld [vmem:[#allocation3 + $0x68] sm:$0xff]
        %v3183 = vld [vmem:[#allocation3 + $0x70] sm:$0xff]
        %v3184 = vld [vmem:[#allocation3 + $0x78] sm:$0xff]
        %v3185 = vld [vmem:[#allocation3 + $0x80] sm:$0xff]
        %v3186 = vld [vmem:[#allocation3 + $0x88] sm:$0xff]
        %v3187 = vld [vmem:[#allocation3 + $0x90] sm:$0xff]
        %v3188 = vld [vmem:[#allocation3 + $0x98] sm:$0xff]
        %v3189 = vld [vmem:[#allocation3 + $0xa0] sm:$0xff]
        %v3190 = vld [vmem:[#allocation3 + $0xa8] sm:$0xff]
        %v3191 = vld [vmem:[#allocation3 + $0xb0] sm:$0xff]
        %v3192 = vld [vmem:[#allocation3 + $0xb8] sm:$0xff]
        %v3193 = vld [vmem:[#allocation3 + $0xc0] sm:$0xff]
        %v3194 = vld [vmem:[#allocation3 + $0xc8] sm:$0xff]
        %v3195 = vld [vmem:[#allocation3 + $0xd0] sm:$0xff]
        %v3196 = vld [vmem:[#allocation3 + $0xd8] sm:$0xff]
        %v3197 = vld [vmem:[#allocation3 + $0xe0] sm:$0xff]
        %v3198 = vld [vmem:[#allocation3 + $0xe8] sm:$0xff]
        %v3199 = vld [vmem:[#allocation3 + $0xf0] sm:$0xff]
        %v3200 = vld [vmem:[#allocation3 + $0xf8] sm:$0xff]
        %v3201 = vld [vmem:[#allocation3 + $0x100] sm:$0xff]
        %v3202 = vld [vmem:[#allocation3 + $0x108] sm:$0xff]
        %v3203 = vld [vmem:[#allocation3 + $0x110] sm:$0xff]
        %v3204 = vld [vmem:[#allocation3 + $0x118] sm:$0xff]
        %v3205 = vadd.f32 %v3169, %v2991
        %v3206 = vadd.f32 %v3170, %v2996
        %v3207 = vadd.f32 %v3171, %v3001
        %v3208 = vadd.f32 %v3172, %v3006
        %v3209 = vadd.f32 %v3173, %v3011
        %v3210 = vadd.f32 %v3174, %v3016
        %v3211 = vadd.f32 %v3175, %v3021
        %v3212 = vadd.f32 %v3176, %v3026
        %v3213 = vadd.f32 %v3177, %v3031
        %v3214 = vadd.f32 %v3178, %v3036
        %v3215 = vadd.f32 %v3179, %v3041
        %v3216 = vadd.f32 %v3180, %v3046
        %v3217 = vadd.f32 %v3181, %v3051
        %v3218 = vadd.f32 %v3182, %v3056
        %v3219 = vadd.f32 %v3183, %v3061
        %v3220 = vadd.f32 %v3184, %v3066
        %v3221 = vadd.f32 %v3185, %v3071
        %v3222 = vadd.f32 %v3186, %v3076
        %v3223 = vadd.f32 %v3187, %v3081
        %v3224 = vadd.f32 %v3188, %v3086
        %v3225 = vadd.f32 %v3189, %v3091
        %v3226 = vadd.f32 %v3190, %v3096
        %v3227 = vadd.f32 %v3191, %v3101
        %v3228 = vadd.f32 %v3192, %v3106
        %v3229 = vadd.f32 %v3193, %v3111
        %v3230 = vadd.f32 %v3194, %v3116
        %v3231 = vadd.f32 %v3195, %v3121
        %v3232 = vadd.f32 %v3196, %v3126
        %v3233 = vadd.f32 %v3197, %v3131
        %v3234 = vadd.f32 %v3198, %v3136
        %v3235 = vadd.f32 %v3199, %v3141
        %v3236 = vadd.f32 %v3200, %v3146
        %v3237 = vadd.f32 %v3201, %v3151
        %v3238 = vadd.f32 %v3202, %v3156
        %v3239 = vadd.f32 %v3203, %v3161
        %v3240 = vadd.f32 %v3204, %v3166
        %3241 = vst [vmem:[#allocation3] sm:$0xff] %v3205
        %3242 = vst [vmem:[#allocation3 + $0x8] sm:$0xff] %v3206
        %3243 = vst [vmem:[#allocation3 + $0x10] sm:$0xff] %v3207
        %3244 = vst [vmem:[#allocation3 + $0x18] sm:$0xff] %v3208
        %3245 = vst [vmem:[#allocation3 + $0x20] sm:$0xff] %v3209
        %3246 = vst [vmem:[#allocation3 + $0x28] sm:$0xff] %v3210
        %3247 = vst [vmem:[#allocation3 + $0x30] sm:$0xff] %v3211
        %3248 = vst [vmem:[#allocation3 + $0x38] sm:$0xff] %v3212
        %3249 = vst [vmem:[#allocation3 + $0x40] sm:$0xff] %v3213
        %3250 = vst [vmem:[#allocation3 + $0x48] sm:$0xff] %v3214
        %3251 = vst [vmem:[#allocation3 + $0x50] sm:$0xff] %v3215
        %3252 = vst [vmem:[#allocation3 + $0x58] sm:$0xff] %v3216
        %3253 = vst [vmem:[#allocation3 + $0x60] sm:$0xff] %v3217
        %3254 = vst [vmem:[#allocation3 + $0x68] sm:$0xff] %v3218
        %3255 = vst [vmem:[#allocation3 + $0x70] sm:$0xff] %v3219
        %3256 = vst [vmem:[#allocation3 + $0x78] sm:$0xff] %v3220
        %3257 = vst [vmem:[#allocation3 + $0x80] sm:$0xff] %v3221
        %3258 = vst [vmem:[#allocation3 + $0x88] sm:$0xff] %v3222
        %3259 = vst [vmem:[#allocation3 + $0x90] sm:$0xff] %v3223
        %3260 = vst [vmem:[#allocation3 + $0x98] sm:$0xff] %v3224
        %3261 = vst [vmem:[#allocation3 + $0xa0] sm:$0xff] %v3225
        %3262 = vst [vmem:[#allocation3 + $0xa8] sm:$0xff] %v3226
        %3263 = vst [vmem:[#allocation3 + $0xb0] sm:$0xff] %v3227
        %3264 = vst [vmem:[#allocation3 + $0xb8] sm:$0xff] %v3228
        %3265 = vst [vmem:[#allocation3 + $0xc0] sm:$0xff] %v3229
        %3266 = vst [vmem:[#allocation3 + $0xc8] sm:$0xff] %v3230
        %3267 = vst [vmem:[#allocation3 + $0xd0] sm:$0xff] %v3231
        %3268 = vst [vmem:[#allocation3 + $0xd8] sm:$0xff] %v3232
        %3269 = vst [vmem:[#allocation3 + $0xe0] sm:$0xff] %v3233
        %3270 = vst [vmem:[#allocation3 + $0xe8] sm:$0xff] %v3234
        %3271 = vst [vmem:[#allocation3 + $0xf0] sm:$0xff] %v3235
        %3272 = vst [vmem:[#allocation3 + $0xf8] sm:$0xff] %v3236
        %3273 = vst [vmem:[#allocation3 + $0x100] sm:$0xff] %v3237
        %3274 = vst [vmem:[#allocation3 + $0x108] sm:$0xff] %v3238
        %3275 = vst [vmem:[#allocation3 + $0x110] sm:$0xff] %v3239
        %3276 = vst [vmem:[#allocation3 + $0x118] sm:$0xff] %v3240
        %v3277 = vld [vmem:[#allocation2 + $0x24] sm:$0xff]
        %v3278 = vld [vmem:[#allocation2 + $0x2c] sm:$0xff]
        %v3279 = vld [vmem:[#allocation2 + $0x34] sm:$0xff]
        %v3280 = vld [vmem:[#allocation2 + $0x3c] sm:$0xff]
        %v3281 = vld [vmem:[#allocation2 + $0x44] sm:$0xff]
        %v3282 = vld [vmem:[#allocation2 + $0x4c] sm:$0xff]
        %v3283 = vld [vmem:[#allocation2 + $0x54] sm:$0xff]
        %v3284 = vld [vmem:[#allocation2 + $0x5c] sm:$0xff]
        %v3285 = vld [vmem:[#allocation2 + $0x64] sm:$0xff]
        %v3286 = vld [vmem:[#allocation2 + $0x6c] sm:$0xff]
        %v3287 = vld [vmem:[#allocation2 + $0x74] sm:$0xff]
        %v3288 = vld [vmem:[#allocation2 + $0x7c] sm:$0xff]
        %v3289 = vld [vmem:[#allocation2 + $0x84] sm:$0xff]
        %v3290 = vld [vmem:[#allocation2 + $0x8c] sm:$0xff]
        %v3291 = vld [vmem:[#allocation2 + $0x94] sm:$0xff]
        %v3292 = vld [vmem:[#allocation2 + $0x9c] sm:$0xff]
        %v3293 = vld [vmem:[#allocation2 + $0xa4] sm:$0xff]
        %v3294 = vld [vmem:[#allocation2 + $0xac] sm:$0xff]
        %v3295 = vld [vmem:[#allocation2 + $0xb4] sm:$0xff]
        %v3296 = vld [vmem:[#allocation2 + $0xbc] sm:$0xff]
        %v3297 = vld [vmem:[#allocation2 + $0xc4] sm:$0xff]
        %v3298 = vld [vmem:[#allocation2 + $0xcc] sm:$0xff]
        %v3299 = vld [vmem:[#allocation2 + $0xd4] sm:$0xff]
        %v3300 = vld [vmem:[#allocation2 + $0xdc] sm:$0xff]
        %v3301 = vld [vmem:[#allocation2 + $0xe4] sm:$0xff]
        %v3302 = vld [vmem:[#allocation2 + $0xec] sm:$0xff]
        %v3303 = vld [vmem:[#allocation2 + $0xf4] sm:$0xff]
        %v3304 = vld [vmem:[#allocation2 + $0xfc] sm:$0xff]
        %v3305 = vld [vmem:[#allocation2 + $0x104] sm:$0xff]
        %v3306 = vld [vmem:[#allocation2 + $0x10c] sm:$0xff]
        %v3307 = vld [vmem:[#allocation2 + $0x114] sm:$0xff]
        %v3308 = vld [vmem:[#allocation2 + $0x11c] sm:$0xff]
        %v3309 = vld [vmem:[#allocation2 + $0x124] sm:$0xff]
        %v3310 = vld [vmem:[#allocation2 + $0x12c] sm:$0xff]
        %v3311 = vld [vmem:[#allocation2 + $0x134] sm:$0xff]
        %v3312 = vld [vmem:[#allocation2 + $0x13c] sm:$0xff]
        %s3313 = scalar_lea.vmem %s2, 48
        %v3314 = vld [vmem:[%s3313] sm:$0xff]
        %v3316 = vsel %vm313, %v3277, 0
        %v3319 = vsel %vm313, %v3278, 0
        %v3322 = vsel %vm313, %v3279, 0
        %v3325 = vsel %vm313, %v3280, 0
        %v3328 = vsel %vm313, %v3281, 0
        %v3331 = vsel %vm313, %v3282, 0
        %v3334 = vsel %vm313, %v3283, 0
        %v3337 = vsel %vm313, %v3284, 0
        %v3340 = vsel %vm313, %v3285, 0
        %v3343 = vsel %vm313, %v3286, 0
        %v3346 = vsel %vm313, %v3287, 0
        %v3349 = vsel %vm313, %v3288, 0
        %v3352 = vsel %vm313, %v3289, 0
        %v3355 = vsel %vm313, %v3290, 0
        %v3358 = vsel %vm313, %v3291, 0
        %v3361 = vsel %vm313, %v3292, 0
        %v3364 = vsel %vm313, %v3293, 0
        %v3367 = vsel %vm313, %v3294, 0
        %v3370 = vsel %vm313, %v3295, 0
        %v3373 = vsel %vm313, %v3296, 0
        %v3376 = vsel %vm313, %v3297, 0
        %v3379 = vsel %vm313, %v3298, 0
        %v3382 = vsel %vm313, %v3299, 0
        %v3385 = vsel %vm313, %v3300, 0
        %v3388 = vsel %vm313, %v3301, 0
        %v3391 = vsel %vm313, %v3302, 0
        %v3394 = vsel %vm313, %v3303, 0
        %v3397 = vsel %vm313, %v3304, 0
        %v3400 = vsel %vm313, %v3305, 0
        %v3403 = vsel %vm313, %v3306, 0
        %v3406 = vsel %vm313, %v3307, 0
        %v3409 = vsel %vm313, %v3308, 0
        %v3412 = vsel %vm313, %v3309, 0
        %v3415 = vsel %vm313, %v3310, 0
        %v3418 = vsel %vm313, %v3311, 0
        %v3421 = vsel %vm313, %v3312, 0
        %3423 = vmatprep.subr.mxu0 0.0
        %3424 = vmatpush1.msra.mxu0 %v3314
        %3425 = vmatprep.subr.mxu0 0.0
        %3426 = vmatpush1.msra.mxu0 0.0
        %3427 = vmatprep.subr.mxu0 0.0
        %3428 = vmatpush1.msra.mxu0 0.0
        %3429 = vmatprep.subr.mxu0 0.0
        %3430 = vmatpush1.msra.mxu0 0.0
        %3431 = vmatprep.subr.mxu0 0.0
        %3432 = vmatpush1.msra.mxu0 0.0
        %3433 = vmatprep.subr.mxu0 0.0
        %3434 = vmatpush1.msra.mxu0 0.0
        %3435 = vmatprep.subr.mxu0 0.0
        %3436 = vmatpush1.msra.mxu0 0.0
        %3437 = vmatprep.subr.mxu0 0.0
        %3438 = vmatpush1.msra.mxu0 0.0
        %3439 = vmatprep.subr.mxu0 0.0
        %3440 = vmatpush1.msra.mxu0 0.0
        %3441 = vmatprep.subr.mxu0 0.0
        %3442 = vmatpush1.msra.mxu0 0.0
        %3443 = vmatprep.subr.mxu0 0.0
        %3444 = vmatpush1.msra.mxu0 0.0
        %3445 = vmatprep.subr.mxu0 0.0
        %3446 = vmatpush1.msra.mxu0 0.0
        %3447 = vmatprep.subr.mxu0 0.0
        %3448 = vmatpush1.msra.mxu0 0.0
        %3449 = vmatprep.subr.mxu0 0.0
        %3450 = vmatpush1.msra.mxu0 0.0
        %3451 = vmatprep.subr.mxu0 0.0
        %3452 = vmatpush1.msra.mxu0 0.0
        %3453 = vmatprep.subr.mxu0 0.0
        %3454 = vmatpush1.msra.mxu0 0.0
        %3455 = vmatprep.subr.mxu0 0.0
        %3456 = vmatpush1.msra.mxu0 0.0
        %3457 = vmatprep.subr.mxu0 0.0
        %3458 = vmatpush1.msra.mxu0 0.0
        %3459 = vmatprep.subr.mxu0 0.0
        %3460 = vmatpush1.msra.mxu0 0.0
        %3461 = vmatprep.subr.mxu0 0.0
        %3462 = vmatpush1.msra.mxu0 0.0
        %3463 = vmatprep.subr.mxu0 0.0
        %3464 = vmatpush1.msra.mxu0 0.0
        %3465 = vmatprep.subr.mxu0 0.0
        %3466 = vmatpush1.msra.mxu0 0.0
        %3467 = vmatprep.subr.mxu0 0.0
        %3468 = vmatpush1.msra.mxu0 0.0
        %3469 = vmatprep.subr.mxu0 0.0
        %3470 = vmatpush1.msra.mxu0 0.0
        %3471 = vmatprep.subr.mxu0 0.0
        %3472 = vmatpush1.msra.mxu0 0.0
        %3473 = vmatprep.subr.mxu0 0.0
        %3474 = vmatpush1.msra.mxu0 0.0
        %3475 = vmatprep.subr.mxu0 0.0
        %3476 = vmatpush1.msra.mxu0 0.0
        %3477 = vmatprep.subr.mxu0 0.0
        %3478 = vmatpush1.msra.mxu0 0.0
        %3479 = vmatprep.subr.mxu0 0.0
        %3480 = vmatpush1.msra.mxu0 0.0
        %3481 = vmatprep.subr.mxu0 0.0
        %3482 = vmatpush1.msra.mxu0 0.0
        %3483 = vmatprep.subr.mxu0 0.0
        %3484 = vmatpush1.msra.mxu0 0.0
        %3485 = vmatprep.subr.mxu0 0.0
        %3486 = vmatpush1.msra.mxu0 0.0
        %3487 = vmatprep.mubr.f32.mxu0 0.0
        %3488 = vmatmul.mubr.f32.gmra.mrb[0].mxu0 %v3316
        %v3489 = vpop.f32.mrb[0].mxu0
        %v3490 = vadd.f32 0.0, %v3489
        %v3491 = vpop.f32.mrb[0].mxu0
        %3492 = vmatprep.mubr.f32.mxu0 0.0
        %3493 = vmatmul.mubr.f32.gmra.mrb[0].mxu0 %v3319
        %v3494 = vpop.f32.mrb[0].mxu0
        %v3495 = vadd.f32 0.0, %v3494
        %v3496 = vpop.f32.mrb[0].mxu0
        %3497 = vmatprep.mubr.f32.mxu0 0.0
        %3498 = vmatmul.mubr.f32.gmra.mrb[0].mxu0 %v3322
        %v3499 = vpop.f32.mrb[0].mxu0
        %v3500 = vadd.f32 0.0, %v3499
        %v3501 = vpop.f32.mrb[0].mxu0
        %3502 = vmatprep.mubr.f32.mxu0 0.0
        %3503 = vmatmul.mubr.f32.gmra.mrb[0].mxu0 %v3325
        %v3504 = vpop.f32.mrb[0].mxu0
        %v3505 = vadd.f32 0.0, %v3504
        %v3506 = vpop.f32.mrb[0].mxu0
        %3507 = vmatprep.mubr.f32.mxu0 0.0
        %3508 = vmatmul.mubr.f32.gmra.mrb[0].mxu0 %v3328
        %v3509 = vpop.f32.mrb[0].mxu0
        %v3510 = vadd.f32 0.0, %v3509
        %v3511 = vpop.f32.mrb[0].mxu0
        %3512 = vmatprep.mubr.f32.mxu0 0.0
        %3513 = vmatmul.mubr.f32.gmra.mrb[0].mxu0 %v3331
        %v3514 = vpop.f32.mrb[0].mxu0
        %v3515 = vadd.f32 0.0, %v3514
        %v3516 = vpop.f32.mrb[0].mxu0
        %3517 = vmatprep.mubr.f32.mxu0 0.0
        %3518 = vmatmul.mubr.f32.gmra.mrb[0].mxu0 %v3334
        %v3519 = vpop.f32.mrb[0].mxu0
        %v3520 = vadd.f32 0.0, %v3519
        %v3521 = vpop.f32.mrb[0].mxu0
        %3522 = vmatprep.mubr.f32.mxu0 0.0
        %3523 = vmatmul.mubr.f32.gmra.mrb[0].mxu0 %v3337
        %v3524 = vpop.f32.mrb[0].mxu0
        %v3525 = vadd.f32 0.0, %v3524
        %v3526 = vpop.f32.mrb[0].mxu0
        %3527 = vmatprep.mubr.f32.mxu0 0.0
        %3528 = vmatmul.mubr.f32.gmra.mrb[0].mxu0 %v3340
        %v3529 = vpop.f32.mrb[0].mxu0
        %v3530 = vadd.f32 0.0, %v3529
        %v3531 = vpop.f32.mrb[0].mxu0
        %3532 = vmatprep.mubr.f32.mxu0 0.0
        %3533 = vmatmul.mubr.f32.gmra.mrb[0].mxu0 %v3343
        %v3534 = vpop.f32.mrb[0].mxu0
        %v3535 = vadd.f32 0.0, %v3534
        %v3536 = vpop.f32.mrb[0].mxu0
        %3537 = vmatprep.mubr.f32.mxu0 0.0
        %3538 = vmatmul.mubr.f32.gmra.mrb[0].mxu0 %v3346
        %v3539 = vpop.f32.mrb[0].mxu0
        %v3540 = vadd.f32 0.0, %v3539
        %v3541 = vpop.f32.mrb[0].mxu0
        %3542 = vmatprep.mubr.f32.mxu0 0.0
        %3543 = vmatmul.mubr.f32.gmra.mrb[0].mxu0 %v3349
        %v3544 = vpop.f32.mrb[0].mxu0
        %v3545 = vadd.f32 0.0, %v3544
        %v3546 = vpop.f32.mrb[0].mxu0
        %3547 = vmatprep.mubr.f32.mxu0 0.0
        %3548 = vmatmul.mubr.f32.gmra.mrb[0].mxu0 %v3352
        %v3549 = vpop.f32.mrb[0].mxu0
        %v3550 = vadd.f32 0.0, %v3549
        %v3551 = vpop.f32.mrb[0].mxu0
        %3552 = vmatprep.mubr.f32.mxu0 0.0
        %3553 = vmatmul.mubr.f32.gmra.mrb[0].mxu0 %v3355
        %v3554 = vpop.f32.mrb[0].mxu0
        %v3555 = vadd.f32 0.0, %v3554
        %v3556 = vpop.f32.mrb[0].mxu0
        %3557 = vmatprep.mubr.f32.mxu0 0.0
        %3558 = vmatmul.mubr.f32.gmra.mrb[0].mxu0 %v3358
        %v3559 = vpop.f32.mrb[0].mxu0
        %v3560 = vadd.f32 0.0, %v3559
        %v3561 = vpop.f32.mrb[0].mxu0
        %3562 = vmatprep.mubr.f32.mxu0 0.0
        %3563 = vmatmul.mubr.f32.gmra.mrb[0].mxu0 %v3361
        %v3564 = vpop.f32.mrb[0].mxu0
        %v3565 = vadd.f32 0.0, %v3564
        %v3566 = vpop.f32.mrb[0].mxu0
        %3567 = vmatprep.mubr.f32.mxu0 0.0
        %3568 = vmatmul.mubr.f32.gmra.mrb[0].mxu0 %v3364
        %v3569 = vpop.f32.mrb[0].mxu0
        %v3570 = vadd.f32 0.0, %v3569
        %v3571 = vpop.f32.mrb[0].mxu0
        %3572 = vmatprep.mubr.f32.mxu0 0.0
        %3573 = vmatmul.mubr.f32.gmra.mrb[0].mxu0 %v3367
        %v3574 = vpop.f32.mrb[0].mxu0
        %v3575 = vadd.f32 0.0, %v3574
        %v3576 = vpop.f32.mrb[0].mxu0
        %3577 = vmatprep.mubr.f32.mxu0 0.0
        %3578 = vmatmul.mubr.f32.gmra.mrb[0].mxu0 %v3370
        %v3579 = vpop.f32.mrb[0].mxu0
        %v3580 = vadd.f32 0.0, %v3579
        %v3581 = vpop.f32.mrb[0].mxu0
        %3582 = vmatprep.mubr.f32.mxu0 0.0
        %3583 = vmatmul.mubr.f32.gmra.mrb[0].mxu0 %v3373
        %v3584 = vpop.f32.mrb[0].mxu0
        %v3585 = vadd.f32 0.0, %v3584
        %v3586 = vpop.f32.mrb[0].mxu0
        %3587 = vmatprep.mubr.f32.mxu0 0.0
        %3588 = vmatmul.mubr.f32.gmra.mrb[0].mxu0 %v3376
        %v3589 = vpop.f32.mrb[0].mxu0
        %v3590 = vadd.f32 0.0, %v3589
        %v3591 = vpop.f32.mrb[0].mxu0
        %3592 = vmatprep.mubr.f32.mxu0 0.0
        %3593 = vmatmul.mubr.f32.gmra.mrb[0].mxu0 %v3379
        %v3594 = vpop.f32.mrb[0].mxu0
        %v3595 = vadd.f32 0.0, %v3594
        %v3596 = vpop.f32.mrb[0].mxu0
        %3597 = vmatprep.mubr.f32.mxu0 0.0
        %3598 = vmatmul.mubr.f32.gmra.mrb[0].mxu0 %v3382
        %v3599 = vpop.f32.mrb[0].mxu0
        %v3600 = vadd.f32 0.0, %v3599
        %v3601 = vpop.f32.mrb[0].mxu0
        %3602 = vmatprep.mubr.f32.mxu0 0.0
        %3603 = vmatmul.mubr.f32.gmra.mrb[0].mxu0 %v3385
        %v3604 = vpop.f32.mrb[0].mxu0
        %v3605 = vadd.f32 0.0, %v3604
        %v3606 = vpop.f32.mrb[0].mxu0
        %3607 = vmatprep.mubr.f32.mxu0 0.0
        %3608 = vmatmul.mubr.f32.gmra.mrb[0].mxu0 %v3388
        %v3609 = vpop.f32.mrb[0].mxu0
        %v3610 = vadd.f32 0.0, %v3609
        %v3611 = vpop.f32.mrb[0].mxu0
        %3612 = vmatprep.mubr.f32.mxu0 0.0
        %3613 = vmatmul.mubr.f32.gmra.mrb[0].mxu0 %v3391
        %v3614 = vpop.f32.mrb[0].mxu0
        %v3615 = vadd.f32 0.0, %v3614
        %v3616 = vpop.f32.mrb[0].mxu0
        %3617 = vmatprep.mubr.f32.mxu0 0.0
        %3618 = vmatmul.mubr.f32.gmra.mrb[0].mxu0 %v3394
        %v3619 = vpop.f32.mrb[0].mxu0
        %v3620 = vadd.f32 0.0, %v3619
        %v3621 = vpop.f32.mrb[0].mxu0
        %3622 = vmatprep.mubr.f32.mxu0 0.0
        %3623 = vmatmul.mubr.f32.gmra.mrb[0].mxu0 %v3397
        %v3624 = vpop.f32.mrb[0].mxu0
        %v3625 = vadd.f32 0.0, %v3624
        %v3626 = vpop.f32.mrb[0].mxu0
        %3627 = vmatprep.mubr.f32.mxu0 0.0
        %3628 = vmatmul.mubr.f32.gmra.mrb[0].mxu0 %v3400
        %v3629 = vpop.f32.mrb[0].mxu0
        %v3630 = vadd.f32 0.0, %v3629
        %v3631 = vpop.f32.mrb[0].mxu0
        %3632 = vmatprep.mubr.f32.mxu0 0.0
        %3633 = vmatmul.mubr.f32.gmra.mrb[0].mxu0 %v3403
        %v3634 = vpop.f32.mrb[0].mxu0
        %v3635 = vadd.f32 0.0, %v3634
        %v3636 = vpop.f32.mrb[0].mxu0
        %3637 = vmatprep.mubr.f32.mxu0 0.0
        %3638 = vmatmul.mubr.f32.gmra.mrb[0].mxu0 %v3406
        %v3639 = vpop.f32.mrb[0].mxu0
        %v3640 = vadd.f32 0.0, %v3639
        %v3641 = vpop.f32.mrb[0].mxu0
        %3642 = vmatprep.mubr.f32.mxu0 0.0
        %3643 = vmatmul.mubr.f32.gmra.mrb[0].mxu0 %v3409
        %v3644 = vpop.f32.mrb[0].mxu0
        %v3645 = vadd.f32 0.0, %v3644
        %v3646 = vpop.f32.mrb[0].mxu0
        %3647 = vmatprep.mubr.f32.mxu0 0.0
        %3648 = vmatmul.mubr.f32.gmra.mrb[0].mxu0 %v3412
        %v3649 = vpop.f32.mrb[0].mxu0
        %v3650 = vadd.f32 0.0, %v3649
        %v3651 = vpop.f32.mrb[0].mxu0
        %3652 = vmatprep.mubr.f32.mxu0 0.0
        %3653 = vmatmul.mubr.f32.gmra.mrb[0].mxu0 %v3415
        %v3654 = vpop.f32.mrb[0].mxu0
        %v3655 = vadd.f32 0.0, %v3654
        %v3656 = vpop.f32.mrb[0].mxu0
        %3657 = vmatprep.mubr.f32.mxu0 0.0
        %3658 = vmatmul.mubr.f32.gmra.mrb[0].mxu0 %v3418
        %v3659 = vpop.f32.mrb[0].mxu0
        %v3660 = vadd.f32 0.0, %v3659
        %v3661 = vpop.f32.mrb[0].mxu0
        %3662 = vmatprep.mubr.f32.mxu0 0.0
        %3663 = vmatmul.mubr.f32.gmra.mrb[0].mxu0 %v3421
        %v3664 = vpop.f32.mrb[0].mxu0
        %v3665 = vadd.f32 0.0, %v3664
        %v3666 = vpop.f32.mrb[0].mxu0
        %3667 = vdwg.mxu0
        %v3668 = vld [vmem:[#allocation3] sm:$0xff]
        %v3669 = vld [vmem:[#allocation3 + $0x8] sm:$0xff]
        %v3670 = vld [vmem:[#allocation3 + $0x10] sm:$0xff]
        %v3671 = vld [vmem:[#allocation3 + $0x18] sm:$0xff]
        %v3672 = vld [vmem:[#allocation3 + $0x20] sm:$0xff]
        %v3673 = vld [vmem:[#allocation3 + $0x28] sm:$0xff]
        %v3674 = vld [vmem:[#allocation3 + $0x30] sm:$0xff]
        %v3675 = vld [vmem:[#allocation3 + $0x38] sm:$0xff]
        %v3676 = vld [vmem:[#allocation3 + $0x40] sm:$0xff]
        %v3677 = vld [vmem:[#allocation3 + $0x48] sm:$0xff]
        %v3678 = vld [vmem:[#allocation3 + $0x50] sm:$0xff]
        %v3679 = vld [vmem:[#allocation3 + $0x58] sm:$0xff]
        %v3680 = vld [vmem:[#allocation3 + $0x60] sm:$0xff]
        %v3681 = vld [vmem:[#allocation3 + $0x68] sm:$0xff]
        %v3682 = vld [vmem:[#allocation3 + $0x70] sm:$0xff]
        %v3683 = vld [vmem:[#allocation3 + $0x78] sm:$0xff]
        %v3684 = vld [vmem:[#allocation3 + $0x80] sm:$0xff]
        %v3685 = vld [vmem:[#allocation3 + $0x88] sm:$0xff]
        %v3686 = vld [vmem:[#allocation3 + $0x90] sm:$0xff]
        %v3687 = vld [vmem:[#allocation3 + $0x98] sm:$0xff]
        %v3688 = vld [vmem:[#allocation3 + $0xa0] sm:$0xff]
        %v3689 = vld [vmem:[#allocation3 + $0xa8] sm:$0xff]
        %v3690 = vld [vmem:[#allocation3 + $0xb0] sm:$0xff]
        %v3691 = vld [vmem:[#allocation3 + $0xb8] sm:$0xff]
        %v3692 = vld [vmem:[#allocation3 + $0xc0] sm:$0xff]
        %v3693 = vld [vmem:[#allocation3 + $0xc8] sm:$0xff]
        %v3694 = vld [vmem:[#allocation3 + $0xd0] sm:$0xff]
        %v3695 = vld [vmem:[#allocation3 + $0xd8] sm:$0xff]
        %v3696 = vld [vmem:[#allocation3 + $0xe0] sm:$0xff]
        %v3697 = vld [vmem:[#allocation3 + $0xe8] sm:$0xff]
        %v3698 = vld [vmem:[#allocation3 + $0xf0] sm:$0xff]
        %v3699 = vld [vmem:[#allocation3 + $0xf8] sm:$0xff]
        %v3700 = vld [vmem:[#allocation3 + $0x100] sm:$0xff]
        %v3701 = vld [vmem:[#allocation3 + $0x108] sm:$0xff]
        %v3702 = vld [vmem:[#allocation3 + $0x110] sm:$0xff]
        %v3703 = vld [vmem:[#allocation3 + $0x118] sm:$0xff]
        %v3704 = vadd.f32 %v3668, %v3490
        %v3705 = vadd.f32 %v3669, %v3495
        %v3706 = vadd.f32 %v3670, %v3500
        %v3707 = vadd.f32 %v3671, %v3505
        %v3708 = vadd.f32 %v3672, %v3510
        %v3709 = vadd.f32 %v3673, %v3515
        %v3710 = vadd.f32 %v3674, %v3520
        %v3711 = vadd.f32 %v3675, %v3525
        %v3712 = vadd.f32 %v3676, %v3530
        %v3713 = vadd.f32 %v3677, %v3535
        %v3714 = vadd.f32 %v3678, %v3540
        %v3715 = vadd.f32 %v3679, %v3545
        %v3716 = vadd.f32 %v3680, %v3550
        %v3717 = vadd.f32 %v3681, %v3555
        %v3718 = vadd.f32 %v3682, %v3560
        %v3719 = vadd.f32 %v3683, %v3565
        %v3720 = vadd.f32 %v3684, %v3570
        %v3721 = vadd.f32 %v3685, %v3575
        %v3722 = vadd.f32 %v3686, %v3580
        %v3723 = vadd.f32 %v3687, %v3585
        %v3724 = vadd.f32 %v3688, %v3590
        %v3725 = vadd.f32 %v3689, %v3595
        %v3726 = vadd.f32 %v3690, %v3600
        %v3727 = vadd.f32 %v3691, %v3605
        %v3728 = vadd.f32 %v3692, %v3610
        %v3729 = vadd.f32 %v3693, %v3615
        %v3730 = vadd.f32 %v3694, %v3620
        %v3731 = vadd.f32 %v3695, %v3625
        %v3732 = vadd.f32 %v3696, %v3630
        %v3733 = vadd.f32 %v3697, %v3635
        %v3734 = vadd.f32 %v3698, %v3640
        %v3735 = vadd.f32 %v3699, %v3645
        %v3736 = vadd.f32 %v3700, %v3650
        %v3737 = vadd.f32 %v3701, %v3655
        %v3738 = vadd.f32 %v3702, %v3660
        %v3739 = vadd.f32 %v3703, %v3665
        %3740 = vst [vmem:[#allocation3] sm:$0xff] %v3704
        %3741 = vst [vmem:[#allocation3 + $0x8] sm:$0xff] %v3705
        %3742 = vst [vmem:[#allocation3 + $0x10] sm:$0xff] %v3706
        %3743 = vst [vmem:[#allocation3 + $0x18] sm:$0xff] %v3707
        %3744 = vst [vmem:[#allocation3 + $0x20] sm:$0xff] %v3708
        %3745 = vst [vmem:[#allocation3 + $0x28] sm:$0xff] %v3709
        %3746 = vst [vmem:[#allocation3 + $0x30] sm:$0xff] %v3710
        %3747 = vst [vmem:[#allocation3 + $0x38] sm:$0xff] %v3711
        %3748 = vst [vmem:[#allocation3 + $0x40] sm:$0xff] %v3712
        %3749 = vst [vmem:[#allocation3 + $0x48] sm:$0xff] %v3713
        %3750 = vst [vmem:[#allocation3 + $0x50] sm:$0xff] %v3714
        %3751 = vst [vmem:[#allocation3 + $0x58] sm:$0xff] %v3715
        %3752 = vst [vmem:[#allocation3 + $0x60] sm:$0xff] %v3716
        %3753 = vst [vmem:[#allocation3 + $0x68] sm:$0xff] %v3717
        %3754 = vst [vmem:[#allocation3 + $0x70] sm:$0xff] %v3718
        %3755 = vst [vmem:[#allocation3 + $0x78] sm:$0xff] %v3719
        %3756 = vst [vmem:[#allocation3 + $0x80] sm:$0xff] %v3720
        %3757 = vst [vmem:[#allocation3 + $0x88] sm:$0xff] %v3721
        %3758 = vst [vmem:[#allocation3 + $0x90] sm:$0xff] %v3722
        %3759 = vst [vmem:[#allocation3 + $0x98] sm:$0xff] %v3723
        %3760 = vst [vmem:[#allocation3 + $0xa0] sm:$0xff] %v3724
        %3761 = vst [vmem:[#allocation3 + $0xa8] sm:$0xff] %v3725
        %3762 = vst [vmem:[#allocation3 + $0xb0] sm:$0xff] %v3726
        %3763 = vst [vmem:[#allocation3 + $0xb8] sm:$0xff] %v3727
        %3764 = vst [vmem:[#allocation3 + $0xc0] sm:$0xff] %v3728
        %3765 = vst [vmem:[#allocation3 + $0xc8] sm:$0xff] %v3729
        %3766 = vst [vmem:[#allocation3 + $0xd0] sm:$0xff] %v3730
        %3767 = vst [vmem:[#allocation3 + $0xd8] sm:$0xff] %v3731
        %3768 = vst [vmem:[#allocation3 + $0xe0] sm:$0xff] %v3732
        %3769 = vst [vmem:[#allocation3 + $0xe8] sm:$0xff] %v3733
        %3770 = vst [vmem:[#allocation3 + $0xf0] sm:$0xff] %v3734
        %3771 = vst [vmem:[#allocation3 + $0xf8] sm:$0xff] %v3735
        %3772 = vst [vmem:[#allocation3 + $0x100] sm:$0xff] %v3736
        %3773 = vst [vmem:[#allocation3 + $0x108] sm:$0xff] %v3737
        %3774 = vst [vmem:[#allocation3 + $0x110] sm:$0xff] %v3738
        %3775 = vst [vmem:[#allocation3 + $0x118] sm:$0xff] %v3739
        %v3776 = vld [vmem:[#allocation2 + $0x25] sm:$0xff]
        %v3777 = vld [vmem:[#allocation2 + $0x2d] sm:$0xff]
        %v3778 = vld [vmem:[#allocation2 + $0x35] sm:$0xff]
        %v3779 = vld [vmem:[#allocation2 + $0x3d] sm:$0xff]
        %v3780 = vld [vmem:[#allocation2 + $0x45] sm:$0xff]
        %v3781 = vld [vmem:[#allocation2 + $0x4d] sm:$0xff]
        %v3782 = vld [vmem:[#allocation2 + $0x55] sm:$0xff]
        %v3783 = vld [vmem:[#allocation2 + $0x5d] sm:$0xff]
        %v3784 = vld [vmem:[#allocation2 + $0x65] sm:$0xff]
        %v3785 = vld [vmem:[#allocation2 + $0x6d] sm:$0xff]
        %v3786 = vld [vmem:[#allocation2 + $0x75] sm:$0xff]
        %v3787 = vld [vmem:[#allocation2 + $0x7d] sm:$0xff]
        %v3788 = vld [vmem:[#allocation2 + $0x85] sm:$0xff]
        %v3789 = vld [vmem:[#allocation2 + $0x8d] sm:$0xff]
        %v3790 = vld [vmem:[#allocation2 + $0x95] sm:$0xff]
        %v3791 = vld [vmem:[#allocation2 + $0x9d] sm:$0xff]
        %v3792 = vld [vmem:[#allocation2 + $0xa5] sm:$0xff]
        %v3793 = vld [vmem:[#allocation2 + $0xad] sm:$0xff]
        %v3794 = vld [vmem:[#allocation2 + $0xb5] sm:$0xff]
        %v3795 = vld [vmem:[#allocation2 + $0xbd] sm:$0xff]
        %v3796 = vld [vmem:[#allocation2 + $0xc5] sm:$0xff]
        %v3797 = vld [vmem:[#allocation2 + $0xcd] sm:$0xff]
        %v3798 = vld [vmem:[#allocation2 + $0xd5] sm:$0xff]
        %v3799 = vld [vmem:[#allocation2 + $0xdd] sm:$0xff]
        %v3800 = vld [vmem:[#allocation2 + $0xe5] sm:$0xff]
        %v3801 = vld [vmem:[#allocation2 + $0xed] sm:$0xff]
        %v3802 = vld [vmem:[#allocation2 + $0xf5] sm:$0xff]
        %v3803 = vld [vmem:[#allocation2 + $0xfd] sm:$0xff]
        %v3804 = vld [vmem:[#allocation2 + $0x105] sm:$0xff]
        %v3805 = vld [vmem:[#allocation2 + $0x10d] sm:$0xff]
        %v3806 = vld [vmem:[#allocation2 + $0x115] sm:$0xff]
        %v3807 = vld [vmem:[#allocation2 + $0x11d] sm:$0xff]
        %v3808 = vld [vmem:[#allocation2 + $0x125] sm:$0xff]
        %v3809 = vld [vmem:[#allocation2 + $0x12d] sm:$0xff]
        %v3810 = vld [vmem:[#allocation2 + $0x135] sm:$0xff]
        %v3811 = vld [vmem:[#allocation2 + $0x13d] sm:$0xff]
        %s3812 = scalar_lea.vmem %s2, 56
        %v3813 = vld [vmem:[%s3812] sm:$0xff]
        %v3815 = vsel %vm313, %v3776, 0
        %v3818 = vsel %vm313, %v3777, 0
        %v3821 = vsel %vm313, %v3778, 0
        %v3824 = vsel %vm313, %v3779, 0
        %v3827 = vsel %vm313, %v3780, 0
        %v3830 = vsel %vm313, %v3781, 0
        %v3833 = vsel %vm313, %v3782, 0
        %v3836 = vsel %vm313, %v3783, 0
        %v3839 = vsel %vm313, %v3784, 0
        %v3842 = vsel %vm313, %v3785, 0
        %v3845 = vsel %vm313, %v3786, 0
        %v3848 = vsel %vm313, %v3787, 0
        %v3851 = vsel %vm313, %v3788, 0
        %v3854 = vsel %vm313, %v3789, 0
        %v3857 = vsel %vm313, %v3790, 0
        %v3860 = vsel %vm313, %v3791, 0
        %v3863 = vsel %vm313, %v3792, 0
        %v3866 = vsel %vm313, %v3793, 0
        %v3869 = vsel %vm313, %v3794, 0
        %v3872 = vsel %vm313, %v3795, 0
        %v3875 = vsel %vm313, %v3796, 0
        %v3878 = vsel %vm313, %v3797, 0
        %v3881 = vsel %vm313, %v3798, 0
        %v3884 = vsel %vm313, %v3799, 0
        %v3887 = vsel %vm313, %v3800, 0
        %v3890 = vsel %vm313, %v3801, 0
        %v3893 = vsel %vm313, %v3802, 0
        %v3896 = vsel %vm313, %v3803, 0
        %v3899 = vsel %vm313, %v3804, 0
        %v3902 = vsel %vm313, %v3805, 0
        %v3905 = vsel %vm313, %v3806, 0
        %v3908 = vsel %vm313, %v3807, 0
        %v3911 = vsel %vm313, %v3808, 0
        %v3914 = vsel %vm313, %v3809, 0
        %v3917 = vsel %vm313, %v3810, 0
        %v3920 = vsel %vm313, %v3811, 0
        %3922 = vmatprep.subr.mxu0 0.0
        %3923 = vmatpush1.msra.mxu0 %v3813
        %3924 = vmatprep.subr.mxu0 0.0
        %3925 = vmatpush1.msra.mxu0 0.0
        %3926 = vmatprep.subr.mxu0 0.0
        %3927 = vmatpush1.msra.mxu0 0.0
        %3928 = vmatprep.subr.mxu0 0.0
        %3929 = vmatpush1.msra.mxu0 0.0
        %3930 = vmatprep.subr.mxu0 0.0
        %3931 = vmatpush1.msra.mxu0 0.0
        %3932 = vmatprep.subr.mxu0 0.0
        %3933 = vmatpush1.msra.mxu0 0.0
        %3934 = vmatprep.subr.mxu0 0.0
        %3935 = vmatpush1.msra.mxu0 0.0
        %3936 = vmatprep.subr.mxu0 0.0
        %3937 = vmatpush1.msra.mxu0 0.0
        %3938 = vmatprep.subr.mxu0 0.0
        %3939 = vmatpush1.msra.mxu0 0.0
        %3940 = vmatprep.subr.mxu0 0.0
        %3941 = vmatpush1.msra.mxu0 0.0
        %3942 = vmatprep.subr.mxu0 0.0
        %3943 = vmatpush1.msra.mxu0 0.0
        %3944 = vmatprep.subr.mxu0 0.0
        %3945 = vmatpush1.msra.mxu0 0.0
        %3946 = vmatprep.subr.mxu0 0.0
        %3947 = vmatpush1.msra.mxu0 0.0
        %3948 = vmatprep.subr.mxu0 0.0
        %3949 = vmatpush1.msra.mxu0 0.0
        %3950 = vmatprep.subr.mxu0 0.0
        %3951 = vmatpush1.msra.mxu0 0.0
        %3952 = vmatprep.subr.mxu0 0.0
        %3953 = vmatpush1.msra.mxu0 0.0
        %3954 = vmatprep.subr.mxu0 0.0
        %3955 = vmatpush1.msra.mxu0 0.0
        %3956 = vmatprep.subr.mxu0 0.0
        %3957 = vmatpush1.msra.mxu0 0.0
        %3958 = vmatprep.subr.mxu0 0.0
        %3959 = vmatpush1.msra.mxu0 0.0
        %3960 = vmatprep.subr.mxu0 0.0
        %3961 = vmatpush1.msra.mxu0 0.0
        %3962 = vmatprep.subr.mxu0 0.0
        %3963 = vmatpush1.msra.mxu0 0.0
        %3964 = vmatprep.subr.mxu0 0.0
        %3965 = vmatpush1.msra.mxu0 0.0
        %3966 = vmatprep.subr.mxu0 0.0
        %3967 = vmatpush1.msra.mxu0 0.0
        %3968 = vmatprep.subr.mxu0 0.0
        %3969 = vmatpush1.msra.mxu0 0.0
        %3970 = vmatprep.subr.mxu0 0.0
        %3971 = vmatpush1.msra.mxu0 0.0
        %3972 = vmatprep.subr.mxu0 0.0
        %3973 = vmatpush1.msra.mxu0 0.0
        %3974 = vmatprep.subr.mxu0 0.0
        %3975 = vmatpush1.msra.mxu0 0.0
        %3976 = vmatprep.subr.mxu0 0.0
        %3977 = vmatpush1.msra.mxu0 0.0
        %3978 = vmatprep.subr.mxu0 0.0
        %3979 = vmatpush1.msra.mxu0 0.0
        %3980 = vmatprep.subr.mxu0 0.0
        %3981 = vmatpush1.msra.mxu0 0.0
        %3982 = vmatprep.subr.mxu0 0.0
        %3983 = vmatpush1.msra.mxu0 0.0
        %3984 = vmatprep.subr.mxu0 0.0
        %3985 = vmatpush1.msra.mxu0 0.0
        %3986 = vmatprep.mubr.f32.mxu0 0.0
        %3987 = vmatmul.mubr.f32.gmra.mrb[0].mxu0 %v3815
        %v3988 = vpop.f32.mrb[0].mxu0
        %v3989 = vadd.f32 0.0, %v3988
        %v3990 = vpop.f32.mrb[0].mxu0
        %3991 = vmatprep.mubr.f32.mxu0 0.0
        %3992 = vmatmul.mubr.f32.gmra.mrb[0].mxu0 %v3818
        %v3993 = vpop.f32.mrb[0].mxu0
        %v3994 = vadd.f32 0.0, %v3993
        %v3995 = vpop.f32.mrb[0].mxu0
        %3996 = vmatprep.mubr.f32.mxu0 0.0
        %3997 = vmatmul.mubr.f32.gmra.mrb[0].mxu0 %v3821
        %v3998 = vpop.f32.mrb[0].mxu0
        %v3999 = vadd.f32 0.0, %v3998
        %v4000 = vpop.f32.mrb[0].mxu0
        %4001 = vmatprep.mubr.f32.mxu0 0.0
        %4002 = vmatmul.mubr.f32.gmra.mrb[0].mxu0 %v3824
        %v4003 = vpop.f32.mrb[0].mxu0
        %v4004 = vadd.f32 0.0, %v4003
        %v4005 = vpop.f32.mrb[0].mxu0
        %4006 = vmatprep.mubr.f32.mxu0 0.0
        %4007 = vmatmul.mubr.f32.gmra.mrb[0].mxu0 %v3827
        %v4008 = vpop.f32.mrb[0].mxu0
        %v4009 = vadd.f32 0.0, %v4008
        %v4010 = vpop.f32.mrb[0].mxu0
        %4011 = vmatprep.mubr.f32.mxu0 0.0
        %4012 = vmatmul.mubr.f32.gmra.mrb[0].mxu0 %v3830
        %v4013 = vpop.f32.mrb[0].mxu0
        %v4014 = vadd.f32 0.0, %v4013
        %v4015 = vpop.f32.mrb[0].mxu0
        %4016 = vmatprep.mubr.f32.mxu0 0.0
        %4017 = vmatmul.mubr.f32.gmra.mrb[0].mxu0 %v3833
        %v4018 = vpop.f32.mrb[0].mxu0
        %v4019 = vadd.f32 0.0, %v4018
        %v4020 = vpop.f32.mrb[0].mxu0
        %4021 = vmatprep.mubr.f32.mxu0 0.0
        %4022 = vmatmul.mubr.f32.gmra.mrb[0].mxu0 %v3836
        %v4023 = vpop.f32.mrb[0].mxu0
        %v4024 = vadd.f32 0.0, %v4023
        %v4025 = vpop.f32.mrb[0].mxu0
        %4026 = vmatprep.mubr.f32.mxu0 0.0
        %4027 = vmatmul.mubr.f32.gmra.mrb[0].mxu0 %v3839
        %v4028 = vpop.f32.mrb[0].mxu0
        %v4029 = vadd.f32 0.0, %v4028
        %v4030 = vpop.f32.mrb[0].mxu0
        %4031 = vmatprep.mubr.f32.mxu0 0.0
        %4032 = vmatmul.mubr.f32.gmra.mrb[0].mxu0 %v3842
        %v4033 = vpop.f32.mrb[0].mxu0
        %v4034 = vadd.f32 0.0, %v4033
        %v4035 = vpop.f32.mrb[0].mxu0
        %4036 = vmatprep.mubr.f32.mxu0 0.0
        %4037 = vmatmul.mubr.f32.gmra.mrb[0].mxu0 %v3845
        %v4038 = vpop.f32.mrb[0].mxu0
        %v4039 = vadd.f32 0.0, %v4038
        %v4040 = vpop.f32.mrb[0].mxu0
        %4041 = vmatprep.mubr.f32.mxu0 0.0
        %4042 = vmatmul.mubr.f32.gmra.mrb[0].mxu0 %v3848
        %v4043 = vpop.f32.mrb[0].mxu0
        %v4044 = vadd.f32 0.0, %v4043
        %v4045 = vpop.f32.mrb[0].mxu0
        %4046 = vmatprep.mubr.f32.mxu0 0.0
        %4047 = vmatmul.mubr.f32.gmra.mrb[0].mxu0 %v3851
        %v4048 = vpop.f32.mrb[0].mxu0
        %v4049 = vadd.f32 0.0, %v4048
        %v4050 = vpop.f32.mrb[0].mxu0
        %4051 = vmatprep.mubr.f32.mxu0 0.0
        %4052 = vmatmul.mubr.f32.gmra.mrb[0].mxu0 %v3854
        %v4053 = vpop.f32.mrb[0].mxu0
        %v4054 = vadd.f32 0.0, %v4053
        %v4055 = vpop.f32.mrb[0].mxu0
        %4056 = vmatprep.mubr.f32.mxu0 0.0
        %4057 = vmatmul.mubr.f32.gmra.mrb[0].mxu0 %v3857
        %v4058 = vpop.f32.mrb[0].mxu0
        %v4059 = vadd.f32 0.0, %v4058
        %v4060 = vpop.f32.mrb[0].mxu0
        %4061 = vmatprep.mubr.f32.mxu0 0.0
        %4062 = vmatmul.mubr.f32.gmra.mrb[0].mxu0 %v3860
        %v4063 = vpop.f32.mrb[0].mxu0
        %v4064 = vadd.f32 0.0, %v4063
        %v4065 = vpop.f32.mrb[0].mxu0
        %4066 = vmatprep.mubr.f32.mxu0 0.0
        %4067 = vmatmul.mubr.f32.gmra.mrb[0].mxu0 %v3863
        %v4068 = vpop.f32.mrb[0].mxu0
        %v4069 = vadd.f32 0.0, %v4068
        %v4070 = vpop.f32.mrb[0].mxu0
        %4071 = vmatprep.mubr.f32.mxu0 0.0
        %4072 = vmatmul.mubr.f32.gmra.mrb[0].mxu0 %v3866
        %v4073 = vpop.f32.mrb[0].mxu0
        %v4074 = vadd.f32 0.0, %v4073
        %v4075 = vpop.f32.mrb[0].mxu0
        %4076 = vmatprep.mubr.f32.mxu0 0.0
        %4077 = vmatmul.mubr.f32.gmra.mrb[0].mxu0 %v3869
        %v4078 = vpop.f32.mrb[0].mxu0
        %v4079 = vadd.f32 0.0, %v4078
        %v4080 = vpop.f32.mrb[0].mxu0
        %4081 = vmatprep.mubr.f32.mxu0 0.0
        %4082 = vmatmul.mubr.f32.gmra.mrb[0].mxu0 %v3872
        %v4083 = vpop.f32.mrb[0].mxu0
        %v4084 = vadd.f32 0.0, %v4083
        %v4085 = vpop.f32.mrb[0].mxu0
        %4086 = vmatprep.mubr.f32.mxu0 0.0
        %4087 = vmatmul.mubr.f32.gmra.mrb[0].mxu0 %v3875
        %v4088 = vpop.f32.mrb[0].mxu0
        %v4089 = vadd.f32 0.0, %v4088
        %v4090 = vpop.f32.mrb[0].mxu0
        %4091 = vmatprep.mubr.f32.mxu0 0.0
        %4092 = vmatmul.mubr.f32.gmra.mrb[0].mxu0 %v3878
        %v4093 = vpop.f32.mrb[0].mxu0
        %v4094 = vadd.f32 0.0, %v4093
        %v4095 = vpop.f32.mrb[0].mxu0
        %4096 = vmatprep.mubr.f32.mxu0 0.0
        %4097 = vmatmul.mubr.f32.gmra.mrb[0].mxu0 %v3881
        %v4098 = vpop.f32.mrb[0].mxu0
        %v4099 = vadd.f32 0.0, %v4098
        %v4100 = vpop.f32.mrb[0].mxu0
        %4101 = vmatprep.mubr.f32.mxu0 0.0
        %4102 = vmatmul.mubr.f32.gmra.mrb[0].mxu0 %v3884
        %v4103 = vpop.f32.mrb[0].mxu0
        %v4104 = vadd.f32 0.0, %v4103
        %v4105 = vpop.f32.mrb[0].mxu0
        %4106 = vmatprep.mubr.f32.mxu0 0.0
        %4107 = vmatmul.mubr.f32.gmra.mrb[0].mxu0 %v3887
        %v4108 = vpop.f32.mrb[0].mxu0
        %v4109 = vadd.f32 0.0, %v4108
        %v4110 = vpop.f32.mrb[0].mxu0
        %4111 = vmatprep.mubr.f32.mxu0 0.0
        %4112 = vmatmul.mubr.f32.gmra.mrb[0].mxu0 %v3890
        %v4113 = vpop.f32.mrb[0].mxu0
        %v4114 = vadd.f32 0.0, %v4113
        %v4115 = vpop.f32.mrb[0].mxu0
        %4116 = vmatprep.mubr.f32.mxu0 0.0
        %4117 = vmatmul.mubr.f32.gmra.mrb[0].mxu0 %v3893
        %v4118 = vpop.f32.mrb[0].mxu0
        %v4119 = vadd.f32 0.0, %v4118
        %v4120 = vpop.f32.mrb[0].mxu0
        %4121 = vmatprep.mubr.f32.mxu0 0.0
        %4122 = vmatmul.mubr.f32.gmra.mrb[0].mxu0 %v3896
        %v4123 = vpop.f32.mrb[0].mxu0
        %v4124 = vadd.f32 0.0, %v4123
        %v4125 = vpop.f32.mrb[0].mxu0
        %4126 = vmatprep.mubr.f32.mxu0 0.0
        %4127 = vmatmul.mubr.f32.gmra.mrb[0].mxu0 %v3899
        %v4128 = vpop.f32.mrb[0].mxu0
        %v4129 = vadd.f32 0.0, %v4128
        %v4130 = vpop.f32.mrb[0].mxu0
        %4131 = vmatprep.mubr.f32.mxu0 0.0
        %4132 = vmatmul.mubr.f32.gmra.mrb[0].mxu0 %v3902
        %v4133 = vpop.f32.mrb[0].mxu0
        %v4134 = vadd.f32 0.0, %v4133
        %v4135 = vpop.f32.mrb[0].mxu0
        %4136 = vmatprep.mubr.f32.mxu0 0.0
        %4137 = vmatmul.mubr.f32.gmra.mrb[0].mxu0 %v3905
        %v4138 = vpop.f32.mrb[0].mxu0
        %v4139 = vadd.f32 0.0, %v4138
        %v4140 = vpop.f32.mrb[0].mxu0
        %4141 = vmatprep.mubr.f32.mxu0 0.0
        %4142 = vmatmul.mubr.f32.gmra.mrb[0].mxu0 %v3908
        %v4143 = vpop.f32.mrb[0].mxu0
        %v4144 = vadd.f32 0.0, %v4143
        %v4145 = vpop.f32.mrb[0].mxu0
        %4146 = vmatprep.mubr.f32.mxu0 0.0
        %4147 = vmatmul.mubr.f32.gmra.mrb[0].mxu0 %v3911
        %v4148 = vpop.f32.mrb[0].mxu0
        %v4149 = vadd.f32 0.0, %v4148
        %v4150 = vpop.f32.mrb[0].mxu0
        %4151 = vmatprep.mubr.f32.mxu0 0.0
        %4152 = vmatmul.mubr.f32.gmra.mrb[0].mxu0 %v3914
        %v4153 = vpop.f32.mrb[0].mxu0
        %v4154 = vadd.f32 0.0, %v4153
        %v4155 = vpop.f32.mrb[0].mxu0
        %4156 = vmatprep.mubr.f32.mxu0 0.0
        %4157 = vmatmul.mubr.f32.gmra.mrb[0].mxu0 %v3917
        %v4158 = vpop.f32.mrb[0].mxu0
        %v4159 = vadd.f32 0.0, %v4158
        %v4160 = vpop.f32.mrb[0].mxu0
        %4161 = vmatprep.mubr.f32.mxu0 0.0
        %4162 = vmatmul.mubr.f32.gmra.mrb[0].mxu0 %v3920
        %v4163 = vpop.f32.mrb[0].mxu0
        %v4164 = vadd.f32 0.0, %v4163
        %v4165 = vpop.f32.mrb[0].mxu0
        %4166 = vdwg.mxu0
        %v4167 = vld [vmem:[#allocation3] sm:$0xff]
        %v4168 = vld [vmem:[#allocation3 + $0x8] sm:$0xff]
        %v4169 = vld [vmem:[#allocation3 + $0x10] sm:$0xff]
        %v4170 = vld [vmem:[#allocation3 + $0x18] sm:$0xff]
        %v4171 = vld [vmem:[#allocation3 + $0x20] sm:$0xff]
        %v4172 = vld [vmem:[#allocation3 + $0x28] sm:$0xff]
        %v4173 = vld [vmem:[#allocation3 + $0x30] sm:$0xff]
        %v4174 = vld [vmem:[#allocation3 + $0x38] sm:$0xff]
        %v4175 = vld [vmem:[#allocation3 + $0x40] sm:$0xff]
        %v4176 = vld [vmem:[#allocation3 + $0x48] sm:$0xff]
        %v4177 = vld [vmem:[#allocation3 + $0x50] sm:$0xff]
        %v4178 = vld [vmem:[#allocation3 + $0x58] sm:$0xff]
        %v4179 = vld [vmem:[#allocation3 + $0x60] sm:$0xff]
        %v4180 = vld [vmem:[#allocation3 + $0x68] sm:$0xff]
        %v4181 = vld [vmem:[#allocation3 + $0x70] sm:$0xff]
        %v4182 = vld [vmem:[#allocation3 + $0x78] sm:$0xff]
        %v4183 = vld [vmem:[#allocation3 + $0x80] sm:$0xff]
        %v4184 = vld [vmem:[#allocation3 + $0x88] sm:$0xff]
        %v4185 = vld [vmem:[#allocation3 + $0x90] sm:$0xff]
        %v4186 = vld [vmem:[#allocation3 + $0x98] sm:$0xff]
        %v4187 = vld [vmem:[#allocation3 + $0xa0] sm:$0xff]
        %v4188 = vld [vmem:[#allocation3 + $0xa8] sm:$0xff]
        %v4189 = vld [vmem:[#allocation3 + $0xb0] sm:$0xff]
        %v4190 = vld [vmem:[#allocation3 + $0xb8] sm:$0xff]
        %v4191 = vld [vmem:[#allocation3 + $0xc0] sm:$0xff]
        %v4192 = vld [vmem:[#allocation3 + $0xc8] sm:$0xff]
        %v4193 = vld [vmem:[#allocation3 + $0xd0] sm:$0xff]
        %v4194 = vld [vmem:[#allocation3 + $0xd8] sm:$0xff]
        %v4195 = vld [vmem:[#allocation3 + $0xe0] sm:$0xff]
        %v4196 = vld [vmem:[#allocation3 + $0xe8] sm:$0xff]
        %v4197 = vld [vmem:[#allocation3 + $0xf0] sm:$0xff]
        %v4198 = vld [vmem:[#allocation3 + $0xf8] sm:$0xff]
        %v4199 = vld [vmem:[#allocation3 + $0x100] sm:$0xff]
        %v4200 = vld [vmem:[#allocation3 + $0x108] sm:$0xff]
        %v4201 = vld [vmem:[#allocation3 + $0x110] sm:$0xff]
        %v4202 = vld [vmem:[#allocation3 + $0x118] sm:$0xff]
        %v4203 = vadd.f32 %v4167, %v3989
        %v4204 = vadd.f32 %v4168, %v3994
        %v4205 = vadd.f32 %v4169, %v3999
        %v4206 = vadd.f32 %v4170, %v4004
        %v4207 = vadd.f32 %v4171, %v4009
        %v4208 = vadd.f32 %v4172, %v4014
        %v4209 = vadd.f32 %v4173, %v4019
        %v4210 = vadd.f32 %v4174, %v4024
        %v4211 = vadd.f32 %v4175, %v4029
        %v4212 = vadd.f32 %v4176, %v4034
        %v4213 = vadd.f32 %v4177, %v4039
        %v4214 = vadd.f32 %v4178, %v4044
        %v4215 = vadd.f32 %v4179, %v4049
        %v4216 = vadd.f32 %v4180, %v4054
        %v4217 = vadd.f32 %v4181, %v4059
        %v4218 = vadd.f32 %v4182, %v4064
        %v4219 = vadd.f32 %v4183, %v4069
        %v4220 = vadd.f32 %v4184, %v4074
        %v4221 = vadd.f32 %v4185, %v4079
        %v4222 = vadd.f32 %v4186, %v4084
        %v4223 = vadd.f32 %v4187, %v4089
        %v4224 = vadd.f32 %v4188, %v4094
        %v4225 = vadd.f32 %v4189, %v4099
        %v4226 = vadd.f32 %v4190, %v4104
        %v4227 = vadd.f32 %v4191, %v4109
        %v4228 = vadd.f32 %v4192, %v4114
        %v4229 = vadd.f32 %v4193, %v4119
        %v4230 = vadd.f32 %v4194, %v4124
        %v4231 = vadd.f32 %v4195, %v4129
        %v4232 = vadd.f32 %v4196, %v4134
        %v4233 = vadd.f32 %v4197, %v4139
        %v4234 = vadd.f32 %v4198, %v4144
        %v4235 = vadd.f32 %v4199, %v4149
        %v4236 = vadd.f32 %v4200, %v4154
        %v4237 = vadd.f32 %v4201, %v4159
        %v4238 = vadd.f32 %v4202, %v4164
        %4239 = vst [vmem:[#allocation3] sm:$0xff] %v4203
        %4240 = vst [vmem:[#allocation3 + $0x8] sm:$0xff] %v4204
        %4241 = vst [vmem:[#allocation3 + $0x10] sm:$0xff] %v4205
        %4242 = vst [vmem:[#allocation3 + $0x18] sm:$0xff] %v4206
        %4243 = vst [vmem:[#allocation3 + $0x20] sm:$0xff] %v4207
        %4244 = vst [vmem:[#allocation3 + $0x28] sm:$0xff] %v4208
        %4245 = vst [vmem:[#allocation3 + $0x30] sm:$0xff] %v4209
        %4246 = vst [vmem:[#allocation3 + $0x38] sm:$0xff] %v4210
        %4247 = vst [vmem:[#allocation3 + $0x40] sm:$0xff] %v4211
        %4248 = vst [vmem:[#allocation3 + $0x48] sm:$0xff] %v4212
        %4249 = vst [vmem:[#allocation3 + $0x50] sm:$0xff] %v4213
        %4250 = vst [vmem:[#allocation3 + $0x58] sm:$0xff] %v4214
        %4251 = vst [vmem:[#allocation3 + $0x60] sm:$0xff] %v4215
        %4252 = vst [vmem:[#allocation3 + $0x68] sm:$0xff] %v4216
        %4253 = vst [vmem:[#allocation3 + $0x70] sm:$0xff] %v4217
        %4254 = vst [vmem:[#allocation3 + $0x78] sm:$0xff] %v4218
        %4255 = vst [vmem:[#allocation3 + $0x80] sm:$0xff] %v4219
        %4256 = vst [vmem:[#allocation3 + $0x88] sm:$0xff] %v4220
        %4257 = vst [vmem:[#allocation3 + $0x90] sm:$0xff] %v4221
        %4258 = vst [vmem:[#allocation3 + $0x98] sm:$0xff] %v4222
        %4259 = vst [vmem:[#allocation3 + $0xa0] sm:$0xff] %v4223
        %4260 = vst [vmem:[#allocation3 + $0xa8] sm:$0xff] %v4224
        %4261 = vst [vmem:[#allocation3 + $0xb0] sm:$0xff] %v4225
        %4262 = vst [vmem:[#allocation3 + $0xb8] sm:$0xff] %v4226
        %4263 = vst [vmem:[#allocation3 + $0xc0] sm:$0xff] %v4227
        %4264 = vst [vmem:[#allocation3 + $0xc8] sm:$0xff] %v4228
        %4265 = vst [vmem:[#allocation3 + $0xd0] sm:$0xff] %v4229
        %4266 = vst [vmem:[#allocation3 + $0xd8] sm:$0xff] %v4230
        %4267 = vst [vmem:[#allocation3 + $0xe0] sm:$0xff] %v4231
        %4268 = vst [vmem:[#allocation3 + $0xe8] sm:$0xff] %v4232
        %4269 = vst [vmem:[#allocation3 + $0xf0] sm:$0xff] %v4233
        %4270 = vst [vmem:[#allocation3 + $0xf8] sm:$0xff] %v4234
        %4271 = vst [vmem:[#allocation3 + $0x100] sm:$0xff] %v4235
        %4272 = vst [vmem:[#allocation3 + $0x108] sm:$0xff] %v4236
        %4273 = vst [vmem:[#allocation3 + $0x110] sm:$0xff] %v4237
        %4274 = vst [vmem:[#allocation3 + $0x118] sm:$0xff] %v4238
        %v4275 = vld [vmem:[#allocation2 + $0x26] sm:$0xff]
        %v4276 = vld [vmem:[#allocation2 + $0x2e] sm:$0xff]
        %v4277 = vld [vmem:[#allocation2 + $0x36] sm:$0xff]
        %v4278 = vld [vmem:[#allocation2 + $0x3e] sm:$0xff]
        %v4279 = vld [vmem:[#allocation2 + $0x46] sm:$0xff]
        %v4280 = vld [vmem:[#allocation2 + $0x4e] sm:$0xff]
        %v4281 = vld [vmem:[#allocation2 + $0x56] sm:$0xff]
        %v4282 = vld [vmem:[#allocation2 + $0x5e] sm:$0xff]
        %v4283 = vld [vmem:[#allocation2 + $0x66] sm:$0xff]
        %v4284 = vld [vmem:[#allocation2 + $0x6e] sm:$0xff]
        %v4285 = vld [vmem:[#allocation2 + $0x76] sm:$0xff]
        %v4286 = vld [vmem:[#allocation2 + $0x7e] sm:$0xff]
        %v4287 = vld [vmem:[#allocation2 + $0x86] sm:$0xff]
        %v4288 = vld [vmem:[#allocation2 + $0x8e] sm:$0xff]
        %v4289 = vld [vmem:[#allocation2 + $0x96] sm:$0xff]
        %v4290 = vld [vmem:[#allocation2 + $0x9e] sm:$0xff]
        %v4291 = vld [vmem:[#allocation2 + $0xa6] sm:$0xff]
        %v4292 = vld [vmem:[#allocation2 + $0xae] sm:$0xff]
        %v4293 = vld [vmem:[#allocation2 + $0xb6] sm:$0xff]
        %v4294 = vld [vmem:[#allocation2 + $0xbe] sm:$0xff]
        %v4295 = vld [vmem:[#allocation2 + $0xc6] sm:$0xff]
        %v4296 = vld [vmem:[#allocation2 + $0xce] sm:$0xff]
        %v4297 = vld [vmem:[#allocation2 + $0xd6] sm:$0xff]
        %v4298 = vld [vmem:[#allocation2 + $0xde] sm:$0xff]
        %v4299 = vld [vmem:[#allocation2 + $0xe6] sm:$0xff]
        %v4300 = vld [vmem:[#allocation2 + $0xee] sm:$0xff]
        %v4301 = vld [vmem:[#allocation2 + $0xf6] sm:$0xff]
        %v4302 = vld [vmem:[#allocation2 + $0xfe] sm:$0xff]
        %v4303 = vld [vmem:[#allocation2 + $0x106] sm:$0xff]
        %v4304 = vld [vmem:[#allocation2 + $0x10e] sm:$0xff]
        %v4305 = vld [vmem:[#allocation2 + $0x116] sm:$0xff]
        %v4306 = vld [vmem:[#allocation2 + $0x11e] sm:$0xff]
        %v4307 = vld [vmem:[#allocation2 + $0x126] sm:$0xff]
        %v4308 = vld [vmem:[#allocation2 + $0x12e] sm:$0xff]
        %v4309 = vld [vmem:[#allocation2 + $0x136] sm:$0xff]
        %v4310 = vld [vmem:[#allocation2 + $0x13e] sm:$0xff]
        %s4311 = scalar_lea.vmem %s2, 64
        %v4312 = vld [vmem:[%s4311] sm:$0xff]
        %v4314 = vsel %vm313, %v4275, 0
        %v4317 = vsel %vm313, %v4276, 0
        %v4320 = vsel %vm313, %v4277, 0
        %v4323 = vsel %vm313, %v4278, 0
        %v4326 = vsel %vm313, %v4279, 0
        %v4329 = vsel %vm313, %v4280, 0
        %v4332 = vsel %vm313, %v4281, 0
        %v4335 = vsel %vm313, %v4282, 0
        %v4338 = vsel %vm313, %v4283, 0
        %v4341 = vsel %vm313, %v4284, 0
        %v4344 = vsel %vm313, %v4285, 0
        %v4347 = vsel %vm313, %v4286, 0
        %v4350 = vsel %vm313, %v4287, 0
        %v4353 = vsel %vm313, %v4288, 0
        %v4356 = vsel %vm313, %v4289, 0
        %v4359 = vsel %vm313, %v4290, 0
        %v4362 = vsel %vm313, %v4291, 0
        %v4365 = vsel %vm313, %v4292, 0
        %v4368 = vsel %vm313, %v4293, 0
        %v4371 = vsel %vm313, %v4294, 0
        %v4374 = vsel %vm313, %v4295, 0
        %v4377 = vsel %vm313, %v4296, 0
        %v4380 = vsel %vm313, %v4297, 0
        %v4383 = vsel %vm313, %v4298, 0
        %v4386 = vsel %vm313, %v4299, 0
        %v4389 = vsel %vm313, %v4300, 0
        %v4392 = vsel %vm313, %v4301, 0
        %v4395 = vsel %vm313, %v4302, 0
        %v4398 = vsel %vm313, %v4303, 0
        %v4401 = vsel %vm313, %v4304, 0
        %v4404 = vsel %vm313, %v4305, 0
        %v4407 = vsel %vm313, %v4306, 0
        %v4410 = vsel %vm313, %v4307, 0
        %v4413 = vsel %vm313, %v4308, 0
        %v4416 = vsel %vm313, %v4309, 0
        %v4419 = vsel %vm313, %v4310, 0
        %4421 = vmatprep.subr.mxu0 0.0
        %4422 = vmatpush1.msra.mxu0 %v4312
        %4423 = vmatprep.subr.mxu0 0.0
        %4424 = vmatpush1.msra.mxu0 0.0
        %4425 = vmatprep.subr.mxu0 0.0
        %4426 = vmatpush1.msra.mxu0 0.0
        %4427 = vmatprep.subr.mxu0 0.0
        %4428 = vmatpush1.msra.mxu0 0.0
        %4429 = vmatprep.subr.mxu0 0.0
        %4430 = vmatpush1.msra.mxu0 0.0
        %4431 = vmatprep.subr.mxu0 0.0
        %4432 = vmatpush1.msra.mxu0 0.0
        %4433 = vmatprep.subr.mxu0 0.0
        %4434 = vmatpush1.msra.mxu0 0.0
        %4435 = vmatprep.subr.mxu0 0.0
        %4436 = vmatpush1.msra.mxu0 0.0
        %4437 = vmatprep.subr.mxu0 0.0
        %4438 = vmatpush1.msra.mxu0 0.0
        %4439 = vmatprep.subr.mxu0 0.0
        %4440 = vmatpush1.msra.mxu0 0.0
        %4441 = vmatprep.subr.mxu0 0.0
        %4442 = vmatpush1.msra.mxu0 0.0
        %4443 = vmatprep.subr.mxu0 0.0
        %4444 = vmatpush1.msra.mxu0 0.0
        %4445 = vmatprep.subr.mxu0 0.0
        %4446 = vmatpush1.msra.mxu0 0.0
        %4447 = vmatprep.subr.mxu0 0.0
        %4448 = vmatpush1.msra.mxu0 0.0
        %4449 = vmatprep.subr.mxu0 0.0
        %4450 = vmatpush1.msra.mxu0 0.0
        %4451 = vmatprep.subr.mxu0 0.0
        %4452 = vmatpush1.msra.mxu0 0.0
        %4453 = vmatprep.subr.mxu0 0.0
        %4454 = vmatpush1.msra.mxu0 0.0
        %4455 = vmatprep.subr.mxu0 0.0
        %4456 = vmatpush1.msra.mxu0 0.0
        %4457 = vmatprep.subr.mxu0 0.0
        %4458 = vmatpush1.msra.mxu0 0.0
        %4459 = vmatprep.subr.mxu0 0.0
        %4460 = vmatpush1.msra.mxu0 0.0
        %4461 = vmatprep.subr.mxu0 0.0
        %4462 = vmatpush1.msra.mxu0 0.0
        %4463 = vmatprep.subr.mxu0 0.0
        %4464 = vmatpush1.msra.mxu0 0.0
        %4465 = vmatprep.subr.mxu0 0.0
        %4466 = vmatpush1.msra.mxu0 0.0
        %4467 = vmatprep.subr.mxu0 0.0
        %4468 = vmatpush1.msra.mxu0 0.0
        %4469 = vmatprep.subr.mxu0 0.0
        %4470 = vmatpush1.msra.mxu0 0.0
        %4471 = vmatprep.subr.mxu0 0.0
        %4472 = vmatpush1.msra.mxu0 0.0
        %4473 = vmatprep.subr.mxu0 0.0
        %4474 = vmatpush1.msra.mxu0 0.0
        %4475 = vmatprep.subr.mxu0 0.0
        %4476 = vmatpush1.msra.mxu0 0.0
        %4477 = vmatprep.subr.mxu0 0.0
        %4478 = vmatpush1.msra.mxu0 0.0
        %4479 = vmatprep.subr.mxu0 0.0
        %4480 = vmatpush1.msra.mxu0 0.0
        %4481 = vmatprep.subr.mxu0 0.0
        %4482 = vmatpush1.msra.mxu0 0.0
        %4483 = vmatprep.subr.mxu0 0.0
        %4484 = vmatpush1.msra.mxu0 0.0
        %4485 = vmatprep.mubr.f32.mxu0 0.0
        %4486 = vmatmul.mubr.f32.gmra.mrb[0].mxu0 %v4314
        %v4487 = vpop.f32.mrb[0].mxu0
        %v4488 = vadd.f32 0.0, %v4487
        %v4489 = vpop.f32.mrb[0].mxu0
        %4490 = vmatprep.mubr.f32.mxu0 0.0
        %4491 = vmatmul.mubr.f32.gmra.mrb[0].mxu0 %v4317
        %v4492 = vpop.f32.mrb[0].mxu0
        %v4493 = vadd.f32 0.0, %v4492
        %v4494 = vpop.f32.mrb[0].mxu0
        %4495 = vmatprep.mubr.f32.mxu0 0.0
        %4496 = vmatmul.mubr.f32.gmra.mrb[0].mxu0 %v4320
        %v4497 = vpop.f32.mrb[0].mxu0
        %v4498 = vadd.f32 0.0, %v4497
        %v4499 = vpop.f32.mrb[0].mxu0
        %4500 = vmatprep.mubr.f32.mxu0 0.0
        %4501 = vmatmul.mubr.f32.gmra.mrb[0].mxu0 %v4323
        %v4502 = vpop.f32.mrb[0].mxu0
        %v4503 = vadd.f32 0.0, %v4502
        %v4504 = vpop.f32.mrb[0].mxu0
        %4505 = vmatprep.mubr.f32.mxu0 0.0
        %4506 = vmatmul.mubr.f32.gmra.mrb[0].mxu0 %v4326
        %v4507 = vpop.f32.mrb[0].mxu0
        %v4508 = vadd.f32 0.0, %v4507
        %v4509 = vpop.f32.mrb[0].mxu0
        %4510 = vmatprep.mubr.f32.mxu0 0.0
        %4511 = vmatmul.mubr.f32.gmra.mrb[0].mxu0 %v4329
        %v4512 = vpop.f32.mrb[0].mxu0
        %v4513 = vadd.f32 0.0, %v4512
        %v4514 = vpop.f32.mrb[0].mxu0
        %4515 = vmatprep.mubr.f32.mxu0 0.0
        %4516 = vmatmul.mubr.f32.gmra.mrb[0].mxu0 %v4332
        %v4517 = vpop.f32.mrb[0].mxu0
        %v4518 = vadd.f32 0.0, %v4517
        %v4519 = vpop.f32.mrb[0].mxu0
        %4520 = vmatprep.mubr.f32.mxu0 0.0
        %4521 = vmatmul.mubr.f32.gmra.mrb[0].mxu0 %v4335
        %v4522 = vpop.f32.mrb[0].mxu0
        %v4523 = vadd.f32 0.0, %v4522
        %v4524 = vpop.f32.mrb[0].mxu0
        %4525 = vmatprep.mubr.f32.mxu0 0.0
        %4526 = vmatmul.mubr.f32.gmra.mrb[0].mxu0 %v4338
        %v4527 = vpop.f32.mrb[0].mxu0
        %v4528 = vadd.f32 0.0, %v4527
        %v4529 = vpop.f32.mrb[0].mxu0
        %4530 = vmatprep.mubr.f32.mxu0 0.0
        %4531 = vmatmul.mubr.f32.gmra.mrb[0].mxu0 %v4341
        %v4532 = vpop.f32.mrb[0].mxu0
        %v4533 = vadd.f32 0.0, %v4532
        %v4534 = vpop.f32.mrb[0].mxu0
        %4535 = vmatprep.mubr.f32.mxu0 0.0
        %4536 = vmatmul.mubr.f32.gmra.mrb[0].mxu0 %v4344
        %v4537 = vpop.f32.mrb[0].mxu0
        %v4538 = vadd.f32 0.0, %v4537
        %v4539 = vpop.f32.mrb[0].mxu0
        %4540 = vmatprep.mubr.f32.mxu0 0.0
        %4541 = vmatmul.mubr.f32.gmra.mrb[0].mxu0 %v4347
        %v4542 = vpop.f32.mrb[0].mxu0
        %v4543 = vadd.f32 0.0, %v4542
        %v4544 = vpop.f32.mrb[0].mxu0
        %4545 = vmatprep.mubr.f32.mxu0 0.0
        %4546 = vmatmul.mubr.f32.gmra.mrb[0].mxu0 %v4350
        %v4547 = vpop.f32.mrb[0].mxu0
        %v4548 = vadd.f32 0.0, %v4547
        %v4549 = vpop.f32.mrb[0].mxu0
        %4550 = vmatprep.mubr.f32.mxu0 0.0
        %4551 = vmatmul.mubr.f32.gmra.mrb[0].mxu0 %v4353
        %v4552 = vpop.f32.mrb[0].mxu0
        %v4553 = vadd.f32 0.0, %v4552
        %v4554 = vpop.f32.mrb[0].mxu0
        %4555 = vmatprep.mubr.f32.mxu0 0.0
        %4556 = vmatmul.mubr.f32.gmra.mrb[0].mxu0 %v4356
        %v4557 = vpop.f32.mrb[0].mxu0
        %v4558 = vadd.f32 0.0, %v4557
        %v4559 = vpop.f32.mrb[0].mxu0
        %4560 = vmatprep.mubr.f32.mxu0 0.0
        %4561 = vmatmul.mubr.f32.gmra.mrb[0].mxu0 %v4359
        %v4562 = vpop.f32.mrb[0].mxu0
        %v4563 = vadd.f32 0.0, %v4562
        %v4564 = vpop.f32.mrb[0].mxu0
        %4565 = vmatprep.mubr.f32.mxu0 0.0
        %4566 = vmatmul.mubr.f32.gmra.mrb[0].mxu0 %v4362
        %v4567 = vpop.f32.mrb[0].mxu0
        %v4568 = vadd.f32 0.0, %v4567
        %v4569 = vpop.f32.mrb[0].mxu0
        %4570 = vmatprep.mubr.f32.mxu0 0.0
        %4571 = vmatmul.mubr.f32.gmra.mrb[0].mxu0 %v4365
        %v4572 = vpop.f32.mrb[0].mxu0
        %v4573 = vadd.f32 0.0, %v4572
        %v4574 = vpop.f32.mrb[0].mxu0
        %4575 = vmatprep.mubr.f32.mxu0 0.0
        %4576 = vmatmul.mubr.f32.gmra.mrb[0].mxu0 %v4368
        %v4577 = vpop.f32.mrb[0].mxu0
        %v4578 = vadd.f32 0.0, %v4577
        %v4579 = vpop.f32.mrb[0].mxu0
        %4580 = vmatprep.mubr.f32.mxu0 0.0
        %4581 = vmatmul.mubr.f32.gmra.mrb[0].mxu0 %v4371
        %v4582 = vpop.f32.mrb[0].mxu0
        %v4583 = vadd.f32 0.0, %v4582
        %v4584 = vpop.f32.mrb[0].mxu0
        %4585 = vmatprep.mubr.f32.mxu0 0.0
        %4586 = vmatmul.mubr.f32.gmra.mrb[0].mxu0 %v4374
        %v4587 = vpop.f32.mrb[0].mxu0
        %v4588 = vadd.f32 0.0, %v4587
        %v4589 = vpop.f32.mrb[0].mxu0
        %4590 = vmatprep.mubr.f32.mxu0 0.0
        %4591 = vmatmul.mubr.f32.gmra.mrb[0].mxu0 %v4377
        %v4592 = vpop.f32.mrb[0].mxu0
        %v4593 = vadd.f32 0.0, %v4592
        %v4594 = vpop.f32.mrb[0].mxu0
        %4595 = vmatprep.mubr.f32.mxu0 0.0
        %4596 = vmatmul.mubr.f32.gmra.mrb[0].mxu0 %v4380
        %v4597 = vpop.f32.mrb[0].mxu0
        %v4598 = vadd.f32 0.0, %v4597
        %v4599 = vpop.f32.mrb[0].mxu0
        %4600 = vmatprep.mubr.f32.mxu0 0.0
        %4601 = vmatmul.mubr.f32.gmra.mrb[0].mxu0 %v4383
        %v4602 = vpop.f32.mrb[0].mxu0
        %v4603 = vadd.f32 0.0, %v4602
        %v4604 = vpop.f32.mrb[0].mxu0
        %4605 = vmatprep.mubr.f32.mxu0 0.0
        %4606 = vmatmul.mubr.f32.gmra.mrb[0].mxu0 %v4386
        %v4607 = vpop.f32.mrb[0].mxu0
        %v4608 = vadd.f32 0.0, %v4607
        %v4609 = vpop.f32.mrb[0].mxu0
        %4610 = vmatprep.mubr.f32.mxu0 0.0
        %4611 = vmatmul.mubr.f32.gmra.mrb[0].mxu0 %v4389
        %v4612 = vpop.f32.mrb[0].mxu0
        %v4613 = vadd.f32 0.0, %v4612
        %v4614 = vpop.f32.mrb[0].mxu0
        %4615 = vmatprep.mubr.f32.mxu0 0.0
        %4616 = vmatmul.mubr.f32.gmra.mrb[0].mxu0 %v4392
        %v4617 = vpop.f32.mrb[0].mxu0
        %v4618 = vadd.f32 0.0, %v4617
        %v4619 = vpop.f32.mrb[0].mxu0
        %4620 = vmatprep.mubr.f32.mxu0 0.0
        %4621 = vmatmul.mubr.f32.gmra.mrb[0].mxu0 %v4395
        %v4622 = vpop.f32.mrb[0].mxu0
        %v4623 = vadd.f32 0.0, %v4622
        %v4624 = vpop.f32.mrb[0].mxu0
        %4625 = vmatprep.mubr.f32.mxu0 0.0
        %4626 = vmatmul.mubr.f32.gmra.mrb[0].mxu0 %v4398
        %v4627 = vpop.f32.mrb[0].mxu0
        %v4628 = vadd.f32 0.0, %v4627
        %v4629 = vpop.f32.mrb[0].mxu0
        %4630 = vmatprep.mubr.f32.mxu0 0.0
        %4631 = vmatmul.mubr.f32.gmra.mrb[0].mxu0 %v4401
        %v4632 = vpop.f32.mrb[0].mxu0
        %v4633 = vadd.f32 0.0, %v4632
        %v4634 = vpop.f32.mrb[0].mxu0
        %4635 = vmatprep.mubr.f32.mxu0 0.0
        %4636 = vmatmul.mubr.f32.gmra.mrb[0].mxu0 %v4404
        %v4637 = vpop.f32.mrb[0].mxu0
        %v4638 = vadd.f32 0.0, %v4637
        %v4639 = vpop.f32.mrb[0].mxu0
        %4640 = vmatprep.mubr.f32.mxu0 0.0
        %4641 = vmatmul.mubr.f32.gmra.mrb[0].mxu0 %v4407
        %v4642 = vpop.f32.mrb[0].mxu0
        %v4643 = vadd.f32 0.0, %v4642
        %v4644 = vpop.f32.mrb[0].mxu0
        %4645 = vmatprep.mubr.f32.mxu0 0.0
        %4646 = vmatmul.mubr.f32.gmra.mrb[0].mxu0 %v4410
        %v4647 = vpop.f32.mrb[0].mxu0
        %v4648 = vadd.f32 0.0, %v4647
        %v4649 = vpop.f32.mrb[0].mxu0
        %4650 = vmatprep.mubr.f32.mxu0 0.0
        %4651 = vmatmul.mubr.f32.gmra.mrb[0].mxu0 %v4413
        %v4652 = vpop.f32.mrb[0].mxu0
        %v4653 = vadd.f32 0.0, %v4652
        %v4654 = vpop.f32.mrb[0].mxu0
        %4655 = vmatprep.mubr.f32.mxu0 0.0
        %4656 = vmatmul.mubr.f32.gmra.mrb[0].mxu0 %v4416
        %v4657 = vpop.f32.mrb[0].mxu0
        %v4658 = vadd.f32 0.0, %v4657
        %v4659 = vpop.f32.mrb[0].mxu0
        %4660 = vmatprep.mubr.f32.mxu0 0.0
        %4661 = vmatmul.mubr.f32.gmra.mrb[0].mxu0 %v4419
        %v4662 = vpop.f32.mrb[0].mxu0
        %v4663 = vadd.f32 0.0, %v4662
        %v4664 = vpop.f32.mrb[0].mxu0
        %4665 = vdwg.mxu0
        %v4666 = vld [vmem:[#allocation3] sm:$0xff]
        %v4667 = vld [vmem:[#allocation3 + $0x8] sm:$0xff]
        %v4668 = vld [vmem:[#allocation3 + $0x10] sm:$0xff]
        %v4669 = vld [vmem:[#allocation3 + $0x18] sm:$0xff]
        %v4670 = vld [vmem:[#allocation3 + $0x20] sm:$0xff]
        %v4671 = vld [vmem:[#allocation3 + $0x28] sm:$0xff]
        %v4672 = vld [vmem:[#allocation3 + $0x30] sm:$0xff]
        %v4673 = vld [vmem:[#allocation3 + $0x38] sm:$0xff]
        %v4674 = vld [vmem:[#allocation3 + $0x40] sm:$0xff]
        %v4675 = vld [vmem:[#allocation3 + $0x48] sm:$0xff]
        %v4676 = vld [vmem:[#allocation3 + $0x50] sm:$0xff]
        %v4677 = vld [vmem:[#allocation3 + $0x58] sm:$0xff]
        %v4678 = vld [vmem:[#allocation3 + $0x60] sm:$0xff]
        %v4679 = vld [vmem:[#allocation3 + $0x68] sm:$0xff]
        %v4680 = vld [vmem:[#allocation3 + $0x70] sm:$0xff]
        %v4681 = vld [vmem:[#allocation3 + $0x78] sm:$0xff]
        %v4682 = vld [vmem:[#allocation3 + $0x80] sm:$0xff]
        %v4683 = vld [vmem:[#allocation3 + $0x88] sm:$0xff]
        %v4684 = vld [vmem:[#allocation3 + $0x90] sm:$0xff]
        %v4685 = vld [vmem:[#allocation3 + $0x98] sm:$0xff]
        %v4686 = vld [vmem:[#allocation3 + $0xa0] sm:$0xff]
        %v4687 = vld [vmem:[#allocation3 + $0xa8] sm:$0xff]
        %v4688 = vld [vmem:[#allocation3 + $0xb0] sm:$0xff]
        %v4689 = vld [vmem:[#allocation3 + $0xb8] sm:$0xff]
        %v4690 = vld [vmem:[#allocation3 + $0xc0] sm:$0xff]
        %v4691 = vld [vmem:[#allocation3 + $0xc8] sm:$0xff]
        %v4692 = vld [vmem:[#allocation3 + $0xd0] sm:$0xff]
        %v4693 = vld [vmem:[#allocation3 + $0xd8] sm:$0xff]
        %v4694 = vld [vmem:[#allocation3 + $0xe0] sm:$0xff]
        %v4695 = vld [vmem:[#allocation3 + $0xe8] sm:$0xff]
        %v4696 = vld [vmem:[#allocation3 + $0xf0] sm:$0xff]
        %v4697 = vld [vmem:[#allocation3 + $0xf8] sm:$0xff]
        %v4698 = vld [vmem:[#allocation3 + $0x100] sm:$0xff]
        %v4699 = vld [vmem:[#allocation3 + $0x108] sm:$0xff]
        %v4700 = vld [vmem:[#allocation3 + $0x110] sm:$0xff]
        %v4701 = vld [vmem:[#allocation3 + $0x118] sm:$0xff]
        %v4702 = vadd.f32 %v4666, %v4488
        %v4703 = vadd.f32 %v4667, %v4493
        %v4704 = vadd.f32 %v4668, %v4498
        %v4705 = vadd.f32 %v4669, %v4503
        %v4706 = vadd.f32 %v4670, %v4508
        %v4707 = vadd.f32 %v4671, %v4513
        %v4708 = vadd.f32 %v4672, %v4518
        %v4709 = vadd.f32 %v4673, %v4523
        %v4710 = vadd.f32 %v4674, %v4528
        %v4711 = vadd.f32 %v4675, %v4533
        %v4712 = vadd.f32 %v4676, %v4538
        %v4713 = vadd.f32 %v4677, %v4543
        %v4714 = vadd.f32 %v4678, %v4548
        %v4715 = vadd.f32 %v4679, %v4553
        %v4716 = vadd.f32 %v4680, %v4558
        %v4717 = vadd.f32 %v4681, %v4563
        %v4718 = vadd.f32 %v4682, %v4568
        %v4719 = vadd.f32 %v4683, %v4573
        %v4720 = vadd.f32 %v4684, %v4578
        %v4721 = vadd.f32 %v4685, %v4583
        %v4722 = vadd.f32 %v4686, %v4588
        %v4723 = vadd.f32 %v4687, %v4593
        %v4724 = vadd.f32 %v4688, %v4598
        %v4725 = vadd.f32 %v4689, %v4603
        %v4726 = vadd.f32 %v4690, %v4608
        %v4727 = vadd.f32 %v4691, %v4613
        %v4728 = vadd.f32 %v4692, %v4618
        %v4729 = vadd.f32 %v4693, %v4623
        %v4730 = vadd.f32 %v4694, %v4628
        %v4731 = vadd.f32 %v4695, %v4633
        %v4732 = vadd.f32 %v4696, %v4638
        %v4733 = vadd.f32 %v4697, %v4643
        %v4734 = vadd.f32 %v4698, %v4648
        %v4735 = vadd.f32 %v4699, %v4653
        %v4736 = vadd.f32 %v4700, %v4658
        %v4737 = vadd.f32 %v4701, %v4663
        %4738 = vst [vmem:[#allocation3] sm:$0xff] %v4702
        %4739 = vst [vmem:[#allocation3 + $0x8] sm:$0xff] %v4703
        %4740 = vst [vmem:[#allocation3 + $0x10] sm:$0xff] %v4704
        %4741 = vst [vmem:[#allocation3 + $0x18] sm:$0xff] %v4705
        %4742 = vst [vmem:[#allocation3 + $0x20] sm:$0xff] %v4706
        %4743 = vst [vmem:[#allocation3 + $0x28] sm:$0xff] %v4707
        %4744 = vst [vmem:[#allocation3 + $0x30] sm:$0xff] %v4708
        %4745 = vst [vmem:[#allocation3 + $0x38] sm:$0xff] %v4709
        %4746 = vst [vmem:[#allocation3 + $0x40] sm:$0xff] %v4710
        %4747 = vst [vmem:[#allocation3 + $0x48] sm:$0xff] %v4711
        %4748 = vst [vmem:[#allocation3 + $0x50] sm:$0xff] %v4712
        %4749 = vst [vmem:[#allocation3 + $0x58] sm:$0xff] %v4713
        %4750 = vst [vmem:[#allocation3 + $0x60] sm:$0xff] %v4714
        %4751 = vst [vmem:[#allocation3 + $0x68] sm:$0xff] %v4715
        %4752 = vst [vmem:[#allocation3 + $0x70] sm:$0xff] %v4716
        %4753 = vst [vmem:[#allocation3 + $0x78] sm:$0xff] %v4717
        %4754 = vst [vmem:[#allocation3 + $0x80] sm:$0xff] %v4718
        %4755 = vst [vmem:[#allocation3 + $0x88] sm:$0xff] %v4719
        %4756 = vst [vmem:[#allocation3 + $0x90] sm:$0xff] %v4720
        %4757 = vst [vmem:[#allocation3 + $0x98] sm:$0xff] %v4721
        %4758 = vst [vmem:[#allocation3 + $0xa0] sm:$0xff] %v4722
        %4759 = vst [vmem:[#allocation3 + $0xa8] sm:$0xff] %v4723
        %4760 = vst [vmem:[#allocation3 + $0xb0] sm:$0xff] %v4724
        %4761 = vst [vmem:[#allocation3 + $0xb8] sm:$0xff] %v4725
        %4762 = vst [vmem:[#allocation3 + $0xc0] sm:$0xff] %v4726
        %4763 = vst [vmem:[#allocation3 + $0xc8] sm:$0xff] %v4727
        %4764 = vst [vmem:[#allocation3 + $0xd0] sm:$0xff] %v4728
        %4765 = vst [vmem:[#allocation3 + $0xd8] sm:$0xff] %v4729
        %4766 = vst [vmem:[#allocation3 + $0xe0] sm:$0xff] %v4730
        %4767 = vst [vmem:[#allocation3 + $0xe8] sm:$0xff] %v4731
        %4768 = vst [vmem:[#allocation3 + $0xf0] sm:$0xff] %v4732
        %4769 = vst [vmem:[#allocation3 + $0xf8] sm:$0xff] %v4733
        %4770 = vst [vmem:[#allocation3 + $0x100] sm:$0xff] %v4734
        %4771 = vst [vmem:[#allocation3 + $0x108] sm:$0xff] %v4735
        %4772 = vst [vmem:[#allocation3 + $0x110] sm:$0xff] %v4736
        %4773 = vst [vmem:[#allocation3 + $0x118] sm:$0xff] %v4737
        %v4774 = vld [vmem:[#allocation3] sm:$0xff]
        %v4775 = vld [vmem:[#allocation3 + $0x8] sm:$0xff]
        %v4776 = vld [vmem:[#allocation3 + $0x10] sm:$0xff]
        %v4777 = vld [vmem:[#allocation3 + $0x18] sm:$0xff]
        %v4778 = vld [vmem:[#allocation3 + $0x20] sm:$0xff]
        %v4779 = vld [vmem:[#allocation3 + $0x28] sm:$0xff]
        %v4780 = vld [vmem:[#allocation3 + $0x30] sm:$0xff]
        %v4781 = vld [vmem:[#allocation3 + $0x38] sm:$0xff]
        %v4782 = vld [vmem:[#allocation3 + $0x40] sm:$0xff]
        %v4783 = vld [vmem:[#allocation3 + $0x48] sm:$0xff]
        %v4784 = vld [vmem:[#allocation3 + $0x50] sm:$0xff]
        %v4785 = vld [vmem:[#allocation3 + $0x58] sm:$0xff]
        %v4786 = vld [vmem:[#allocation3 + $0x60] sm:$0xff]
        %v4787 = vld [vmem:[#allocation3 + $0x68] sm:$0xff]
        %v4788 = vld [vmem:[#allocation3 + $0x70] sm:$0xff]
        %v4789 = vld [vmem:[#allocation3 + $0x78] sm:$0xff]
        %v4790 = vld [vmem:[#allocation3 + $0x80] sm:$0xff]
        %v4791 = vld [vmem:[#allocation3 + $0x88] sm:$0xff]
        %v4792 = vld [vmem:[#allocation3 + $0x90] sm:$0xff]
        %v4793 = vld [vmem:[#allocation3 + $0x98] sm:$0xff]
        %v4794 = vld [vmem:[#allocation3 + $0xa0] sm:$0xff]
        %v4795 = vld [vmem:[#allocation3 + $0xa8] sm:$0xff]
        %v4796 = vld [vmem:[#allocation3 + $0xb0] sm:$0xff]
        %v4797 = vld [vmem:[#allocation3 + $0xb8] sm:$0xff]
        %v4798 = vld [vmem:[#allocation3 + $0xc0] sm:$0xff]
        %v4799 = vld [vmem:[#allocation3 + $0xc8] sm:$0xff]
        %v4800 = vld [vmem:[#allocation3 + $0xd0] sm:$0xff]
        %v4801 = vld [vmem:[#allocation3 + $0xd8] sm:$0xff]
        %v4802 = vld [vmem:[#allocation3 + $0xe0] sm:$0xff]
        %v4803 = vld [vmem:[#allocation3 + $0xe8] sm:$0xff]
        %v4804 = vld [vmem:[#allocation3 + $0xf0] sm:$0xff]
        %v4805 = vld [vmem:[#allocation3 + $0xf8] sm:$0xff]
        %v4806 = vld [vmem:[#allocation3 + $0x100] sm:$0xff]
        %v4807 = vld [vmem:[#allocation3 + $0x108] sm:$0xff]
        %v4808 = vld [vmem:[#allocation3 + $0x110] sm:$0xff]
        %v4809 = vld [vmem:[#allocation3 + $0x118] sm:$0xff]
        %v4810 = vld [vmem:[%s218] sm:$0x1]
        %v4812 = vlaneseq
        %v4813 = vshrl.u32 %v4812, 7
        %v4814 = vsub.s32 0, %v4813
        %v4815 = vrot.slane %v4810, %v4814
        %v4817 = vmul.f32 %v4774, %v4815
        %v4818 = vmul.f32 %v4775, %v4815
        %v4819 = vmul.f32 %v4776, %v4815
        %v4820 = vmul.f32 %v4777, %v4815
        %v4821 = vmul.f32 %v4778, %v4815
        %v4822 = vmul.f32 %v4779, %v4815
        %v4823 = vmul.f32 %v4780, %v4815
        %v4824 = vmul.f32 %v4781, %v4815
        %v4825 = vmul.f32 %v4782, %v4815
        %v4826 = vmul.f32 %v4783, %v4815
        %v4827 = vmul.f32 %v4784, %v4815
        %v4828 = vmul.f32 %v4785, %v4815
        %v4829 = vmul.f32 %v4786, %v4815
        %v4830 = vmul.f32 %v4787, %v4815
        %v4831 = vmul.f32 %v4788, %v4815
        %v4832 = vmul.f32 %v4789, %v4815
        %v4833 = vmul.f32 %v4790, %v4815
        %v4834 = vmul.f32 %v4791, %v4815
        %v4835 = vmul.f32 %v4792, %v4815
        %v4836 = vmul.f32 %v4793, %v4815
        %v4837 = vmul.f32 %v4794, %v4815
        %v4838 = vmul.f32 %v4795, %v4815
        %v4839 = vmul.f32 %v4796, %v4815
        %v4840 = vmul.f32 %v4797, %v4815
        %v4841 = vmul.f32 %v4798, %v4815
        %v4842 = vmul.f32 %v4799, %v4815
        %v4843 = vmul.f32 %v4800, %v4815
        %v4844 = vmul.f32 %v4801, %v4815
        %v4845 = vmul.f32 %v4802, %v4815
        %v4846 = vmul.f32 %v4803, %v4815
        %v4847 = vmul.f32 %v4804, %v4815
        %v4848 = vmul.f32 %v4805, %v4815
        %v4849 = vmul.f32 %v4806, %v4815
        %v4850 = vmul.f32 %v4807, %v4815
        %v4851 = vmul.f32 %v4808, %v4815
        %v4852 = vmul.f32 %v4809, %v4815
        %4853 = vst [vmem:[%s212] sm:$0xff] %v4817
        %4854 = vst [vmem:[%s212 + $0x8] sm:$0xff] %v4818
        %4855 = vst [vmem:[%s212 + $0x10] sm:$0xff] %v4819
        %4856 = vst [vmem:[%s212 + $0x18] sm:$0xff] %v4820
        %4857 = vst [vmem:[%s212 + $0x20] sm:$0xff] %v4821
        %4858 = vst [vmem:[%s212 + $0x28] sm:$0xff] %v4822
        %4859 = vst [vmem:[%s212 + $0x30] sm:$0xff] %v4823
        %4860 = vst [vmem:[%s212 + $0x38] sm:$0xff] %v4824
        %4861 = vst [vmem:[%s212 + $0x40] sm:$0xff] %v4825
        %4862 = vst [vmem:[%s212 + $0x48] sm:$0xff] %v4826
        %4863 = vst [vmem:[%s212 + $0x50] sm:$0xff] %v4827
        %4864 = vst [vmem:[%s212 + $0x58] sm:$0xff] %v4828
        %4865 = vst [vmem:[%s212 + $0x60] sm:$0xff] %v4829
        %4866 = vst [vmem:[%s212 + $0x68] sm:$0xff] %v4830
        %4867 = vst [vmem:[%s212 + $0x70] sm:$0xff] %v4831
        %4868 = vst [vmem:[%s212 + $0x78] sm:$0xff] %v4832
        %4869 = vst [vmem:[%s212 + $0x80] sm:$0xff] %v4833
        %4870 = vst [vmem:[%s212 + $0x88] sm:$0xff] %v4834
        %4871 = vst [vmem:[%s212 + $0x90] sm:$0xff] %v4835
        %4872 = vst [vmem:[%s212 + $0x98] sm:$0xff] %v4836
        %4873 = vst [vmem:[%s212 + $0xa0] sm:$0xff] %v4837
        %4874 = vst [vmem:[%s212 + $0xa8] sm:$0xff] %v4838
        %4875 = vst [vmem:[%s212 + $0xb0] sm:$0xff] %v4839
        %4876 = vst [vmem:[%s212 + $0xb8] sm:$0xff] %v4840
        %4877 = vst [vmem:[%s212 + $0xc0] sm:$0xff] %v4841
        %4878 = vst [vmem:[%s212 + $0xc8] sm:$0xff] %v4842
        %4879 = vst [vmem:[%s212 + $0xd0] sm:$0xff] %v4843
        %4880 = vst [vmem:[%s212 + $0xd8] sm:$0xff] %v4844
        %4881 = vst [vmem:[%s212 + $0xe0] sm:$0xff] %v4845
        %4882 = vst [vmem:[%s212 + $0xe8] sm:$0xff] %v4846
        %4883 = vst [vmem:[%s212 + $0xf0] sm:$0xff] %v4847
        %4884 = vst [vmem:[%s212 + $0xf8] sm:$0xff] %v4848
        %4885 = vst [vmem:[%s212 + $0x100] sm:$0xff] %v4849
        %4886 = vst [vmem:[%s212 + $0x108] sm:$0xff] %v4850
        %4887 = vst [vmem:[%s212 + $0x110] sm:$0xff] %v4851
        %4888 = vst [vmem:[%s212 + $0x118] sm:$0xff] %v4852
        %s4889 = sand.u32 %s125, 1
        %s4890 = scalar_lea.sflag [#allocation5], %s4889
        %s4891 = sand.u32 %s125, 1
        %s4892 = smul.addr %s4891, 288
        %s4893 = scalar_lea.vmem [#allocation4], %s4892
        // Predicated region
        $region37: #{tpu_custom_call.1} parent=35 // pred_check
          %p4894 = pneg %p135
        $region38: #{tpu_custom_call.1} parent=35 // pred_check_branch
          %4896 = sbr.rel (%p4894) target = $region40
        $region39: #{tpu_custom_call.1} parent=35 // pred_region
          %s4898 = ssub.s32 4608, 4608
          %4899 = vsyncadd %s4890, %s4898
          %s4900 = smul.addr %s18, 36
          %s4901 = smul.addr %s4900, 128
          %s4902 = scalar_lea.hbm %s4, %s4901
          %s4903 = sshll.u32 %s4893, 4
          %s4904 = int_to_ptr.vmem [resolvable:$true] %s4903
          %4909 = dma.vmem_to_hbm [thread:$0]  %s4904, 4608, %s4902, %s4890, 128, 128, 8
        $region40: #{tpu_custom_call.1} parent=35 // pred_fallthru
          _
      $region36: #{tpu_custom_call.1} parent=5 // pred_fallthru
        _
      %p4910 = scmp.le.s32.totalorder 2, %s13
      // Predicated region
      $region41: #{tpu_custom_call.1} parent=5 // pred_check
        %p4911 = pneg %p4910
      $region42: #{tpu_custom_call.1} parent=5 // pred_check_branch
        %4913 = sbr.rel (%p4911) target = $region44
      $region43: #{tpu_custom_call.1} parent=5 // pred_region
        %s4914 = ssub.s32 %s13, 2
        // Predicated region
        $region45: #{tpu_custom_call.1} parent=43 // pred_check
          %p4915 = pneg %p141
        $region46: #{tpu_custom_call.1} parent=43 // pred_check_branch
          %4917 = sbr.rel (%p4915) target = $region48
        $region47: #{tpu_custom_call.1} parent=43 // pred_region
          %s4918 = sand.u32 %s126, 1
          %s4919 = scalar_lea.sflag [#allocation5], %s4918
          %s4920 = sand.u32 %s126, 1
          %s4921 = smul.addr %s4920, 288
          %s4922 = scalar_lea.vmem [#allocation4], %s4921
          %4923 = dma.done %s4919, 4608
        $region48: #{tpu_custom_call.1} parent=43 // pred_fallthru
          _
      $region44: #{tpu_custom_call.1} parent=5 // pred_fallthru
        _
    $region6: #{tpu_custom_call.1} parent=1 // loop_footer
      %s17 = sadd.s32 1, %s13
    $region7: #{tpu_custom_call.1} parent=1 // loop_footer_branch
      %12 = sbr.rel target = $region3
    $region8: #{tpu_custom_call.1} parent=1 // loop_exit
      _
    %4924 = vsyncpa [#allocation5], 1
    %s4925 = scalar_lea.sflag [#allocation5], 1
    %4926 = vsyncpa %s4925, 1

</llo_original>
